<compile_context>
chip_gen: v6e
topology: v6e:2x2x1
jax: 0.10.0
libtpu: 0.0.40
codegen_flags: <defaults>
</compile_context>

<pallas_src>
import functools
import math

import jax
import jax.numpy as jnp
from jax import lax
from jax.experimental import pallas as pl
from jax.experimental.pallas import tpu as pltpu


# Safe on every generation (<= scoped default headroom even on v7x's 64 MiB).
_VMEM_LIMIT = 32 * 1024 * 1024

# MXU operand dtype; accumulation is always f32.  Set to jnp.float32 if
# bit-level parity with the fp32 PyTorch module is required.
_MXU_DTYPE = jnp.bfloat16


def _largest_divisor_tile(m, target):
    """Largest tile size <= target that evenly divides m."""
    t = max(1, min(m, target))
    while m % t:
        t -= 1
    return t


# ----------------------------- Pallas kernels ------------------------------

def _attn_ln_kernel(*refs, num_heads, self_attn, has_q_pe, has_k_pe,
                    add_residual, eps, mxu_dtype):
    """Fused: (PE add) + QKV proj + MHA + out proj + (residual) + LayerNorm.

    One (batch, q-row-tile) grid step.  Heads are processed by static lane
    slices of the projected activations; instead of concatenating head
    outputs, each head's output is pushed through its slab of the output
    projection and accumulated (no lane concat / relayout).
    """
    f32 = jnp.float32
    o_ref = refs[-1]
    it = iter(refs[:-1])

    qb_ref = next(it)
    qpe_ref = next(it) if has_q_pe else None
    if self_attn:
        kvb_ref, kpe_ref = None, None
    else:
        kvb_ref = next(it)
        kpe_ref = next(it) if has_k_pe else None
    (wq_ref, bq_ref, wk_ref, bk_ref, wv_ref, bv_ref,
     wo_ref, bo_ref, g_ref, b_ref) = it

    q_base = qb_ref[...].astype(f32)                       # (tq, D)
    if has_q_pe:
        q_in = q_base + qpe_ref[...].astype(f32)
    else:
        q_in = q_base

    if self_attn:
        k_in = q_in                                        # q == k (+PE), v = base
        v_in = q_base
    else:
        kv = kvb_ref[...].astype(f32)                      # (Nk, D), single DMA
        if has_k_pe:
            k_in = kv + kpe_ref[...].astype(f32)
        else:
            k_in = kv
        v_in = kv

    # Projections (bf16 in, f32 acc).  1/sqrt(dh) is already folded into wq/bq.
    qp = jnp.dot(q_in.astype(mxu_dtype), wq_ref[...],
                 preferred_element_type=f32) + bq_ref[...]
    kp = jnp.dot(k_in.astype(mxu_dtype), wk_ref[...],
                 preferred_element_type=f32) + bk_ref[...]
    vp = jnp.dot(v_in.astype(mxu_dtype), wv_ref[...],
                 preferred_element_type=f32) + bv_ref[...]

    internal = wq_ref.shape[1]
    dh = internal // num_heads
    d_out = wo_ref.shape[1]
    wo_all = wo_ref[...]                                   # (internal, D) bf16

    out = jnp.zeros((q_in.shape[0], d_out), f32)
    for h in range(num_heads):                             # static, unrolled
        sl = slice(h * dh, (h + 1) * dh)
        qh = qp[:, sl].astype(mxu_dtype)
        kh = kp[:, sl].astype(mxu_dtype)
        vh = vp[:, sl].astype(mxu_dtype)
        # q @ k^T: contract last dims natively (no materialized transpose).
        s = lax.dot_general(qh, kh, (((1,), (1,)), ((), ())),
                            preferred_element_type=f32)    # (tq, Nk)
        s = s - jnp.max(s, axis=-1, keepdims=True)
        p_ = jnp.exp(s)
        inv_l = pl.reciprocal(jnp.sum(p_, axis=-1, keepdims=True), approx=True)
        # Normalize the small (tq, dh) head output instead of the (tq, Nk) probs.
        ho = jnp.dot(p_.astype(mxu_dtype), vh, preferred_element_type=f32) * inv_l
        # Accumulate through this head's slab of the output projection.
        out = out + jnp.dot(ho.astype(mxu_dtype), wo_all[sl, :],
                            preferred_element_type=f32)

    attn_out = out + bo_ref[...]                           # (tq, D)
    if add_residual:
        x = q_base + attn_out
    else:
        x = attn_out

    # LayerNorm epilogue (PyTorch semantics: biased variance, eps inside rsqrt).
    mu = jnp.mean(x, axis=-1, keepdims=True)
    xc = x - mu
    var = jnp.mean(xc * xc, axis=-1, keepdims=True)
    y = xc * lax.rsqrt(var + eps)
    o_ref[...] = (y * g_ref[...] + b_ref[...]).astype(o_ref.dtype)


def _mlp_ln_kernel(x_ref, w1_ref, b1_ref, w2_ref, b2_ref, g_ref, b_ref, o_ref,
                   *, eps, mxu_dtype):
    """Fused: Linear -> ReLU -> Linear -> residual add -> LayerNorm."""
    f32 = jnp.float32
    x = x_ref[...].astype(f32)
    h = jnp.dot(x.astype(mxu_dtype), w1_ref[...],
                preferred_element_type=f32) + b1_ref[...]
    h = jnp.maximum(h, 0.0)
    y = jnp.dot(h.astype(mxu_dtype), w2_ref[...],
                preferred_element_type=f32) + b2_ref[...]
    z = x + y                                              # residual
    mu = jnp.mean(z, axis=-1, keepdims=True)
    zc = z - mu
    var = jnp.mean(zc * zc, axis=-1, keepdims=True)
    o_ref[...] = ((zc * lax.rsqrt(var + eps)) * g_ref[...]
                  + b_ref[...]).astype(o_ref.dtype)


# ------------------------------- wrappers -----------------------------------

def attention_ln_fused(q_base, kv_base, q_pe, k_pe, p, ln_g, ln_b, num_heads,
                       *, self_attn=False, add_residual=True, eps=1e-5,
                       q_tile_target=256):
    """SAM Attention(q_base+q_pe, kv_base+k_pe, kv_base) + residual + LN.

    self_attn=True: kv_base/k_pe are ignored; q_base is used for q, k and v
    (single DMA).  q_pe / k_pe may be None (no PE add, nothing DMA'd).
    """
    B, Nq, D = q_base.shape
    internal = p["wq"].shape[1]
    dh = internal // num_heads
    scale = 1.0 / math.sqrt(dh)
    has_q_pe = q_pe is not None
    has_k_pe = (k_pe is not None) and (not self_attn)

    if self_attn:
        Nk = Nq
        tq = Nq                       # k/v share the q ref -> need all rows
    else:
        Nk = kv_base.shape[1]
        tq = _largest_divisor_tile(Nq, q_tile_target)

    # Fold 1/sqrt(dh) into the q projection; cast weights to bf16 once here
    # (halves their DMA bytes).  Biases stay f32.
    wq = (p["wq"] * scale).astype(_MXU_DTYPE)
    wk = p["wk"].astype(_MXU_DTYPE)
    wv = p["wv"].astype(_MXU_DTYPE)
    wo = p["wo"].astype(_MXU_DTYPE)
    bq = (p["bq"] * scale).reshape(1, internal)
    bk = p["bk"].reshape(1, internal)
    bv = p["bv"].reshape(1, internal)
    bo = p["bo"].reshape(1, D)

    tok_q = lambda b, i: (b, i, 0)
    tok_k = lambda b, i: (b, 0, 0)    # constant over row tiles -> stays resident
    const2 = lambda b, i: (0, 0)

    inputs = [q_base]
    in_specs = [pl.BlockSpec((None, tq, D), tok_q)]
    if has_q_pe:
        inputs.append(q_pe)
        in_specs.append(pl.BlockSpec((None, tq, D), tok_q))
    if not self_attn:
        inputs.append(kv_base)
        in_specs.append(pl.BlockSpec((None, Nk, D), tok_k))
        if has_k_pe:
            inputs.append(k_pe)
            in_specs.append(pl.BlockSpec((None, Nk, D), tok_k))
    inputs += [wq, bq, wk, bk, wv, bv, wo, bo,
               ln_g.reshape(1, D), ln_b.reshape(1, D)]
    in_specs += [
        pl.BlockSpec((D, internal), const2), pl.BlockSpec((1, internal), const2),
        pl.BlockSpec((D, internal), const2), pl.BlockSpec((1, internal), const2),
        pl.BlockSpec((D, internal), const2), pl.BlockSpec((1, internal), const2),
        pl.BlockSpec((internal, D), const2), pl.BlockSpec((1, D), const2),
        pl.BlockSpec((1, D), const2), pl.BlockSpec((1, D), const2),
    ]

    kernel = functools.partial(
        _attn_ln_kernel, num_heads=num_heads, self_attn=self_attn,
        has_q_pe=has_q_pe, has_k_pe=has_k_pe, add_residual=add_residual,
        eps=eps, mxu_dtype=_MXU_DTYPE)

    return pl.pallas_call(
        kernel,
        out_shape=jax.ShapeDtypeStruct((B, Nq, D), q_base.dtype),
        grid=(B, Nq // tq),
        in_specs=in_specs,
        out_specs=pl.BlockSpec((None, tq, D), tok_q),
        compiler_params=pltpu.CompilerParams(
            dimension_semantics=("parallel", "parallel"),
            vmem_limit_bytes=_VMEM_LIMIT),
    )(*inputs)


def mlp_ln_block(x, p, ln_g, ln_b, eps=1e-5, row_tile_target=512):
    """LayerNorm(x + MLP(x)) fused, row-tiled with a parallel grid."""
    B, N, D = x.shape
    Hm = p["w1"].shape[1]
    M = B * N
    tile = _largest_divisor_tile(M, row_tile_target)
    w1 = p["w1"].astype(_MXU_DTYPE)
    w2 = p["w2"].astype(_MXU_DTYPE)
    out = pl.pallas_call(
        functools.partial(_mlp_ln_kernel, eps=eps, mxu_dtype=_MXU_DTYPE),
        out_shape=jax.ShapeDtypeStruct((M, D), x.dtype),
        grid=(M // tile,),
        in_specs=[
            pl.BlockSpec((tile, D), lambda i: (i, 0)),
            pl.BlockSpec((D, Hm), lambda i: (0, 0)),
            pl.BlockSpec((1, Hm), lambda i: (0, 0)),
            pl.BlockSpec((Hm, D), lambda i: (0, 0)),
            pl.BlockSpec((1, D), lambda i: (0, 0)),
            pl.BlockSpec((1, D), lambda i: (0, 0)),
            pl.BlockSpec((1, D), lambda i: (0, 0)),
        ],
        out_specs=pl.BlockSpec((tile, D), lambda i: (i, 0)),
        compiler_params=pltpu.CompilerParams(
            dimension_semantics=("parallel",),
            vmem_limit_bytes=_VMEM_LIMIT),
    )(x.reshape(M, D), w1, p["b1"].reshape(1, Hm), w2, p["b2"].reshape(1, D),
      ln_g.reshape(1, D), ln_b.reshape(1, D))
    return out.reshape(B, N, D)


# --------------------------- parameter construction --------------------------

def _make_linear_params(key, din, dout, scale=0.05):
    (kw,) = jax.random.split(key, 1)
    w = scale * jax.random.normal(kw, (din, dout), dtype=jnp.float32)
    b = jnp.zeros((dout,), dtype=jnp.float32)
    return w, b


def _make_attention_params(key, embedding_dim, downsample_rate=1):
    internal = embedding_dim // downsample_rate
    keys = jax.random.split(key, 4)
    wq, bq = _make_linear_params(keys[0], embedding_dim, internal)
    wk, bk = _make_linear_params(keys[1], embedding_dim, internal)
    wv, bv = _make_linear_params(keys[2], embedding_dim, internal)
    wo, bo = _make_linear_params(keys[3], internal, embedding_dim)
    return dict(wq=wq, bq=bq, wk=wk, bk=bk, wv=wv, bv=bv, wo=wo, bo=bo)


def make_two_way_block_params(key, embedding_dim, mlp_dim, attention_downsample_rate=2):
    keys = jax.random.split(key, 4)
    w1, b1 = _make_linear_params(keys[2], embedding_dim, mlp_dim)
    w2, b2 = _make_linear_params(keys[3], mlp_dim, embedding_dim)
    ones = jnp.ones((embedding_dim,), dtype=jnp.float32)
    zeros = jnp.zeros((embedding_dim,), dtype=jnp.float32)
    return dict(
        self_attn=_make_attention_params(keys[0], embedding_dim, 1),
        cross_t2i=_make_attention_params(keys[1], embedding_dim, attention_downsample_rate),
        cross_i2t=_make_attention_params(jax.random.fold_in(keys[1], 7),
                                         embedding_dim, attention_downsample_rate),
        mlp=dict(w1=w1, b1=b1, w2=w2, b2=b2),
        norm1_g=ones, norm1_b=zeros,
        norm2_g=ones, norm2_b=zeros,
        norm3_g=ones, norm3_b=zeros,
        norm4_g=ones, norm4_b=zeros,
    )


# ------------------------------ forward pass ---------------------------------

def two_way_attention_block(queries, keys, query_pe, key_pe, params,
                            num_heads, skip_first_layer_pe=False):
    # (1) self-attention on sparse tokens + norm1 (fused).
    if skip_first_layer_pe:
        # queries = LN(self_attn(queries, queries, queries)); no PE, no residual.
        queries = attention_ln_fused(
            queries, None, None, None, params["self_attn"],
            params["norm1_g"], params["norm1_b"], num_heads,
            self_attn=True, add_residual=False)
    else:
        # q = k = queries + query_pe, v = queries; queries = LN(queries + attn).
        queries = attention_ln_fused(
            queries, None, query_pe, None, params["self_attn"],
            params["norm1_g"], params["norm1_b"], num_heads,
            self_attn=True, add_residual=True)

    # (2) cross attention tokens -> image + norm2 (fused). k/v share `keys`.
    queries = attention_ln_fused(
        queries, keys, query_pe, key_pe, params["cross_t2i"],
        params["norm2_g"], params["norm2_b"], num_heads,
        self_attn=False, add_residual=True)

    # (3) MLP on sparse tokens + norm3 (fused).
    queries = mlp_ln_block(queries, params["mlp"],
                           params["norm3_g"], params["norm3_b"])

    # (4) cross attention image -> tokens + norm4 (fused). k/v share `queries`;
    #     residual is `keys`, already resident as the q block of this call.
    keys = attention_ln_fused(
        keys, queries, key_pe, query_pe, params["cross_i2t"],
        params["norm4_g"], params["norm4_b"], num_heads,
        self_attn=False, add_residual=True)

    return queries, keys


# ---------------------------------- main -------------------------------------

if __name__ == "__main__":
    B = 2           # batch
    NQ = 8          # sparse (prompt) tokens
    NK = 16         # dense tokens (e.g. 4x4 image embedding, flattened)
    D = 32          # embedding_dim
    HEADS = 4       # num_heads
    MLP_DIM = 64    # mlp hidden dim
    DS_RATE = 2     # attention_downsample_rate

    root = jax.random.PRNGKey(0)
    kq, kk, kqpe, kkpe, kparams = jax.random.split(root, 5)

    queries = jax.random.normal(kq, (B, NQ, D), dtype=jnp.float32)
    keys = jax.random.normal(kk, (B, NK, D), dtype=jnp.float32)
    query_pe = jax.random.normal(kqpe, (B, NQ, D), dtype=jnp.float32)
    key_pe = jax.random.normal(kkpe, (B, NK, D), dtype=jnp.float32)

    params = make_two_way_block_params(kparams, D, MLP_DIM, DS_RATE)

    fwd = jax.jit(functools.partial(two_way_attention_block,
                                    num_heads=HEADS, skip_first_layer_pe=False))
    out_q, out_k = fwd(queries, keys, query_pe, key_pe, params)

    jax.block_until_ready(out_q)
    jax.block_until_ready(out_k)

    assert out_q.shape == (B, NQ, D)
    assert out_k.shape == (B, NK, D)
    assert bool(jnp.all(jnp.isfinite(out_q))) and bool(jnp.all(jnp.isfinite(out_k)))

    print("KERNEL_OK")
</pallas_src>

<mosaic_0001>
module attributes {stable_mosaic.version = 11 : i64} {
  func.func @_attn_ln_kernel(%arg0: i32, %arg1: i32, %arg2: memref<1x8x32xf32, #tpu.memory_space<vmem>>, %arg3: memref<1x8x32xf32, #tpu.memory_space<vmem>>, %arg4: memref<32x32xbf16, #tpu.memory_space<vmem>>, %arg5: memref<1x32xf32, #tpu.memory_space<vmem>>, %arg6: memref<32x32xbf16, #tpu.memory_space<vmem>>, %arg7: memref<1x32xf32, #tpu.memory_space<vmem>>, %arg8: memref<32x32xbf16, #tpu.memory_space<vmem>>, %arg9: memref<1x32xf32, #tpu.memory_space<vmem>>, %arg10: memref<32x32xbf16, #tpu.memory_space<vmem>>, %arg11: memref<1x32xf32, #tpu.memory_space<vmem>>, %arg12: memref<1x32xf32, #tpu.memory_space<vmem>>, %arg13: memref<1x32xf32, #tpu.memory_space<vmem>>, %arg14: memref<1x8x32xf32, #tpu.memory_space<vmem>>) attributes {dimension_semantics = [#tpu.dimension_semantics<parallel>, #tpu.dimension_semantics<parallel>], iteration_bounds = array<i64: 2, 1>, scalar_prefetch = 0 : i64, scratch_operands = 0 : i64, tpu.core_type = #tpu.core_type<tc>, window_params = [{transform_indices = @transform_0, window_bounds = array<i64: 1, 8, 32>}, {transform_indices = @transform_1, window_bounds = array<i64: 1, 8, 32>}, {pipeline_mode = #tpu.pipeline_mode<synchronous>, transform_indices = @transform_2, window_bounds = array<i64: 32, 32>}, {pipeline_mode = #tpu.pipeline_mode<synchronous>, transform_indices = @transform_3, window_bounds = array<i64: 1, 32>}, {pipeline_mode = #tpu.pipeline_mode<synchronous>, transform_indices = @transform_4, window_bounds = array<i64: 32, 32>}, {pipeline_mode = #tpu.pipeline_mode<synchronous>, transform_indices = @transform_5, window_bounds = array<i64: 1, 32>}, {pipeline_mode = #tpu.pipeline_mode<synchronous>, transform_indices = @transform_6, window_bounds = array<i64: 32, 32>}, {pipeline_mode = #tpu.pipeline_mode<synchronous>, transform_indices = @transform_7, window_bounds = array<i64: 1, 32>}, {pipeline_mode = #tpu.pipeline_mode<synchronous>, transform_indices = @transform_8, window_bounds = array<i64: 32, 32>}, {pipeline_mode = #tpu.pipeline_mode<synchronous>, transform_indices = @transform_9, window_bounds = array<i64: 1, 32>}, {pipeline_mode = #tpu.pipeline_mode<synchronous>, transform_indices = @transform_10, window_bounds = array<i64: 1, 32>}, {pipeline_mode = #tpu.pipeline_mode<synchronous>, transform_indices = @transform_11, window_bounds = array<i64: 1, 32>}, {transform_indices = @transform_12, window_bounds = array<i64: 1, 8, 32>}]} {
    %c0 = arith.constant 0 : index
    %c0_0 = arith.constant 0 : index
    %c0_1 = arith.constant 0 : index
    %0 = vector.load %arg2[%c0, %c0_0, %c0_1] : memref<1x8x32xf32, #tpu.memory_space<vmem>>, vector<1x8x32xf32>
    %1 = vector.shape_cast %0 : vector<1x8x32xf32> to vector<8x32xf32>
    %c0_2 = arith.constant 0 : index
    %c0_3 = arith.constant 0 : index
    %c0_4 = arith.constant 0 : index
    %2 = vector.load %arg3[%c0_2, %c0_3, %c0_4] : memref<1x8x32xf32, #tpu.memory_space<vmem>>, vector<1x8x32xf32>
    %3 = vector.shape_cast %2 : vector<1x8x32xf32> to vector<8x32xf32>
    %4 = arith.addf %1, %3 : vector<8x32xf32>
    %5 = arith.truncf %4 : vector<8x32xf32> to vector<8x32xbf16>
    %c0_5 = arith.constant 0 : index
    %c0_6 = arith.constant 0 : index
    %6 = vector.load %arg4[%c0_5, %c0_6] : memref<32x32xbf16, #tpu.memory_space<vmem>>, vector<32x32xbf16>
    %cst = arith.constant dense<0.000000e+00> : vector<8x32xf32>
    %7 = tpu.matmul %5, %6, %cst {dimension_numbers = #tpu.dot_dimension_numbers<[1], [0], [0], [1], [0, 0, 1, 1], [], []>} : vector<8x32xbf16>, vector<32x32xbf16>, vector<8x32xf32> -> vector<8x32xf32>
    %c0_7 = arith.constant 0 : index
    %c0_8 = arith.constant 0 : index
    %8 = vector.load %arg5[%c0_7, %c0_8] : memref<1x32xf32, #tpu.memory_space<vmem>>, vector<1x32xf32>
    %9 = vector.broadcast %8 : vector<1x32xf32> to vector<8x32xf32>
    %10 = arith.addf %7, %9 : vector<8x32xf32>
    %11 = arith.truncf %4 : vector<8x32xf32> to vector<8x32xbf16>
    %c0_9 = arith.constant 0 : index
    %c0_10 = arith.constant 0 : index
    %12 = vector.load %arg6[%c0_9, %c0_10] : memref<32x32xbf16, #tpu.memory_space<vmem>>, vector<32x32xbf16>
    %cst_11 = arith.constant dense<0.000000e+00> : vector<8x32xf32>
    %13 = tpu.matmul %11, %12, %cst_11 {dimension_numbers = #tpu.dot_dimension_numbers<[1], [0], [0], [1], [0, 0, 1, 1], [], []>} : vector<8x32xbf16>, vector<32x32xbf16>, vector<8x32xf32> -> vector<8x32xf32>
    %c0_12 = arith.constant 0 : index
    %c0_13 = arith.constant 0 : index
    %14 = vector.load %arg7[%c0_12, %c0_13] : memref<1x32xf32, #tpu.memory_space<vmem>>, vector<1x32xf32>
    %15 = vector.broadcast %14 : vector<1x32xf32> to vector<8x32xf32>
    %16 = arith.addf %13, %15 : vector<8x32xf32>
    %17 = arith.truncf %1 : vector<8x32xf32> to vector<8x32xbf16>
    %c0_14 = arith.constant 0 : index
    %c0_15 = arith.constant 0 : index
    %18 = vector.load %arg8[%c0_14, %c0_15] : memref<32x32xbf16, #tpu.memory_space<vmem>>, vector<32x32xbf16>
    %cst_16 = arith.constant dense<0.000000e+00> : vector<8x32xf32>
    %19 = tpu.matmul %17, %18, %cst_16 {dimension_numbers = #tpu.dot_dimension_numbers<[1], [0], [0], [1], [0, 0, 1, 1], [], []>} : vector<8x32xbf16>, vector<32x32xbf16>, vector<8x32xf32> -> vector<8x32xf32>
    %c0_17 = arith.constant 0 : index
    %c0_18 = arith.constant 0 : index
    %20 = vector.load %arg9[%c0_17, %c0_18] : memref<1x32xf32, #tpu.memory_space<vmem>>, vector<1x32xf32>
    %21 = vector.broadcast %20 : vector<1x32xf32> to vector<8x32xf32>
    %22 = arith.addf %19, %21 : vector<8x32xf32>
    %c0_19 = arith.constant 0 : index
    %c0_20 = arith.constant 0 : index
    %23 = vector.load %arg10[%c0_19, %c0_20] : memref<32x32xbf16, #tpu.memory_space<vmem>>, vector<32x32xbf16>
    %cst_21 = arith.constant 0.000000e+00 : f32
    %24 = vector.broadcast %cst_21 : f32 to vector<8x32xf32>
    %25 = vector.extract_strided_slice %10 {offsets = [0, 0], sizes = [8, 8], strides = [1, 1]} : vector<8x32xf32> to vector<8x8xf32>
    %26 = arith.truncf %25 : vector<8x8xf32> to vector<8x8xbf16>
    %27 = vector.extract_strided_slice %16 {offsets = [0, 0], sizes = [8, 8], strides = [1, 1]} : vector<8x32xf32> to vector<8x8xf32>
    %28 = arith.truncf %27 : vector<8x8xf32> to vector<8x8xbf16>
    %29 = vector.extract_strided_slice %22 {offsets = [0, 0], sizes = [8, 8], strides = [1, 1]} : vector<8x32xf32> to vector<8x8xf32>
    %30 = arith.truncf %29 : vector<8x8xf32> to vector<8x8xbf16>
    %cst_22 = arith.constant dense<0.000000e+00> : vector<8x8xf32>
    %31 = tpu.matmul %26, %28, %cst_22 {dimension_numbers = #tpu.dot_dimension_numbers<[1], [1], [0], [0], [0, 0, 1, 0], [], []>} : vector<8x8xbf16>, vector<8x8xbf16>, vector<8x8xf32> -> vector<8x8xf32>
    %cst_23 = arith.constant dense<0xFF800000> : vector<8xf32>
    %32 = vector.multi_reduction <maximumf>, %31, %cst_23 [1] : vector<8x8xf32> to vector<8xf32>
    %33 = vector.shape_cast %32 : vector<8xf32> to vector<8x1xf32>
    %34 = vector.broadcast %33 : vector<8x1xf32> to vector<8x8xf32>
    %35 = arith.subf %31, %34 : vector<8x8xf32>
    %36 = math.exp %35 : vector<8x8xf32>
    %cst_24 = arith.constant dense<0.000000e+00> : vector<8xf32>
    %37 = vector.multi_reduction <add>, %36, %cst_24 [1] : vector<8x8xf32> to vector<8xf32>
    %38 = vector.shape_cast %37 : vector<8xf32> to vector<8x1xf32>
    %39 = tpu.reciprocal %38 {approx = true} : vector<8x1xf32> -> vector<8x1xf32>
    %40 = arith.truncf %36 : vector<8x8xf32> to vector<8x8xbf16>
    %cst_25 = arith.constant dense<0.000000e+00> : vector<8x8xf32>
    %41 = tpu.matmul %40, %30, %cst_25 {dimension_numbers = #tpu.dot_dimension_numbers<[1], [0], [0], [1], [0, 0, 1, 1], [], []>} : vector<8x8xbf16>, vector<8x8xbf16>, vector<8x8xf32> -> vector<8x8xf32>
    %42 = vector.broadcast %39 : vector<8x1xf32> to vector<8x8xf32>
    %43 = arith.mulf %41, %42 : vector<8x8xf32>
    %44 = arith.truncf %43 : vector<8x8xf32> to vector<8x8xbf16>
    %45 = vector.extract_strided_slice %23 {offsets = [0, 0], sizes = [8, 32], strides = [1, 1]} : vector<32x32xbf16> to vector<8x32xbf16>
    %cst_26 = arith.constant dense<0.000000e+00> : vector<8x32xf32>
    %46 = tpu.matmul %44, %45, %cst_26 {dimension_numbers = #tpu.dot_dimension_numbers<[1], [0], [0], [1], [0, 0, 1, 1], [], []>} : vector<8x8xbf16>, vector<8x32xbf16>, vector<8x32xf32> -> vector<8x32xf32>
    %47 = arith.addf %24, %46 : vector<8x32xf32>
    %48 = vector.extract_strided_slice %10 {offsets = [0, 8], sizes = [8, 8], strides = [1, 1]} : vector<8x32xf32> to vector<8x8xf32>
    %49 = arith.truncf %48 : vector<8x8xf32> to vector<8x8xbf16>
    %50 = vector.extract_strided_slice %16 {offsets = [0, 8], sizes = [8, 8], strides = [1, 1]} : vector<8x32xf32> to vector<8x8xf32>
    %51 = arith.truncf %50 : vector<8x8xf32> to vector<8x8xbf16>
    %52 = vector.extract_strided_slice %22 {offsets = [0, 8], sizes = [8, 8], strides = [1, 1]} : vector<8x32xf32> to vector<8x8xf32>
    %53 = arith.truncf %52 : vector<8x8xf32> to vector<8x8xbf16>
    %cst_27 = arith.constant dense<0.000000e+00> : vector<8x8xf32>
    %54 = tpu.matmul %49, %51, %cst_27 {dimension_numbers = #tpu.dot_dimension_numbers<[1], [1], [0], [0], [0, 0, 1, 0], [], []>} : vector<8x8xbf16>, vector<8x8xbf16>, vector<8x8xf32> -> vector<8x8xf32>
    %cst_28 = arith.constant dense<0xFF800000> : vector<8xf32>
    %55 = vector.multi_reduction <maximumf>, %54, %cst_28 [1] : vector<8x8xf32> to vector<8xf32>
    %56 = vector.shape_cast %55 : vector<8xf32> to vector<8x1xf32>
    %57 = vector.broadcast %56 : vector<8x1xf32> to vector<8x8xf32>
    %58 = arith.subf %54, %57 : vector<8x8xf32>
    %59 = math.exp %58 : vector<8x8xf32>
    %cst_29 = arith.constant dense<0.000000e+00> : vector<8xf32>
    %60 = vector.multi_reduction <add>, %59, %cst_29 [1] : vector<8x8xf32> to vector<8xf32>
    %61 = vector.shape_cast %60 : vector<8xf32> to vector<8x1xf32>
    %62 = tpu.reciprocal %61 {approx = true} : vector<8x1xf32> -> vector<8x1xf32>
    %63 = arith.truncf %59 : vector<8x8xf32> to vector<8x8xbf16>
    %cst_30 = arith.constant dense<0.000000e+00> : vector<8x8xf32>
    %64 = tpu.matmul %63, %53, %cst_30 {dimension_numbers = #tpu.dot_dimension_numbers<[1], [0], [0], [1], [0, 0, 1, 1], [], []>} : vector<8x8xbf16>, vector<8x8xbf16>, vector<8x8xf32> -> vector<8x8xf32>
    %65 = vector.broadcast %62 : vector<8x1xf32> to vector<8x8xf32>
    %66 = arith.mulf %64, %65 : vector<8x8xf32>
    %67 = arith.truncf %66 : vector<8x8xf32> to vector<8x8xbf16>
    %68 = vector.extract_strided_slice %23 {offsets = [8, 0], sizes = [8, 32], strides = [1, 1]} : vector<32x32xbf16> to vector<8x32xbf16>
    %cst_31 = arith.constant dense<0.000000e+00> : vector<8x32xf32>
    %69 = tpu.matmul %67, %68, %cst_31 {dimension_numbers = #tpu.dot_dimension_numbers<[1], [0], [0], [1], [0, 0, 1, 1], [], []>} : vector<8x8xbf16>, vector<8x32xbf16>, vector<8x32xf32> -> vector<8x32xf32>
    %70 = arith.addf %47, %69 : vector<8x32xf32>
    %71 = vector.extract_strided_slice %10 {offsets = [0, 16], sizes = [8, 8], strides = [1, 1]} : vector<8x32xf32> to vector<8x8xf32>
    %72 = arith.truncf %71 : vector<8x8xf32> to vector<8x8xbf16>
    %73 = vector.extract_strided_slice %16 {offsets = [0, 16], sizes = [8, 8], strides = [1, 1]} : vector<8x32xf32> to vector<8x8xf32>
    %74 = arith.truncf %73 : vector<8x8xf32> to vector<8x8xbf16>
    %75 = vector.extract_strided_slice %22 {offsets = [0, 16], sizes = [8, 8], strides = [1, 1]} : vector<8x32xf32> to vector<8x8xf32>
    %76 = arith.truncf %75 : vector<8x8xf32> to vector<8x8xbf16>
    %cst_32 = arith.constant dense<0.000000e+00> : vector<8x8xf32>
    %77 = tpu.matmul %72, %74, %cst_32 {dimension_numbers = #tpu.dot_dimension_numbers<[1], [1], [0], [0], [0, 0, 1, 0], [], []>} : vector<8x8xbf16>, vector<8x8xbf16>, vector<8x8xf32> -> vector<8x8xf32>
    %cst_33 = arith.constant dense<0xFF800000> : vector<8xf32>
    %78 = vector.multi_reduction <maximumf>, %77, %cst_33 [1] : vector<8x8xf32> to vector<8xf32>
    %79 = vector.shape_cast %78 : vector<8xf32> to vector<8x1xf32>
    %80 = vector.broadcast %79 : vector<8x1xf32> to vector<8x8xf32>
    %81 = arith.subf %77, %80 : vector<8x8xf32>
    %82 = math.exp %81 : vector<8x8xf32>
    %cst_34 = arith.constant dense<0.000000e+00> : vector<8xf32>
    %83 = vector.multi_reduction <add>, %82, %cst_34 [1] : vector<8x8xf32> to vector<8xf32>
    %84 = vector.shape_cast %83 : vector<8xf32> to vector<8x1xf32>
    %85 = tpu.reciprocal %84 {approx = true} : vector<8x1xf32> -> vector<8x1xf32>
    %86 = arith.truncf %82 : vector<8x8xf32> to vector<8x8xbf16>
    %cst_35 = arith.constant dense<0.000000e+00> : vector<8x8xf32>
    %87 = tpu.matmul %86, %76, %cst_35 {dimension_numbers = #tpu.dot_dimension_numbers<[1], [0], [0], [1], [0, 0, 1, 1], [], []>} : vector<8x8xbf16>, vector<8x8xbf16>, vector<8x8xf32> -> vector<8x8xf32>
    %88 = vector.broadcast %85 : vector<8x1xf32> to vector<8x8xf32>
    %89 = arith.mulf %87, %88 : vector<8x8xf32>
    %90 = arith.truncf %89 : vector<8x8xf32> to vector<8x8xbf16>
    %91 = vector.extract_strided_slice %23 {offsets = [16, 0], sizes = [8, 32], strides = [1, 1]} : vector<32x32xbf16> to vector<8x32xbf16>
    %cst_36 = arith.constant dense<0.000000e+00> : vector<8x32xf32>
    %92 = tpu.matmul %90, %91, %cst_36 {dimension_numbers = #tpu.dot_dimension_numbers<[1], [0], [0], [1], [0, 0, 1, 1], [], []>} : vector<8x8xbf16>, vector<8x32xbf16>, vector<8x32xf32> -> vector<8x32xf32>
    %93 = arith.addf %70, %92 : vector<8x32xf32>
    %94 = vector.extract_strided_slice %10 {offsets = [0, 24], sizes = [8, 8], strides = [1, 1]} : vector<8x32xf32> to vector<8x8xf32>
    %95 = arith.truncf %94 : vector<8x8xf32> to vector<8x8xbf16>
    %96 = vector.extract_strided_slice %16 {offsets = [0, 24], sizes = [8, 8], strides = [1, 1]} : vector<8x32xf32> to vector<8x8xf32>
    %97 = arith.truncf %96 : vector<8x8xf32> to vector<8x8xbf16>
    %98 = vector.extract_strided_slice %22 {offsets = [0, 24], sizes = [8, 8], strides = [1, 1]} : vector<8x32xf32> to vector<8x8xf32>
    %99 = arith.truncf %98 : vector<8x8xf32> to vector<8x8xbf16>
    %cst_37 = arith.constant dense<0.000000e+00> : vector<8x8xf32>
    %100 = tpu.matmul %95, %97, %cst_37 {dimension_numbers = #tpu.dot_dimension_numbers<[1], [1], [0], [0], [0, 0, 1, 0], [], []>} : vector<8x8xbf16>, vector<8x8xbf16>, vector<8x8xf32> -> vector<8x8xf32>
    %cst_38 = arith.constant dense<0xFF800000> : vector<8xf32>
    %101 = vector.multi_reduction <maximumf>, %100, %cst_38 [1] : vector<8x8xf32> to vector<8xf32>
    %102 = vector.shape_cast %101 : vector<8xf32> to vector<8x1xf32>
    %103 = vector.broadcast %102 : vector<8x1xf32> to vector<8x8xf32>
    %104 = arith.subf %100, %103 : vector<8x8xf32>
    %105 = math.exp %104 : vector<8x8xf32>
    %cst_39 = arith.constant dense<0.000000e+00> : vector<8xf32>
    %106 = vector.multi_reduction <add>, %105, %cst_39 [1] : vector<8x8xf32> to vector<8xf32>
    %107 = vector.shape_cast %106 : vector<8xf32> to vector<8x1xf32>
    %108 = tpu.reciprocal %107 {approx = true} : vector<8x1xf32> -> vector<8x1xf32>
    %109 = arith.truncf %105 : vector<8x8xf32> to vector<8x8xbf16>
    %cst_40 = arith.constant dense<0.000000e+00> : vector<8x8xf32>
    %110 = tpu.matmul %109, %99, %cst_40 {dimension_numbers = #tpu.dot_dimension_numbers<[1], [0], [0], [1], [0, 0, 1, 1], [], []>} : vector<8x8xbf16>, vector<8x8xbf16>, vector<8x8xf32> -> vector<8x8xf32>
    %111 = vector.broadcast %108 : vector<8x1xf32> to vector<8x8xf32>
    %112 = arith.mulf %110, %111 : vector<8x8xf32>
    %113 = arith.truncf %112 : vector<8x8xf32> to vector<8x8xbf16>
    %114 = vector.extract_strided_slice %23 {offsets = [24, 0], sizes = [8, 32], strides = [1, 1]} : vector<32x32xbf16> to vector<8x32xbf16>
    %cst_41 = arith.constant dense<0.000000e+00> : vector<8x32xf32>
    %115 = tpu.matmul %113, %114, %cst_41 {dimension_numbers = #tpu.dot_dimension_numbers<[1], [0], [0], [1], [0, 0, 1, 1], [], []>} : vector<8x8xbf16>, vector<8x32xbf16>, vector<8x32xf32> -> vector<8x32xf32>
    %116 = arith.addf %93, %115 : vector<8x32xf32>
    %c0_42 = arith.constant 0 : index
    %c0_43 = arith.constant 0 : index
    %117 = vector.load %arg11[%c0_42, %c0_43] : memref<1x32xf32, #tpu.memory_space<vmem>>, vector<1x32xf32>
    %118 = vector.broadcast %117 : vector<1x32xf32> to vector<8x32xf32>
    %119 = arith.addf %116, %118 : vector<8x32xf32>
    %120 = arith.addf %1, %119 : vector<8x32xf32>
    %cst_44 = arith.constant dense<0.000000e+00> : vector<8xf32>
    %121 = vector.multi_reduction <add>, %120, %cst_44 [1] : vector<8x32xf32> to vector<8xf32>
    %122 = vector.shape_cast %121 : vector<8xf32> to vector<8x1xf32>
    %cst_45 = arith.constant 3.200000e+01 : f32
    %123 = vector.broadcast %cst_45 : f32 to vector<8x1xf32>
    %124 = arith.divf %122, %123 : vector<8x1xf32>
    %125 = vector.broadcast %124 : vector<8x1xf32> to vector<8x32xf32>
    %126 = arith.subf %120, %125 : vector<8x32xf32>
    %127 = arith.mulf %126, %126 : vector<8x32xf32>
    %cst_46 = arith.constant dense<0.000000e+00> : vector<8xf32>
    %128 = vector.multi_reduction <add>, %127, %cst_46 [1] : vector<8x32xf32> to vector<8xf32>
    %129 = vector.shape_cast %128 : vector<8xf32> to vector<8x1xf32>
    %cst_47 = arith.constant 3.200000e+01 : f32
    %130 = vector.broadcast %cst_47 : f32 to vector<8x1xf32>
    %131 = arith.divf %129, %130 : vector<8x1xf32>
    %cst_48 = arith.constant 9.99999974E-6 : f32
    %132 = vector.broadcast %cst_48 : f32 to vector<8x1xf32>
    %133 = arith.addf %131, %132 : vector<8x1xf32>
    %134 = math.rsqrt %133 : vector<8x1xf32>
    %135 = vector.broadcast %134 : vector<8x1xf32> to vector<8x32xf32>
    %136 = arith.mulf %126, %135 : vector<8x32xf32>
    %c0_49 = arith.constant 0 : index
    %c0_50 = arith.constant 0 : index
    %137 = vector.load %arg12[%c0_49, %c0_50] : memref<1x32xf32, #tpu.memory_space<vmem>>, vector<1x32xf32>
    %138 = vector.broadcast %137 : vector<1x32xf32> to vector<8x32xf32>
    %139 = arith.mulf %136, %138 : vector<8x32xf32>
    %c0_51 = arith.constant 0 : index
    %c0_52 = arith.constant 0 : index
    %140 = vector.load %arg13[%c0_51, %c0_52] : memref<1x32xf32, #tpu.memory_space<vmem>>, vector<1x32xf32>
    %141 = vector.broadcast %140 : vector<1x32xf32> to vector<8x32xf32>
    %142 = arith.addf %139, %141 : vector<8x32xf32>
    %c0_53 = arith.constant 0 : index
    %c0_54 = arith.constant 0 : index
    %c0_55 = arith.constant 0 : index
    %143 = vector.load %arg14[%c0_53, %c0_54, %c0_55] : memref<1x8x32xf32, #tpu.memory_space<vmem>>, vector<1x8x32xf32>
    %144 = vector.shape_cast %143 : vector<1x8x32xf32> to vector<8x32xf32>
    %145 = vector.shape_cast %142 : vector<8x32xf32> to vector<1x8x32xf32>
    tpu.vector_store %arg14[%c0_53, %c0_54, %c0_55], %145 {strides = array<i32>} : memref<1x8x32xf32, #tpu.memory_space<vmem>>, vector<1x8x32xf32>,
    return
  }
  func.func @transform_0(%arg0: i32, %arg1: i32) -> (i32, i32, i32) {
    %c0_i32 = arith.constant 0 : i32
    %c0_i32_0 = arith.constant 0 : i32
    return %arg0, %arg1, %c0_i32 : i32, i32, i32
  }
  func.func @transform_1(%arg0: i32, %arg1: i32) -> (i32, i32, i32) {
    %c0_i32 = arith.constant 0 : i32
    %c0_i32_0 = arith.constant 0 : i32
    return %arg0, %arg1, %c0_i32 : i32, i32, i32
  }
  func.func @transform_2(%arg0: i32, %arg1: i32) -> (i32, i32) {
    %c0_i32 = arith.constant 0 : i32
    %c0_i32_0 = arith.constant 0 : i32
    %c0_i32_1 = arith.constant 0 : i32
    return %c0_i32, %c0_i32_0 : i32, i32
  }
  func.func @transform_3(%arg0: i32, %arg1: i32) -> (i32, i32) {
    %c0_i32 = arith.constant 0 : i32
    %c0_i32_0 = arith.constant 0 : i32
    %c0_i32_1 = arith.constant 0 : i32
    return %c0_i32, %c0_i32_0 : i32, i32
  }
  func.func @transform_4(%arg0: i32, %arg1: i32) -> (i32, i32) {
    %c0_i32 = arith.constant 0 : i32
    %c0_i32_0 = arith.constant 0 : i32
    %c0_i32_1 = arith.constant 0 : i32
    return %c0_i32, %c0_i32_0 : i32, i32
  }
  func.func @transform_5(%arg0: i32, %arg1: i32) -> (i32, i32) {
    %c0_i32 = arith.constant 0 : i32
    %c0_i32_0 = arith.constant 0 : i32
    %c0_i32_1 = arith.constant 0 : i32
    return %c0_i32, %c0_i32_0 : i32, i32
  }
  func.func @transform_6(%arg0: i32, %arg1: i32) -> (i32, i32) {
    %c0_i32 = arith.constant 0 : i32
    %c0_i32_0 = arith.constant 0 : i32
    %c0_i32_1 = arith.constant 0 : i32
    return %c0_i32, %c0_i32_0 : i32, i32
  }
  func.func @transform_7(%arg0: i32, %arg1: i32) -> (i32, i32) {
    %c0_i32 = arith.constant 0 : i32
    %c0_i32_0 = arith.constant 0 : i32
    %c0_i32_1 = arith.constant 0 : i32
    return %c0_i32, %c0_i32_0 : i32, i32
  }
  func.func @transform_8(%arg0: i32, %arg1: i32) -> (i32, i32) {
    %c0_i32 = arith.constant 0 : i32
    %c0_i32_0 = arith.constant 0 : i32
    %c0_i32_1 = arith.constant 0 : i32
    return %c0_i32, %c0_i32_0 : i32, i32
  }
  func.func @transform_9(%arg0: i32, %arg1: i32) -> (i32, i32) {
    %c0_i32 = arith.constant 0 : i32
    %c0_i32_0 = arith.constant 0 : i32
    %c0_i32_1 = arith.constant 0 : i32
    return %c0_i32, %c0_i32_0 : i32, i32
  }
  func.func @transform_10(%arg0: i32, %arg1: i32) -> (i32, i32) {
    %c0_i32 = arith.constant 0 : i32
    %c0_i32_0 = arith.constant 0 : i32
    %c0_i32_1 = arith.constant 0 : i32
    return %c0_i32, %c0_i32_0 : i32, i32
  }
  func.func @transform_11(%arg0: i32, %arg1: i32) -> (i32, i32) {
    %c0_i32 = arith.constant 0 : i32
    %c0_i32_0 = arith.constant 0 : i32
    %c0_i32_1 = arith.constant 0 : i32
    return %c0_i32, %c0_i32_0 : i32, i32
  }
  func.func @transform_12(%arg0: i32, %arg1: i32) -> (i32, i32, i32) {
    %c0_i32 = arith.constant 0 : i32
    %c0_i32_0 = arith.constant 0 : i32
    return %arg0, %arg1, %c0_i32 : i32, i32, i32
  }
}

module attributes {stable_mosaic.version = 11 : i64} {
  func.func @_attn_ln_kernel(%arg0: i32, %arg1: i32, %arg2: memref<1x8x32xf32, #tpu.memory_space<vmem>>, %arg3: memref<1x8x32xf32, #tpu.memory_space<vmem>>, %arg4: memref<1x16x32xf32, #tpu.memory_space<vmem>>, %arg5: memref<1x16x32xf32, #tpu.memory_space<vmem>>, %arg6: memref<32x16xbf16, #tpu.memory_space<vmem>>, %arg7: memref<1x16xf32, #tpu.memory_space<vmem>>, %arg8: memref<32x16xbf16, #tpu.memory_space<vmem>>, %arg9: memref<1x16xf32, #tpu.memory_space<vmem>>, %arg10: memref<32x16xbf16, #tpu.memory_space<vmem>>, %arg11: memref<1x16xf32, #tpu.memory_space<vmem>>, %arg12: memref<16x32xbf16, #tpu.memory_space<vmem>>, %arg13: memref<1x32xf32, #tpu.memory_space<vmem>>, %arg14: memref<1x32xf32, #tpu.memory_space<vmem>>, %arg15: memref<1x32xf32, #tpu.memory_space<vmem>>, %arg16: memref<1x8x32xf32, #tpu.memory_space<vmem>>) attributes {dimension_semantics = [#tpu.dimension_semantics<parallel>, #tpu.dimension_semantics<parallel>], iteration_bounds = array<i64: 2, 1>, scalar_prefetch = 0 : i64, scratch_operands = 0 : i64, tpu.core_type = #tpu.core_type<tc>, window_params = [{transform_indices = @transform_0, window_bounds = array<i64: 1, 8, 32>}, {transform_indices = @transform_1, window_bounds = array<i64: 1, 8, 32>}, {transform_indices = @transform_2, window_bounds = array<i64: 1, 16, 32>}, {transform_indices = @transform_3, window_bounds = array<i64: 1, 16, 32>}, {pipeline_mode = #tpu.pipeline_mode<synchronous>, transform_indices = @transform_4, window_bounds = array<i64: 32, 16>}, {pipeline_mode = #tpu.pipeline_mode<synchronous>, transform_indices = @transform_5, window_bounds = array<i64: 1, 16>}, {pipeline_mode = #tpu.pipeline_mode<synchronous>, transform_indices = @transform_6, window_bounds = array<i64: 32, 16>}, {pipeline_mode = #tpu.pipeline_mode<synchronous>, transform_indices = @transform_7, window_bounds = array<i64: 1, 16>}, {pipeline_mode = #tpu.pipeline_mode<synchronous>, transform_indices = @transform_8, window_bounds = array<i64: 32, 16>}, {pipeline_mode = #tpu.pipeline_mode<synchronous>, transform_indices = @transform_9, window_bounds = array<i64: 1, 16>}, {pipeline_mode = #tpu.pipeline_mode<synchronous>, transform_indices = @transform_10, window_bounds = array<i64: 16, 32>}, {pipeline_mode = #tpu.pipeline_mode<synchronous>, transform_indices = @transform_11, window_bounds = array<i64: 1, 32>}, {pipeline_mode = #tpu.pipeline_mode<synchronous>, transform_indices = @transform_12, window_bounds = array<i64: 1, 32>}, {pipeline_mode = #tpu.pipeline_mode<synchronous>, transform_indices = @transform_13, window_bounds = array<i64: 1, 32>}, {transform_indices = @transform_14, window_bounds = array<i64: 1, 8, 32>}]} {
    %c0 = arith.constant 0 : index
    %c0_0 = arith.constant 0 : index
    %c0_1 = arith.constant 0 : index
    %0 = vector.load %arg2[%c0, %c0_0, %c0_1] : memref<1x8x32xf32, #tpu.memory_space<vmem>>, vector<1x8x32xf32>
    %1 = vector.shape_cast %0 : vector<1x8x32xf32> to vector<8x32xf32>
    %c0_2 = arith.constant 0 : index
    %c0_3 = arith.constant 0 : index
    %c0_4 = arith.constant 0 : index
    %2 = vector.load %arg3[%c0_2, %c0_3, %c0_4] : memref<1x8x32xf32, #tpu.memory_space<vmem>>, vector<1x8x32xf32>
    %3 = vector.shape_cast %2 : vector<1x8x32xf32> to vector<8x32xf32>
    %4 = arith.addf %1, %3 : vector<8x32xf32>
    %c0_5 = arith.constant 0 : index
    %c0_6 = arith.constant 0 : index
    %c0_7 = arith.constant 0 : index
    %5 = vector.load %arg4[%c0_5, %c0_6, %c0_7] : memref<1x16x32xf32, #tpu.memory_space<vmem>>, vector<1x16x32xf32>
    %6 = vector.shape_cast %5 : vector<1x16x32xf32> to vector<16x32xf32>
    %c0_8 = arith.constant 0 : index
    %c0_9 = arith.constant 0 : index
    %c0_10 = arith.constant 0 : index
    %7 = vector.load %arg5[%c0_8, %c0_9, %c0_10] : memref<1x16x32xf32, #tpu.memory_space<vmem>>, vector<1x16x32xf32>
    %8 = vector.shape_cast %7 : vector<1x16x32xf32> to vector<16x32xf32>
    %9 = arith.addf %6, %8 : vector<16x32xf32>
    %10 = arith.truncf %4 : vector<8x32xf32> to vector<8x32xbf16>
    %c0_11 = arith.constant 0 : index
    %c0_12 = arith.constant 0 : index
    %11 = vector.load %arg6[%c0_11, %c0_12] : memref<32x16xbf16, #tpu.memory_space<vmem>>, vector<32x16xbf16>
    %cst = arith.constant dense<0.000000e+00> : vector<8x16xf32>
    %12 = tpu.matmul %10, %11, %cst {dimension_numbers = #tpu.dot_dimension_numbers<[1], [0], [0], [1], [0, 0, 1, 1], [], []>} : vector<8x32xbf16>, vector<32x16xbf16>, vector<8x16xf32> -> vector<8x16xf32>
    %c0_13 = arith.constant 0 : index
    %c0_14 = arith.constant 0 : index
    %13 = vector.load %arg7[%c0_13, %c0_14] : memref<1x16xf32, #tpu.memory_space<vmem>>, vector<1x16xf32>
    %14 = vector.broadcast %13 : vector<1x16xf32> to vector<8x16xf32>
    %15 = arith.addf %12, %14 : vector<8x16xf32>
    %16 = arith.truncf %9 : vector<16x32xf32> to vector<16x32xbf16>
    %c0_15 = arith.constant 0 : index
    %c0_16 = arith.constant 0 : index
    %17 = vector.load %arg8[%c0_15, %c0_16] : memref<32x16xbf16, #tpu.memory_space<vmem>>, vector<32x16xbf16>
    %cst_17 = arith.constant dense<0.000000e+00> : vector<16x16xf32>
    %18 = tpu.matmul %16, %17, %cst_17 {dimension_numbers = #tpu.dot_dimension_numbers<[1], [0], [0], [1], [0, 0, 1, 1], [], []>} : vector<16x32xbf16>, vector<32x16xbf16>, vector<16x16xf32> -> vector<16x16xf32>
    %c0_18 = arith.constant 0 : index
    %c0_19 = arith.constant 0 : index
    %19 = vector.load %arg9[%c0_18, %c0_19] : memref<1x16xf32, #tpu.memory_space<vmem>>, vector<1x16xf32>
    %20 = vector.broadcast %19 : vector<1x16xf32> to vector<16x16xf32>
    %21 = arith.addf %18, %20 : vector<16x16xf32>
    %22 = arith.truncf %6 : vector<16x32xf32> to vector<16x32xbf16>
    %c0_20 = arith.constant 0 : index
    %c0_21 = arith.constant 0 : index
    %23 = vector.load %arg10[%c0_20, %c0_21] : memref<32x16xbf16, #tpu.memory_space<vmem>>, vector<32x16xbf16>
    %cst_22 = arith.constant dense<0.000000e+00> : vector<16x16xf32>
    %24 = tpu.matmul %22, %23, %cst_22 {dimension_numbers = #tpu.dot_dimension_numbers<[1], [0], [0], [1], [0, 0, 1, 1], [], []>} : vector<16x32xbf16>, vector<32x16xbf16>, vector<16x16xf32> -> vector<16x16xf32>
    %c0_23 = arith.constant 0 : index
    %c0_24 = arith.constant 0 : index
    %25 = vector.load %arg11[%c0_23, %c0_24] : memref<1x16xf32, #tpu.memory_space<vmem>>, vector<1x16xf32>
    %26 = vector.broadcast %25 : vector<1x16xf32> to vector<16x16xf32>
    %27 = arith.addf %24, %26 : vector<16x16xf32>
    %c0_25 = arith.constant 0 : index
    %c0_26 = arith.constant 0 : index
    %28 = vector.load %arg12[%c0_25, %c0_26] : memref<16x32xbf16, #tpu.memory_space<vmem>>, vector<16x32xbf16>
    %cst_27 = arith.constant 0.000000e+00 : f32
    %29 = vector.broadcast %cst_27 : f32 to vector<8x32xf32>
    %30 = vector.extract_strided_slice %15 {offsets = [0, 0], sizes = [8, 4], strides = [1, 1]} : vector<8x16xf32> to vector<8x4xf32>
    %31 = arith.truncf %30 : vector<8x4xf32> to vector<8x4xbf16>
    %32 = vector.extract_strided_slice %21 {offsets = [0, 0], sizes = [16, 4], strides = [1, 1]} : vector<16x16xf32> to vector<16x4xf32>
    %33 = arith.truncf %32 : vector<16x4xf32> to vector<16x4xbf16>
    %34 = vector.extract_strided_slice %27 {offsets = [0, 0], sizes = [16, 4], strides = [1, 1]} : vector<16x16xf32> to vector<16x4xf32>
    %35 = arith.truncf %34 : vector<16x4xf32> to vector<16x4xbf16>
    %cst_28 = arith.constant dense<0.000000e+00> : vector<8x16xf32>
    %36 = tpu.matmul %31, %33, %cst_28 {dimension_numbers = #tpu.dot_dimension_numbers<[1], [1], [0], [0], [0, 0, 1, 0], [], []>} : vector<8x4xbf16>, vector<16x4xbf16>, vector<8x16xf32> -> vector<8x16xf32>
    %cst_29 = arith.constant dense<0xFF800000> : vector<8xf32>
    %37 = vector.multi_reduction <maximumf>, %36, %cst_29 [1] : vector<8x16xf32> to vector<8xf32>
    %38 = vector.shape_cast %37 : vector<8xf32> to vector<8x1xf32>
    %39 = vector.broadcast %38 : vector<8x1xf32> to vector<8x16xf32>
    %40 = arith.subf %36, %39 : vector<8x16xf32>
    %41 = math.exp %40 : vector<8x16xf32>
    %cst_30 = arith.constant dense<0.000000e+00> : vector<8xf32>
    %42 = vector.multi_reduction <add>, %41, %cst_30 [1] : vector<8x16xf32> to vector<8xf32>
    %43 = vector.shape_cast %42 : vector<8xf32> to vector<8x1xf32>
    %44 = tpu.reciprocal %43 {approx = true} : vector<8x1xf32> -> vector<8x1xf32>
    %45 = arith.truncf %41 : vector<8x16xf32> to vector<8x16xbf16>
    %cst_31 = arith.constant dense<0.000000e+00> : vector<8x4xf32>
    %46 = tpu.matmul %45, %35, %cst_31 {dimension_numbers = #tpu.dot_dimension_numbers<[1], [0], [0], [1], [0, 0, 1, 1], [], []>} : vector<8x16xbf16>, vector<16x4xbf16>, vector<8x4xf32> -> vector<8x4xf32>
    %47 = vector.broadcast %44 : vector<8x1xf32> to vector<8x4xf32>
    %48 = arith.mulf %46, %47 : vector<8x4xf32>
    %49 = arith.truncf %48 : vector<8x4xf32> to vector<8x4xbf16>
    %50 = vector.extract_strided_slice %28 {offsets = [0, 0], sizes = [4, 32], strides = [1, 1]} : vector<16x32xbf16> to vector<4x32xbf16>
    %cst_32 = arith.constant dense<0.000000e+00> : vector<8x32xf32>
    %51 = tpu.matmul %49, %50, %cst_32 {dimension_numbers = #tpu.dot_dimension_numbers<[1], [0], [0], [1], [0, 0, 1, 1], [], []>} : vector<8x4xbf16>, vector<4x32xbf16>, vector<8x32xf32> -> vector<8x32xf32>
    %52 = arith.addf %29, %51 : vector<8x32xf32>
    %53 = vector.extract_strided_slice %15 {offsets = [0, 4], sizes = [8, 4], strides = [1, 1]} : vector<8x16xf32> to vector<8x4xf32>
    %54 = arith.truncf %53 : vector<8x4xf32> to vector<8x4xbf16>
    %55 = vector.extract_strided_slice %21 {offsets = [0, 4], sizes = [16, 4], strides = [1, 1]} : vector<16x16xf32> to vector<16x4xf32>
    %56 = arith.truncf %55 : vector<16x4xf32> to vector<16x4xbf16>
    %57 = vector.extract_strided_slice %27 {offsets = [0, 4], sizes = [16, 4], strides = [1, 1]} : vector<16x16xf32> to vector<16x4xf32>
    %58 = arith.truncf %57 : vector<16x4xf32> to vector<16x4xbf16>
    %cst_33 = arith.constant dense<0.000000e+00> : vector<8x16xf32>
    %59 = tpu.matmul %54, %56, %cst_33 {dimension_numbers = #tpu.dot_dimension_numbers<[1], [1], [0], [0], [0, 0, 1, 0], [], []>} : vector<8x4xbf16>, vector<16x4xbf16>, vector<8x16xf32> -> vector<8x16xf32>
    %cst_34 = arith.constant dense<0xFF800000> : vector<8xf32>
    %60 = vector.multi_reduction <maximumf>, %59, %cst_34 [1] : vector<8x16xf32> to vector<8xf32>
    %61 = vector.shape_cast %60 : vector<8xf32> to vector<8x1xf32>
    %62 = vector.broadcast %61 : vector<8x1xf32> to vector<8x16xf32>
    %63 = arith.subf %59, %62 : vector<8x16xf32>
    %64 = math.exp %63 : vector<8x16xf32>
    %cst_35 = arith.constant dense<0.000000e+00> : vector<8xf32>
    %65 = vector.multi_reduction <add>, %64, %cst_35 [1] : vector<8x16xf32> to vector<8xf32>
    %66 = vector.shape_cast %65 : vector<8xf32> to vector<8x1xf32>
    %67 = tpu.reciprocal %66 {approx = true} : vector<8x1xf32> -> vector<8x1xf32>
    %68 = arith.truncf %64 : vector<8x16xf32> to vector<8x16xbf16>
    %cst_36 = arith.constant dense<0.000000e+00> : vector<8x4xf32>
    %69 = tpu.matmul %68, %58, %cst_36 {dimension_numbers = #tpu.dot_dimension_numbers<[1], [0], [0], [1], [0, 0, 1, 1], [], []>} : vector<8x16xbf16>, vector<16x4xbf16>, vector<8x4xf32> -> vector<8x4xf32>
    %70 = vector.broadcast %67 : vector<8x1xf32> to vector<8x4xf32>
    %71 = arith.mulf %69, %70 : vector<8x4xf32>
    %72 = arith.truncf %71 : vector<8x4xf32> to vector<8x4xbf16>
    %73 = vector.extract_strided_slice %28 {offsets = [4, 0], sizes = [4, 32], strides = [1, 1]} : vector<16x32xbf16> to vector<4x32xbf16>
    %cst_37 = arith.constant dense<0.000000e+00> : vector<8x32xf32>
    %74 = tpu.matmul %72, %73, %cst_37 {dimension_numbers = #tpu.dot_dimension_numbers<[1], [0], [0], [1], [0, 0, 1, 1], [], []>} : vector<8x4xbf16>, vector<4x32xbf16>, vector<8x32xf32> -> vector<8x32xf32>
    %75 = arith.addf %52, %74 : vector<8x32xf32>
    %76 = vector.extract_strided_slice %15 {offsets = [0, 8], sizes = [8, 4], strides = [1, 1]} : vector<8x16xf32> to vector<8x4xf32>
    %77 = arith.truncf %76 : vector<8x4xf32> to vector<8x4xbf16>
    %78 = vector.extract_strided_slice %21 {offsets = [0, 8], sizes = [16, 4], strides = [1, 1]} : vector<16x16xf32> to vector<16x4xf32>
    %79 = arith.truncf %78 : vector<16x4xf32> to vector<16x4xbf16>
    %80 = vector.extract_strided_slice %27 {offsets = [0, 8], sizes = [16, 4], strides = [1, 1]} : vector<16x16xf32> to vector<16x4xf32>
    %81 = arith.truncf %80 : vector<16x4xf32> to vector<16x4xbf16>
    %cst_38 = arith.constant dense<0.000000e+00> : vector<8x16xf32>
    %82 = tpu.matmul %77, %79, %cst_38 {dimension_numbers = #tpu.dot_dimension_numbers<[1], [1], [0], [0], [0, 0, 1, 0], [], []>} : vector<8x4xbf16>, vector<16x4xbf16>, vector<8x16xf32> -> vector<8x16xf32>
    %cst_39 = arith.constant dense<0xFF800000> : vector<8xf32>
    %83 = vector.multi_reduction <maximumf>, %82, %cst_39 [1] : vector<8x16xf32> to vector<8xf32>
    %84 = vector.shape_cast %83 : vector<8xf32> to vector<8x1xf32>
    %85 = vector.broadcast %84 : vector<8x1xf32> to vector<8x16xf32>
    %86 = arith.subf %82, %85 : vector<8x16xf32>
    %87 = math.exp %86 : vector<8x16xf32>
    %cst_40 = arith.constant dense<0.000000e+00> : vector<8xf32>
    %88 = vector.multi_reduction <add>, %87, %cst_40 [1] : vector<8x16xf32> to vector<8xf32>
    %89 = vector.shape_cast %88 : vector<8xf32> to vector<8x1xf32>
    %90 = tpu.reciprocal %89 {approx = true} : vector<8x1xf32> -> vector<8x1xf32>
    %91 = arith.truncf %87 : vector<8x16xf32> to vector<8x16xbf16>
    %cst_41 = arith.constant dense<0.000000e+00> : vector<8x4xf32>
    %92 = tpu.matmul %91, %81, %cst_41 {dimension_numbers = #tpu.dot_dimension_numbers<[1], [0], [0], [1], [0, 0, 1, 1], [], []>} : vector<8x16xbf16>, vector<16x4xbf16>, vector<8x4xf32> -> vector<8x4xf32>
    %93 = vector.broadcast %90 : vector<8x1xf32> to vector<8x4xf32>
    %94 = arith.mulf %92, %93 : vector<8x4xf32>
    %95 = arith.truncf %94 : vector<8x4xf32> to vector<8x4xbf16>
    %96 = vector.extract_strided_slice %28 {offsets = [8, 0], sizes = [4, 32], strides = [1, 1]} : vector<16x32xbf16> to vector<4x32xbf16>
    %cst_42 = arith.constant dense<0.000000e+00> : vector<8x32xf32>
    %97 = tpu.matmul %95, %96, %cst_42 {dimension_numbers = #tpu.dot_dimension_numbers<[1], [0], [0], [1], [0, 0, 1, 1], [], []>} : vector<8x4xbf16>, vector<4x32xbf16>, vector<8x32xf32> -> vector<8x32xf32>
    %98 = arith.addf %75, %97 : vector<8x32xf32>
    %99 = vector.extract_strided_slice %15 {offsets = [0, 12], sizes = [8, 4], strides = [1, 1]} : vector<8x16xf32> to vector<8x4xf32>
    %100 = arith.truncf %99 : vector<8x4xf32> to vector<8x4xbf16>
    %101 = vector.extract_strided_slice %21 {offsets = [0, 12], sizes = [16, 4], strides = [1, 1]} : vector<16x16xf32> to vector<16x4xf32>
    %102 = arith.truncf %101 : vector<16x4xf32> to vector<16x4xbf16>
    %103 = vector.extract_strided_slice %27 {offsets = [0, 12], sizes = [16, 4], strides = [1, 1]} : vector<16x16xf32> to vector<16x4xf32>
    %104 = arith.truncf %103 : vector<16x4xf32> to vector<16x4xbf16>
    %cst_43 = arith.constant dense<0.000000e+00> : vector<8x16xf32>
    %105 = tpu.matmul %100, %102, %cst_43 {dimension_numbers = #tpu.dot_dimension_numbers<[1], [1], [0], [0], [0, 0, 1, 0], [], []>} : vector<8x4xbf16>, vector<16x4xbf16>, vector<8x16xf32> -> vector<8x16xf32>
    %cst_44 = arith.constant dense<0xFF800000> : vector<8xf32>
    %106 = vector.multi_reduction <maximumf>, %105, %cst_44 [1] : vector<8x16xf32> to vector<8xf32>
    %107 = vector.shape_cast %106 : vector<8xf32> to vector<8x1xf32>
    %108 = vector.broadcast %107 : vector<8x1xf32> to vector<8x16xf32>
    %109 = arith.subf %105, %108 : vector<8x16xf32>
    %110 = math.exp %109 : vector<8x16xf32>
    %cst_45 = arith.constant dense<0.000000e+00> : vector<8xf32>
    %111 = vector.multi_reduction <add>, %110, %cst_45 [1] : vector<8x16xf32> to vector<8xf32>
    %112 = vector.shape_cast %111 : vector<8xf32> to vector<8x1xf32>
    %113 = tpu.reciprocal %112 {approx = true} : vector<8x1xf32> -> vector<8x1xf32>
    %114 = arith.truncf %110 : vector<8x16xf32> to vector<8x16xbf16>
    %cst_46 = arith.constant dense<0.000000e+00> : vector<8x4xf32>
    %115 = tpu.matmul %114, %104, %cst_46 {dimension_numbers = #tpu.dot_dimension_numbers<[1], [0], [0], [1], [0, 0, 1, 1], [], []>} : vector<8x16xbf16>, vector<16x4xbf16>, vector<8x4xf32> -> vector<8x4xf32>
    %116 = vector.broadcast %113 : vector<8x1xf32> to vector<8x4xf32>
    %117 = arith.mulf %115, %116 : vector<8x4xf32>
    %118 = arith.truncf %117 : vector<8x4xf32> to vector<8x4xbf16>
    %119 = vector.extract_strided_slice %28 {offsets = [12, 0], sizes = [4, 32], strides = [1, 1]} : vector<16x32xbf16> to vector<4x32xbf16>
    %cst_47 = arith.constant dense<0.000000e+00> : vector<8x32xf32>
    %120 = tpu.matmul %118, %119, %cst_47 {dimension_numbers = #tpu.dot_dimension_numbers<[1], [0], [0], [1], [0, 0, 1, 1], [], []>} : vector<8x4xbf16>, vector<4x32xbf16>, vector<8x32xf32> -> vector<8x32xf32>
    %121 = arith.addf %98, %120 : vector<8x32xf32>
    %c0_48 = arith.constant 0 : index
    %c0_49 = arith.constant 0 : index
    %122 = vector.load %arg13[%c0_48, %c0_49] : memref<1x32xf32, #tpu.memory_space<vmem>>, vector<1x32xf32>
    %123 = vector.broadcast %122 : vector<1x32xf32> to vector<8x32xf32>
    %124 = arith.addf %121, %123 : vector<8x32xf32>
    %125 = arith.addf %1, %124 : vector<8x32xf32>
    %cst_50 = arith.constant dense<0.000000e+00> : vector<8xf32>
    %126 = vector.multi_reduction <add>, %125, %cst_50 [1] : vector<8x32xf32> to vector<8xf32>
    %127 = vector.shape_cast %126 : vector<8xf32> to vector<8x1xf32>
    %cst_51 = arith.constant 3.200000e+01 : f32
    %128 = vector.broadcast %cst_51 : f32 to vector<8x1xf32>
    %129 = arith.divf %127, %128 : vector<8x1xf32>
    %130 = vector.broadcast %129 : vector<8x1xf32> to vector<8x32xf32>
    %131 = arith.subf %125, %130 : vector<8x32xf32>
    %132 = arith.mulf %131, %131 : vector<8x32xf32>
    %cst_52 = arith.constant dense<0.000000e+00> : vector<8xf32>
    %133 = vector.multi_reduction <add>, %132, %cst_52 [1] : vector<8x32xf32> to vector<8xf32>
    %134 = vector.shape_cast %133 : vector<8xf32> to vector<8x1xf32>
    %cst_53 = arith.constant 3.200000e+01 : f32
    %135 = vector.broadcast %cst_53 : f32 to vector<8x1xf32>
    %136 = arith.divf %134, %135 : vector<8x1xf32>
    %cst_54 = arith.constant 9.99999974E-6 : f32
    %137 = vector.broadcast %cst_54 : f32 to vector<8x1xf32>
    %138 = arith.addf %136, %137 : vector<8x1xf32>
    %139 = math.rsqrt %138 : vector<8x1xf32>
    %140 = vector.broadcast %139 : vector<8x1xf32> to vector<8x32xf32>
    %141 = arith.mulf %131, %140 : vector<8x32xf32>
    %c0_55 = arith.constant 0 : index
    %c0_56 = arith.constant 0 : index
    %142 = vector.load %arg14[%c0_55, %c0_56] : memref<1x32xf32, #tpu.memory_space<vmem>>, vector<1x32xf32>
    %143 = vector.broadcast %142 : vector<1x32xf32> to vector<8x32xf32>
    %144 = arith.mulf %141, %143 : vector<8x32xf32>
    %c0_57 = arith.constant 0 : index
    %c0_58 = arith.constant 0 : index
    %145 = vector.load %arg15[%c0_57, %c0_58] : memref<1x32xf32, #tpu.memory_space<vmem>>, vector<1x32xf32>
    %146 = vector.broadcast %145 : vector<1x32xf32> to vector<8x32xf32>
    %147 = arith.addf %144, %146 : vector<8x32xf32>
    %c0_59 = arith.constant 0 : index
    %c0_60 = arith.constant 0 : index
    %c0_61 = arith.constant 0 : index
    %148 = vector.load %arg16[%c0_59, %c0_60, %c0_61] : memref<1x8x32xf32, #tpu.memory_space<vmem>>, vector<1x8x32xf32>
    %149 = vector.shape_cast %148 : vector<1x8x32xf32> to vector<8x32xf32>
    %150 = vector.shape_cast %147 : vector<8x32xf32> to vector<1x8x32xf32>
    tpu.vector_store %arg16[%c0_59, %c0_60, %c0_61], %150 {strides = array<i32>} : memref<1x8x32xf32, #tpu.memory_space<vmem>>, vector<1x8x32xf32>,
    return
  }
  func.func @transform_0(%arg0: i32, %arg1: i32) -> (i32, i32, i32) {
    %c0_i32 = arith.constant 0 : i32
    %c0_i32_0 = arith.constant 0 : i32
    return %arg0, %arg1, %c0_i32 : i32, i32, i32
  }
  func.func @transform_1(%arg0: i32, %arg1: i32) -> (i32, i32, i32) {
    %c0_i32 = arith.constant 0 : i32
    %c0_i32_0 = arith.constant 0 : i32
    return %arg0, %arg1, %c0_i32 : i32, i32, i32
  }
  func.func @transform_2(%arg0: i32, %arg1: i32) -> (i32, i32, i32) {
    %c0_i32 = arith.constant 0 : i32
    %c0_i32_0 = arith.constant 0 : i32
    %c0_i32_1 = arith.constant 0 : i32
    return %arg0, %c0_i32, %c0_i32_0 : i32, i32, i32
  }
  func.func @transform_3(%arg0: i32, %arg1: i32) -> (i32, i32, i32) {
    %c0_i32 = arith.constant 0 : i32
    %c0_i32_0 = arith.constant 0 : i32
    %c0_i32_1 = arith.constant 0 : i32
    return %arg0, %c0_i32, %c0_i32_0 : i32, i32, i32
  }
  func.func @transform_4(%arg0: i32, %arg1: i32) -> (i32, i32) {
    %c0_i32 = arith.constant 0 : i32
    %c0_i32_0 = arith.constant 0 : i32
    %c0_i32_1 = arith.constant 0 : i32
    return %c0_i32, %c0_i32_0 : i32, i32
  }
  func.func @transform_5(%arg0: i32, %arg1: i32) -> (i32, i32) {
    %c0_i32 = arith.constant 0 : i32
    %c0_i32_0 = arith.constant 0 : i32
    %c0_i32_1 = arith.constant 0 : i32
    return %c0_i32, %c0_i32_0 : i32, i32
  }
  func.func @transform_6(%arg0: i32, %arg1: i32) -> (i32, i32) {
    %c0_i32 = arith.constant 0 : i32
    %c0_i32_0 = arith.constant 0 : i32
    %c0_i32_1 = arith.constant 0 : i32
    return %c0_i32, %c0_i32_0 : i32, i32
  }
  func.func @transform_7(%arg0: i32, %arg1: i32) -> (i32, i32) {
    %c0_i32 = arith.constant 0 : i32
    %c0_i32_0 = arith.constant 0 : i32
    %c0_i32_1 = arith.constant 0 : i32
    return %c0_i32, %c0_i32_0 : i32, i32
  }
  func.func @transform_8(%arg0: i32, %arg1: i32) -> (i32, i32) {
    %c0_i32 = arith.constant 0 : i32
    %c0_i32_0 = arith.constant 0 : i32
    %c0_i32_1 = arith.constant 0 : i32
    return %c0_i32, %c0_i32_0 : i32, i32
  }
  func.func @transform_9(%arg0: i32, %arg1: i32) -> (i32, i32) {
    %c0_i32 = arith.constant 0 : i32
    %c0_i32_0 = arith.constant 0 : i32
    %c0_i32_1 = arith.constant 0 : i32
    return %c0_i32, %c0_i32_0 : i32, i32
  }
  func.func @transform_10(%arg0: i32, %arg1: i32) -> (i32, i32) {
    %c0_i32 = arith.constant 0 : i32
    %c0_i32_0 = arith.constant 0 : i32
    %c0_i32_1 = arith.constant 0 : i32
    return %c0_i32, %c0_i32_0 : i32, i32
  }
  func.func @transform_11(%arg0: i32, %arg1: i32) -> (i32, i32) {
    %c0_i32 = arith.constant 0 : i32
    %c0_i32_0 = arith.constant 0 : i32
    %c0_i32_1 = arith.constant 0 : i32
    return %c0_i32, %c0_i32_0 : i32, i32
  }
  func.func @transform_12(%arg0: i32, %arg1: i32) -> (i32, i32) {
    %c0_i32 = arith.constant 0 : i32
    %c0_i32_0 = arith.constant 0 : i32
    %c0_i32_1 = arith.constant 0 : i32
    return %c0_i32, %c0_i32_0 : i32, i32
  }
  func.func @transform_13(%arg0: i32, %arg1: i32) -> (i32, i32) {
    %c0_i32 = arith.constant 0 : i32
    %c0_i32_0 = arith.constant 0 : i32
    %c0_i32_1 = arith.constant 0 : i32
    return %c0_i32, %c0_i32_0 : i32, i32
  }
  func.func @transform_14(%arg0: i32, %arg1: i32) -> (i32, i32, i32) {
    %c0_i32 = arith.constant 0 : i32
    %c0_i32_0 = arith.constant 0 : i32
    return %arg0, %arg1, %c0_i32 : i32, i32, i32
  }
}

module attributes {stable_mosaic.version = 11 : i64} {
  func.func @_mlp_ln_kernel(%arg0: i32, %arg1: memref<16x32xf32, #tpu.memory_space<vmem>>, %arg2: memref<32x64xbf16, #tpu.memory_space<vmem>>, %arg3: memref<1x64xf32, #tpu.memory_space<vmem>>, %arg4: memref<64x32xbf16, #tpu.memory_space<vmem>>, %arg5: memref<1x32xf32, #tpu.memory_space<vmem>>, %arg6: memref<1x32xf32, #tpu.memory_space<vmem>>, %arg7: memref<1x32xf32, #tpu.memory_space<vmem>>, %arg8: memref<16x32xf32, #tpu.memory_space<vmem>>) attributes {dimension_semantics = [#tpu.dimension_semantics<parallel>], iteration_bounds = array<i64: 1>, scalar_prefetch = 0 : i64, scratch_operands = 0 : i64, tpu.core_type = #tpu.core_type<tc>, window_params = [{transform_indices = @transform_0, window_bounds = array<i64: 16, 32>}, {pipeline_mode = #tpu.pipeline_mode<synchronous>, transform_indices = @transform_1, window_bounds = array<i64: 32, 64>}, {pipeline_mode = #tpu.pipeline_mode<synchronous>, transform_indices = @transform_2, window_bounds = array<i64: 1, 64>}, {pipeline_mode = #tpu.pipeline_mode<synchronous>, transform_indices = @transform_3, window_bounds = array<i64: 64, 32>}, {pipeline_mode = #tpu.pipeline_mode<synchronous>, transform_indices = @transform_4, window_bounds = array<i64: 1, 32>}, {pipeline_mode = #tpu.pipeline_mode<synchronous>, transform_indices = @transform_5, window_bounds = array<i64: 1, 32>}, {pipeline_mode = #tpu.pipeline_mode<synchronous>, transform_indices = @transform_6, window_bounds = array<i64: 1, 32>}, {transform_indices = @transform_7, window_bounds = array<i64: 16, 32>}]} {
    %c0 = arith.constant 0 : index
    %c0_0 = arith.constant 0 : index
    %0 = vector.load %arg1[%c0, %c0_0] : memref<16x32xf32, #tpu.memory_space<vmem>>, vector<16x32xf32>
    %1 = arith.truncf %0 : vector<16x32xf32> to vector<16x32xbf16>
    %c0_1 = arith.constant 0 : index
    %c0_2 = arith.constant 0 : index
    %2 = vector.load %arg2[%c0_1, %c0_2] : memref<32x64xbf16, #tpu.memory_space<vmem>>, vector<32x64xbf16>
    %cst = arith.constant dense<0.000000e+00> : vector<16x64xf32>
    %3 = tpu.matmul %1, %2, %cst {dimension_numbers = #tpu.dot_dimension_numbers<[1], [0], [0], [1], [0, 0, 1, 1], [], []>} : vector<16x32xbf16>, vector<32x64xbf16>, vector<16x64xf32> -> vector<16x64xf32>
    %c0_3 = arith.constant 0 : index
    %c0_4 = arith.constant 0 : index
    %4 = vector.load %arg3[%c0_3, %c0_4] : memref<1x64xf32, #tpu.memory_space<vmem>>, vector<1x64xf32>
    %5 = vector.broadcast %4 : vector<1x64xf32> to vector<16x64xf32>
    %6 = arith.addf %3, %5 : vector<16x64xf32>
    %cst_5 = arith.constant 0.000000e+00 : f32
    %7 = vector.broadcast %cst_5 : f32 to vector<16x64xf32>
    %8 = arith.maximumf %6, %7 : vector<16x64xf32>
    %9 = arith.truncf %8 : vector<16x64xf32> to vector<16x64xbf16>
    %c0_6 = arith.constant 0 : index
    %c0_7 = arith.constant 0 : index
    %10 = vector.load %arg4[%c0_6, %c0_7] : memref<64x32xbf16, #tpu.memory_space<vmem>>, vector<64x32xbf16>
    %cst_8 = arith.constant dense<0.000000e+00> : vector<16x32xf32>
    %11 = tpu.matmul %9, %10, %cst_8 {dimension_numbers = #tpu.dot_dimension_numbers<[1], [0], [0], [1], [0, 0, 1, 1], [], []>} : vector<16x64xbf16>, vector<64x32xbf16>, vector<16x32xf32> -> vector<16x32xf32>
    %c0_9 = arith.constant 0 : index
    %c0_10 = arith.constant 0 : index
    %12 = vector.load %arg5[%c0_9, %c0_10] : memref<1x32xf32, #tpu.memory_space<vmem>>, vector<1x32xf32>
    %13 = vector.broadcast %12 : vector<1x32xf32> to vector<16x32xf32>
    %14 = arith.addf %11, %13 : vector<16x32xf32>
    %15 = arith.addf %0, %14 : vector<16x32xf32>
    %cst_11 = arith.constant dense<0.000000e+00> : vector<16xf32>
    %16 = vector.multi_reduction <add>, %15, %cst_11 [1] : vector<16x32xf32> to vector<16xf32>
    %17 = vector.shape_cast %16 : vector<16xf32> to vector<16x1xf32>
    %cst_12 = arith.constant 3.200000e+01 : f32
    %18 = vector.broadcast %cst_12 : f32 to vector<16x1xf32>
    %19 = arith.divf %17, %18 : vector<16x1xf32>
    %20 = vector.broadcast %19 : vector<16x1xf32> to vector<16x32xf32>
    %21 = arith.subf %15, %20 : vector<16x32xf32>
    %22 = arith.mulf %21, %21 : vector<16x32xf32>
    %cst_13 = arith.constant dense<0.000000e+00> : vector<16xf32>
    %23 = vector.multi_reduction <add>, %22, %cst_13 [1] : vector<16x32xf32> to vector<16xf32>
    %24 = vector.shape_cast %23 : vector<16xf32> to vector<16x1xf32>
    %cst_14 = arith.constant 3.200000e+01 : f32
    %25 = vector.broadcast %cst_14 : f32 to vector<16x1xf32>
    %26 = arith.divf %24, %25 : vector<16x1xf32>
    %cst_15 = arith.constant 9.99999974E-6 : f32
    %27 = vector.broadcast %cst_15 : f32 to vector<16x1xf32>
    %28 = arith.addf %26, %27 : vector<16x1xf32>
    %29 = math.rsqrt %28 : vector<16x1xf32>
    %30 = vector.broadcast %29 : vector<16x1xf32> to vector<16x32xf32>
    %31 = arith.mulf %21, %30 : vector<16x32xf32>
    %c0_16 = arith.constant 0 : index
    %c0_17 = arith.constant 0 : index
    %32 = vector.load %arg6[%c0_16, %c0_17] : memref<1x32xf32, #tpu.memory_space<vmem>>, vector<1x32xf32>
    %33 = vector.broadcast %32 : vector<1x32xf32> to vector<16x32xf32>
    %34 = arith.mulf %31, %33 : vector<16x32xf32>
    %c0_18 = arith.constant 0 : index
    %c0_19 = arith.constant 0 : index
    %35 = vector.load %arg7[%c0_18, %c0_19] : memref<1x32xf32, #tpu.memory_space<vmem>>, vector<1x32xf32>
    %36 = vector.broadcast %35 : vector<1x32xf32> to vector<16x32xf32>
    %37 = arith.addf %34, %36 : vector<16x32xf32>
    %c0_20 = arith.constant 0 : index
    %c0_21 = arith.constant 0 : index
    %38 = vector.load %arg8[%c0_20, %c0_21] : memref<16x32xf32, #tpu.memory_space<vmem>>, vector<16x32xf32>
    tpu.vector_store %arg8[%c0_20, %c0_21], %37 {strides = array<i32>} : memref<16x32xf32, #tpu.memory_space<vmem>>, vector<16x32xf32>,
    return
  }
  func.func @transform_0(%arg0: i32) -> (i32, i32) {
    %c0_i32 = arith.constant 0 : i32
    %c0_i32_0 = arith.constant 0 : i32
    return %arg0, %c0_i32 : i32, i32
  }
  func.func @transform_1(%arg0: i32) -> (i32, i32) {
    %c0_i32 = arith.constant 0 : i32
    %c0_i32_0 = arith.constant 0 : i32
    %c0_i32_1 = arith.constant 0 : i32
    return %c0_i32, %c0_i32_0 : i32, i32
  }
  func.func @transform_2(%arg0: i32) -> (i32, i32) {
    %c0_i32 = arith.constant 0 : i32
    %c0_i32_0 = arith.constant 0 : i32
    %c0_i32_1 = arith.constant 0 : i32
    return %c0_i32, %c0_i32_0 : i32, i32
  }
  func.func @transform_3(%arg0: i32) -> (i32, i32) {
    %c0_i32 = arith.constant 0 : i32
    %c0_i32_0 = arith.constant 0 : i32
    %c0_i32_1 = arith.constant 0 : i32
    return %c0_i32, %c0_i32_0 : i32, i32
  }
  func.func @transform_4(%arg0: i32) -> (i32, i32) {
    %c0_i32 = arith.constant 0 : i32
    %c0_i32_0 = arith.constant 0 : i32
    %c0_i32_1 = arith.constant 0 : i32
    return %c0_i32, %c0_i32_0 : i32, i32
  }
  func.func @transform_5(%arg0: i32) -> (i32, i32) {
    %c0_i32 = arith.constant 0 : i32
    %c0_i32_0 = arith.constant 0 : i32
    %c0_i32_1 = arith.constant 0 : i32
    return %c0_i32, %c0_i32_0 : i32, i32
  }
  func.func @transform_6(%arg0: i32) -> (i32, i32) {
    %c0_i32 = arith.constant 0 : i32
    %c0_i32_0 = arith.constant 0 : i32
    %c0_i32_1 = arith.constant 0 : i32
    return %c0_i32, %c0_i32_0 : i32, i32
  }
  func.func @transform_7(%arg0: i32) -> (i32, i32) {
    %c0_i32 = arith.constant 0 : i32
    %c0_i32_0 = arith.constant 0 : i32
    return %arg0, %c0_i32 : i32, i32
  }
}

module attributes {stable_mosaic.version = 11 : i64} {
  func.func @_attn_ln_kernel(%arg0: i32, %arg1: i32, %arg2: memref<1x16x32xf32, #tpu.memory_space<vmem>>, %arg3: memref<1x16x32xf32, #tpu.memory_space<vmem>>, %arg4: memref<1x8x32xf32, #tpu.memory_space<vmem>>, %arg5: memref<1x8x32xf32, #tpu.memory_space<vmem>>, %arg6: memref<32x16xbf16, #tpu.memory_space<vmem>>, %arg7: memref<1x16xf32, #tpu.memory_space<vmem>>, %arg8: memref<32x16xbf16, #tpu.memory_space<vmem>>, %arg9: memref<1x16xf32, #tpu.memory_space<vmem>>, %arg10: memref<32x16xbf16, #tpu.memory_space<vmem>>, %arg11: memref<1x16xf32, #tpu.memory_space<vmem>>, %arg12: memref<16x32xbf16, #tpu.memory_space<vmem>>, %arg13: memref<1x32xf32, #tpu.memory_space<vmem>>, %arg14: memref<1x32xf32, #tpu.memory_space<vmem>>, %arg15: memref<1x32xf32, #tpu.memory_space<vmem>>, %arg16: memref<1x16x32xf32, #tpu.memory_space<vmem>>) attributes {dimension_semantics = [#tpu.dimension_semantics<parallel>, #tpu.dimension_semantics<parallel>], iteration_bounds = array<i64: 2, 1>, scalar_prefetch = 0 : i64, scratch_operands = 0 : i64, tpu.core_type = #tpu.core_type<tc>, window_params = [{transform_indices = @transform_0, window_bounds = array<i64: 1, 16, 32>}, {transform_indices = @transform_1, window_bounds = array<i64: 1, 16, 32>}, {transform_indices = @transform_2, window_bounds = array<i64: 1, 8, 32>}, {transform_indices = @transform_3, window_bounds = array<i64: 1, 8, 32>}, {pipeline_mode = #tpu.pipeline_mode<synchronous>, transform_indices = @transform_4, window_bounds = array<i64: 32, 16>}, {pipeline_mode = #tpu.pipeline_mode<synchronous>, transform_indices = @transform_5, window_bounds = array<i64: 1, 16>}, {pipeline_mode = #tpu.pipeline_mode<synchronous>, transform_indices = @transform_6, window_bounds = array<i64: 32, 16>}, {pipeline_mode = #tpu.pipeline_mode<synchronous>, transform_indices = @transform_7, window_bounds = array<i64: 1, 16>}, {pipeline_mode = #tpu.pipeline_mode<synchronous>, transform_indices = @transform_8, window_bounds = array<i64: 32, 16>}, {pipeline_mode = #tpu.pipeline_mode<synchronous>, transform_indices = @transform_9, window_bounds = array<i64: 1, 16>}, {pipeline_mode = #tpu.pipeline_mode<synchronous>, transform_indices = @transform_10, window_bounds = array<i64: 16, 32>}, {pipeline_mode = #tpu.pipeline_mode<synchronous>, transform_indices = @transform_11, window_bounds = array<i64: 1, 32>}, {pipeline_mode = #tpu.pipeline_mode<synchronous>, transform_indices = @transform_12, window_bounds = array<i64: 1, 32>}, {pipeline_mode = #tpu.pipeline_mode<synchronous>, transform_indices = @transform_13, window_bounds = array<i64: 1, 32>}, {transform_indices = @transform_14, window_bounds = array<i64: 1, 16, 32>}]} {
    %c0 = arith.constant 0 : index
    %c0_0 = arith.constant 0 : index
    %c0_1 = arith.constant 0 : index
    %0 = vector.load %arg2[%c0, %c0_0, %c0_1] : memref<1x16x32xf32, #tpu.memory_space<vmem>>, vector<1x16x32xf32>
    %1 = vector.shape_cast %0 : vector<1x16x32xf32> to vector<16x32xf32>
    %c0_2 = arith.constant 0 : index
    %c0_3 = arith.constant 0 : index
    %c0_4 = arith.constant 0 : index
    %2 = vector.load %arg3[%c0_2, %c0_3, %c0_4] : memref<1x16x32xf32, #tpu.memory_space<vmem>>, vector<1x16x32xf32>
    %3 = vector.shape_cast %2 : vector<1x16x32xf32> to vector<16x32xf32>
    %4 = arith.addf %1, %3 : vector<16x32xf32>
    %c0_5 = arith.constant 0 : index
    %c0_6 = arith.constant 0 : index
    %c0_7 = arith.constant 0 : index
    %5 = vector.load %arg4[%c0_5, %c0_6, %c0_7] : memref<1x8x32xf32, #tpu.memory_space<vmem>>, vector<1x8x32xf32>
    %6 = vector.shape_cast %5 : vector<1x8x32xf32> to vector<8x32xf32>
    %c0_8 = arith.constant 0 : index
    %c0_9 = arith.constant 0 : index
    %c0_10 = arith.constant 0 : index
    %7 = vector.load %arg5[%c0_8, %c0_9, %c0_10] : memref<1x8x32xf32, #tpu.memory_space<vmem>>, vector<1x8x32xf32>
    %8 = vector.shape_cast %7 : vector<1x8x32xf32> to vector<8x32xf32>
    %9 = arith.addf %6, %8 : vector<8x32xf32>
    %10 = arith.truncf %4 : vector<16x32xf32> to vector<16x32xbf16>
    %c0_11 = arith.constant 0 : index
    %c0_12 = arith.constant 0 : index
    %11 = vector.load %arg6[%c0_11, %c0_12] : memref<32x16xbf16, #tpu.memory_space<vmem>>, vector<32x16xbf16>
    %cst = arith.constant dense<0.000000e+00> : vector<16x16xf32>
    %12 = tpu.matmul %10, %11, %cst {dimension_numbers = #tpu.dot_dimension_numbers<[1], [0], [0], [1], [0, 0, 1, 1], [], []>} : vector<16x32xbf16>, vector<32x16xbf16>, vector<16x16xf32> -> vector<16x16xf32>
    %c0_13 = arith.constant 0 : index
    %c0_14 = arith.constant 0 : index
    %13 = vector.load %arg7[%c0_13, %c0_14] : memref<1x16xf32, #tpu.memory_space<vmem>>, vector<1x16xf32>
    %14 = vector.broadcast %13 : vector<1x16xf32> to vector<16x16xf32>
    %15 = arith.addf %12, %14 : vector<16x16xf32>
    %16 = arith.truncf %9 : vector<8x32xf32> to vector<8x32xbf16>
    %c0_15 = arith.constant 0 : index
    %c0_16 = arith.constant 0 : index
    %17 = vector.load %arg8[%c0_15, %c0_16] : memref<32x16xbf16, #tpu.memory_space<vmem>>, vector<32x16xbf16>
    %cst_17 = arith.constant dense<0.000000e+00> : vector<8x16xf32>
    %18 = tpu.matmul %16, %17, %cst_17 {dimension_numbers = #tpu.dot_dimension_numbers<[1], [0], [0], [1], [0, 0, 1, 1], [], []>} : vector<8x32xbf16>, vector<32x16xbf16>, vector<8x16xf32> -> vector<8x16xf32>
    %c0_18 = arith.constant 0 : index
    %c0_19 = arith.constant 0 : index
    %19 = vector.load %arg9[%c0_18, %c0_19] : memref<1x16xf32, #tpu.memory_space<vmem>>, vector<1x16xf32>
    %20 = vector.broadcast %19 : vector<1x16xf32> to vector<8x16xf32>
    %21 = arith.addf %18, %20 : vector<8x16xf32>
    %22 = arith.truncf %6 : vector<8x32xf32> to vector<8x32xbf16>
    %c0_20 = arith.constant 0 : index
    %c0_21 = arith.constant 0 : index
    %23 = vector.load %arg10[%c0_20, %c0_21] : memref<32x16xbf16, #tpu.memory_space<vmem>>, vector<32x16xbf16>
    %cst_22 = arith.constant dense<0.000000e+00> : vector<8x16xf32>
    %24 = tpu.matmul %22, %23, %cst_22 {dimension_numbers = #tpu.dot_dimension_numbers<[1], [0], [0], [1], [0, 0, 1, 1], [], []>} : vector<8x32xbf16>, vector<32x16xbf16>, vector<8x16xf32> -> vector<8x16xf32>
    %c0_23 = arith.constant 0 : index
    %c0_24 = arith.constant 0 : index
    %25 = vector.load %arg11[%c0_23, %c0_24] : memref<1x16xf32, #tpu.memory_space<vmem>>, vector<1x16xf32>
    %26 = vector.broadcast %25 : vector<1x16xf32> to vector<8x16xf32>
    %27 = arith.addf %24, %26 : vector<8x16xf32>
    %c0_25 = arith.constant 0 : index
    %c0_26 = arith.constant 0 : index
    %28 = vector.load %arg12[%c0_25, %c0_26] : memref<16x32xbf16, #tpu.memory_space<vmem>>, vector<16x32xbf16>
    %cst_27 = arith.constant 0.000000e+00 : f32
    %29 = vector.broadcast %cst_27 : f32 to vector<16x32xf32>
    %30 = vector.extract_strided_slice %15 {offsets = [0, 0], sizes = [16, 4], strides = [1, 1]} : vector<16x16xf32> to vector<16x4xf32>
    %31 = arith.truncf %30 : vector<16x4xf32> to vector<16x4xbf16>
    %32 = vector.extract_strided_slice %21 {offsets = [0, 0], sizes = [8, 4], strides = [1, 1]} : vector<8x16xf32> to vector<8x4xf32>
    %33 = arith.truncf %32 : vector<8x4xf32> to vector<8x4xbf16>
    %34 = vector.extract_strided_slice %27 {offsets = [0, 0], sizes = [8, 4], strides = [1, 1]} : vector<8x16xf32> to vector<8x4xf32>
    %35 = arith.truncf %34 : vector<8x4xf32> to vector<8x4xbf16>
    %cst_28 = arith.constant dense<0.000000e+00> : vector<16x8xf32>
    %36 = tpu.matmul %31, %33, %cst_28 {dimension_numbers = #tpu.dot_dimension_numbers<[1], [1], [0], [0], [0, 0, 1, 0], [], []>} : vector<16x4xbf16>, vector<8x4xbf16>, vector<16x8xf32> -> vector<16x8xf32>
    %cst_29 = arith.constant dense<0xFF800000> : vector<16xf32>
    %37 = vector.multi_reduction <maximumf>, %36, %cst_29 [1] : vector<16x8xf32> to vector<16xf32>
    %38 = vector.shape_cast %37 : vector<16xf32> to vector<16x1xf32>
    %39 = vector.broadcast %38 : vector<16x1xf32> to vector<16x8xf32>
    %40 = arith.subf %36, %39 : vector<16x8xf32>
    %41 = math.exp %40 : vector<16x8xf32>
    %cst_30 = arith.constant dense<0.000000e+00> : vector<16xf32>
    %42 = vector.multi_reduction <add>, %41, %cst_30 [1] : vector<16x8xf32> to vector<16xf32>
    %43 = vector.shape_cast %42 : vector<16xf32> to vector<16x1xf32>
    %44 = tpu.reciprocal %43 {approx = true} : vector<16x1xf32> -> vector<16x1xf32>
    %45 = arith.truncf %41 : vector<16x8xf32> to vector<16x8xbf16>
    %cst_31 = arith.constant dense<0.000000e+00> : vector<16x4xf32>
    %46 = tpu.matmul %45, %35, %cst_31 {dimension_numbers = #tpu.dot_dimension_numbers<[1], [0], [0], [1], [0, 0, 1, 1], [], []>} : vector<16x8xbf16>, vector<8x4xbf16>, vector<16x4xf32> -> vector<16x4xf32>
    %47 = vector.broadcast %44 : vector<16x1xf32> to vector<16x4xf32>
    %48 = arith.mulf %46, %47 : vector<16x4xf32>
    %49 = arith.truncf %48 : vector<16x4xf32> to vector<16x4xbf16>
    %50 = vector.extract_strided_slice %28 {offsets = [0, 0], sizes = [4, 32], strides = [1, 1]} : vector<16x32xbf16> to vector<4x32xbf16>
    %cst_32 = arith.constant dense<0.000000e+00> : vector<16x32xf32>
    %51 = tpu.matmul %49, %50, %cst_32 {dimension_numbers = #tpu.dot_dimension_numbers<[1], [0], [0], [1], [0, 0, 1, 1], [], []>} : vector<16x4xbf16>, vector<4x32xbf16>, vector<16x32xf32> -> vector<16x32xf32>
    %52 = arith.addf %29, %51 : vector<16x32xf32>
    %53 = vector.extract_strided_slice %15 {offsets = [0, 4], sizes = [16, 4], strides = [1, 1]} : vector<16x16xf32> to vector<16x4xf32>
    %54 = arith.truncf %53 : vector<16x4xf32> to vector<16x4xbf16>
    %55 = vector.extract_strided_slice %21 {offsets = [0, 4], sizes = [8, 4], strides = [1, 1]} : vector<8x16xf32> to vector<8x4xf32>
    %56 = arith.truncf %55 : vector<8x4xf32> to vector<8x4xbf16>
    %57 = vector.extract_strided_slice %27 {offsets = [0, 4], sizes = [8, 4], strides = [1, 1]} : vector<8x16xf32> to vector<8x4xf32>
    %58 = arith.truncf %57 : vector<8x4xf32> to vector<8x4xbf16>
    %cst_33 = arith.constant dense<0.000000e+00> : vector<16x8xf32>
    %59 = tpu.matmul %54, %56, %cst_33 {dimension_numbers = #tpu.dot_dimension_numbers<[1], [1], [0], [0], [0, 0, 1, 0], [], []>} : vector<16x4xbf16>, vector<8x4xbf16>, vector<16x8xf32> -> vector<16x8xf32>
    %cst_34 = arith.constant dense<0xFF800000> : vector<16xf32>
    %60 = vector.multi_reduction <maximumf>, %59, %cst_34 [1] : vector<16x8xf32> to vector<16xf32>
    %61 = vector.shape_cast %60 : vector<16xf32> to vector<16x1xf32>
    %62 = vector.broadcast %61 : vector<16x1xf32> to vector<16x8xf32>
    %63 = arith.subf %59, %62 : vector<16x8xf32>
    %64 = math.exp %63 : vector<16x8xf32>
    %cst_35 = arith.constant dense<0.000000e+00> : vector<16xf32>
    %65 = vector.multi_reduction <add>, %64, %cst_35 [1] : vector<16x8xf32> to vector<16xf32>
    %66 = vector.shape_cast %65 : vector<16xf32> to vector<16x1xf32>
    %67 = tpu.reciprocal %66 {approx = true} : vector<16x1xf32> -> vector<16x1xf32>
    %68 = arith.truncf %64 : vector<16x8xf32> to vector<16x8xbf16>
    %cst_36 = arith.constant dense<0.000000e+00> : vector<16x4xf32>
    %69 = tpu.matmul %68, %58, %cst_36 {dimension_numbers = #tpu.dot_dimension_numbers<[1], [0], [0], [1], [0, 0, 1, 1], [], []>} : vector<16x8xbf16>, vector<8x4xbf16>, vector<16x4xf32> -> vector<16x4xf32>
    %70 = vector.broadcast %67 : vector<16x1xf32> to vector<16x4xf32>
    %71 = arith.mulf %69, %70 : vector<16x4xf32>
    %72 = arith.truncf %71 : vector<16x4xf32> to vector<16x4xbf16>
    %73 = vector.extract_strided_slice %28 {offsets = [4, 0], sizes = [4, 32], strides = [1, 1]} : vector<16x32xbf16> to vector<4x32xbf16>
    %cst_37 = arith.constant dense<0.000000e+00> : vector<16x32xf32>
    %74 = tpu.matmul %72, %73, %cst_37 {dimension_numbers = #tpu.dot_dimension_numbers<[1], [0], [0], [1], [0, 0, 1, 1], [], []>} : vector<16x4xbf16>, vector<4x32xbf16>, vector<16x32xf32> -> vector<16x32xf32>
    %75 = arith.addf %52, %74 : vector<16x32xf32>
    %76 = vector.extract_strided_slice %15 {offsets = [0, 8], sizes = [16, 4], strides = [1, 1]} : vector<16x16xf32> to vector<16x4xf32>
    %77 = arith.truncf %76 : vector<16x4xf32> to vector<16x4xbf16>
    %78 = vector.extract_strided_slice %21 {offsets = [0, 8], sizes = [8, 4], strides = [1, 1]} : vector<8x16xf32> to vector<8x4xf32>
    %79 = arith.truncf %78 : vector<8x4xf32> to vector<8x4xbf16>
    %80 = vector.extract_strided_slice %27 {offsets = [0, 8], sizes = [8, 4], strides = [1, 1]} : vector<8x16xf32> to vector<8x4xf32>
    %81 = arith.truncf %80 : vector<8x4xf32> to vector<8x4xbf16>
    %cst_38 = arith.constant dense<0.000000e+00> : vector<16x8xf32>
    %82 = tpu.matmul %77, %79, %cst_38 {dimension_numbers = #tpu.dot_dimension_numbers<[1], [1], [0], [0], [0, 0, 1, 0], [], []>} : vector<16x4xbf16>, vector<8x4xbf16>, vector<16x8xf32> -> vector<16x8xf32>
    %cst_39 = arith.constant dense<0xFF800000> : vector<16xf32>
    %83 = vector.multi_reduction <maximumf>, %82, %cst_39 [1] : vector<16x8xf32> to vector<16xf32>
    %84 = vector.shape_cast %83 : vector<16xf32> to vector<16x1xf32>
    %85 = vector.broadcast %84 : vector<16x1xf32> to vector<16x8xf32>
    %86 = arith.subf %82, %85 : vector<16x8xf32>
    %87 = math.exp %86 : vector<16x8xf32>
    %cst_40 = arith.constant dense<0.000000e+00> : vector<16xf32>
    %88 = vector.multi_reduction <add>, %87, %cst_40 [1] : vector<16x8xf32> to vector<16xf32>
    %89 = vector.shape_cast %88 : vector<16xf32> to vector<16x1xf32>
    %90 = tpu.reciprocal %89 {approx = true} : vector<16x1xf32> -> vector<16x1xf32>
    %91 = arith.truncf %87 : vector<16x8xf32> to vector<16x8xbf16>
    %cst_41 = arith.constant dense<0.000000e+00> : vector<16x4xf32>
    %92 = tpu.matmul %91, %81, %cst_41 {dimension_numbers = #tpu.dot_dimension_numbers<[1], [0], [0], [1], [0, 0, 1, 1], [], []>} : vector<16x8xbf16>, vector<8x4xbf16>, vector<16x4xf32> -> vector<16x4xf32>
    %93 = vector.broadcast %90 : vector<16x1xf32> to vector<16x4xf32>
    %94 = arith.mulf %92, %93 : vector<16x4xf32>
    %95 = arith.truncf %94 : vector<16x4xf32> to vector<16x4xbf16>
    %96 = vector.extract_strided_slice %28 {offsets = [8, 0], sizes = [4, 32], strides = [1, 1]} : vector<16x32xbf16> to vector<4x32xbf16>
    %cst_42 = arith.constant dense<0.000000e+00> : vector<16x32xf32>
    %97 = tpu.matmul %95, %96, %cst_42 {dimension_numbers = #tpu.dot_dimension_numbers<[1], [0], [0], [1], [0, 0, 1, 1], [], []>} : vector<16x4xbf16>, vector<4x32xbf16>, vector<16x32xf32> -> vector<16x32xf32>
    %98 = arith.addf %75, %97 : vector<16x32xf32>
    %99 = vector.extract_strided_slice %15 {offsets = [0, 12], sizes = [16, 4], strides = [1, 1]} : vector<16x16xf32> to vector<16x4xf32>
    %100 = arith.truncf %99 : vector<16x4xf32> to vector<16x4xbf16>
    %101 = vector.extract_strided_slice %21 {offsets = [0, 12], sizes = [8, 4], strides = [1, 1]} : vector<8x16xf32> to vector<8x4xf32>
    %102 = arith.truncf %101 : vector<8x4xf32> to vector<8x4xbf16>
    %103 = vector.extract_strided_slice %27 {offsets = [0, 12], sizes = [8, 4], strides = [1, 1]} : vector<8x16xf32> to vector<8x4xf32>
    %104 = arith.truncf %103 : vector<8x4xf32> to vector<8x4xbf16>
    %cst_43 = arith.constant dense<0.000000e+00> : vector<16x8xf32>
    %105 = tpu.matmul %100, %102, %cst_43 {dimension_numbers = #tpu.dot_dimension_numbers<[1], [1], [0], [0], [0, 0, 1, 0], [], []>} : vector<16x4xbf16>, vector<8x4xbf16>, vector<16x8xf32> -> vector<16x8xf32>
    %cst_44 = arith.constant dense<0xFF800000> : vector<16xf32>
    %106 = vector.multi_reduction <maximumf>, %105, %cst_44 [1] : vector<16x8xf32> to vector<16xf32>
    %107 = vector.shape_cast %106 : vector<16xf32> to vector<16x1xf32>
    %108 = vector.broadcast %107 : vector<16x1xf32> to vector<16x8xf32>
    %109 = arith.subf %105, %108 : vector<16x8xf32>
    %110 = math.exp %109 : vector<16x8xf32>
    %cst_45 = arith.constant dense<0.000000e+00> : vector<16xf32>
    %111 = vector.multi_reduction <add>, %110, %cst_45 [1] : vector<16x8xf32> to vector<16xf32>
    %112 = vector.shape_cast %111 : vector<16xf32> to vector<16x1xf32>
    %113 = tpu.reciprocal %112 {approx = true} : vector<16x1xf32> -> vector<16x1xf32>
    %114 = arith.truncf %110 : vector<16x8xf32> to vector<16x8xbf16>
    %cst_46 = arith.constant dense<0.000000e+00> : vector<16x4xf32>
    %115 = tpu.matmul %114, %104, %cst_46 {dimension_numbers = #tpu.dot_dimension_numbers<[1], [0], [0], [1], [0, 0, 1, 1], [], []>} : vector<16x8xbf16>, vector<8x4xbf16>, vector<16x4xf32> -> vector<16x4xf32>
    %116 = vector.broadcast %113 : vector<16x1xf32> to vector<16x4xf32>
    %117 = arith.mulf %115, %116 : vector<16x4xf32>
    %118 = arith.truncf %117 : vector<16x4xf32> to vector<16x4xbf16>
    %119 = vector.extract_strided_slice %28 {offsets = [12, 0], sizes = [4, 32], strides = [1, 1]} : vector<16x32xbf16> to vector<4x32xbf16>
    %cst_47 = arith.constant dense<0.000000e+00> : vector<16x32xf32>
    %120 = tpu.matmul %118, %119, %cst_47 {dimension_numbers = #tpu.dot_dimension_numbers<[1], [0], [0], [1], [0, 0, 1, 1], [], []>} : vector<16x4xbf16>, vector<4x32xbf16>, vector<16x32xf32> -> vector<16x32xf32>
    %121 = arith.addf %98, %120 : vector<16x32xf32>
    %c0_48 = arith.constant 0 : index
    %c0_49 = arith.constant 0 : index
    %122 = vector.load %arg13[%c0_48, %c0_49] : memref<1x32xf32, #tpu.memory_space<vmem>>, vector<1x32xf32>
    %123 = vector.broadcast %122 : vector<1x32xf32> to vector<16x32xf32>
    %124 = arith.addf %121, %123 : vector<16x32xf32>
    %125 = arith.addf %1, %124 : vector<16x32xf32>
    %cst_50 = arith.constant dense<0.000000e+00> : vector<16xf32>
    %126 = vector.multi_reduction <add>, %125, %cst_50 [1] : vector<16x32xf32> to vector<16xf32>
    %127 = vector.shape_cast %126 : vector<16xf32> to vector<16x1xf32>
    %cst_51 = arith.constant 3.200000e+01 : f32
    %128 = vector.broadcast %cst_51 : f32 to vector<16x1xf32>
    %129 = arith.divf %127, %128 : vector<16x1xf32>
    %130 = vector.broadcast %129 : vector<16x1xf32> to vector<16x32xf32>
    %131 = arith.subf %125, %130 : vector<16x32xf32>
    %132 = arith.mulf %131, %131 : vector<16x32xf32>
    %cst_52 = arith.constant dense<0.000000e+00> : vector<16xf32>
    %133 = vector.multi_reduction <add>, %132, %cst_52 [1] : vector<16x32xf32> to vector<16xf32>
    %134 = vector.shape_cast %133 : vector<16xf32> to vector<16x1xf32>
    %cst_53 = arith.constant 3.200000e+01 : f32
    %135 = vector.broadcast %cst_53 : f32 to vector<16x1xf32>
    %136 = arith.divf %134, %135 : vector<16x1xf32>
    %cst_54 = arith.constant 9.99999974E-6 : f32
    %137 = vector.broadcast %cst_54 : f32 to vector<16x1xf32>
    %138 = arith.addf %136, %137 : vector<16x1xf32>
    %139 = math.rsqrt %138 : vector<16x1xf32>
    %140 = vector.broadcast %139 : vector<16x1xf32> to vector<16x32xf32>
    %141 = arith.mulf %131, %140 : vector<16x32xf32>
    %c0_55 = arith.constant 0 : index
    %c0_56 = arith.constant 0 : index
    %142 = vector.load %arg14[%c0_55, %c0_56] : memref<1x32xf32, #tpu.memory_space<vmem>>, vector<1x32xf32>
    %143 = vector.broadcast %142 : vector<1x32xf32> to vector<16x32xf32>
    %144 = arith.mulf %141, %143 : vector<16x32xf32>
    %c0_57 = arith.constant 0 : index
    %c0_58 = arith.constant 0 : index
    %145 = vector.load %arg15[%c0_57, %c0_58] : memref<1x32xf32, #tpu.memory_space<vmem>>, vector<1x32xf32>
    %146 = vector.broadcast %145 : vector<1x32xf32> to vector<16x32xf32>
    %147 = arith.addf %144, %146 : vector<16x32xf32>
    %c0_59 = arith.constant 0 : index
    %c0_60 = arith.constant 0 : index
    %c0_61 = arith.constant 0 : index
    %148 = vector.load %arg16[%c0_59, %c0_60, %c0_61] : memref<1x16x32xf32, #tpu.memory_space<vmem>>, vector<1x16x32xf32>
    %149 = vector.shape_cast %148 : vector<1x16x32xf32> to vector<16x32xf32>
    %150 = vector.shape_cast %147 : vector<16x32xf32> to vector<1x16x32xf32>
    tpu.vector_store %arg16[%c0_59, %c0_60, %c0_61], %150 {strides = array<i32>} : memref<1x16x32xf32, #tpu.memory_space<vmem>>, vector<1x16x32xf32>,
    return
  }
  func.func @transform_0(%arg0: i32, %arg1: i32) -> (i32, i32, i32) {
    %c0_i32 = arith.constant 0 : i32
    %c0_i32_0 = arith.constant 0 : i32
    return %arg0, %arg1, %c0_i32 : i32, i32, i32
  }
  func.func @transform_1(%arg0: i32, %arg1: i32) -> (i32, i32, i32) {
    %c0_i32 = arith.constant 0 : i32
    %c0_i32_0 = arith.constant 0 : i32
    return %arg0, %arg1, %c0_i32 : i32, i32, i32
  }
  func.func @transform_2(%arg0: i32, %arg1: i32) -> (i32, i32, i32) {
    %c0_i32 = arith.constant 0 : i32
    %c0_i32_0 = arith.constant 0 : i32
    %c0_i32_1 = arith.constant 0 : i32
    return %arg0, %c0_i32, %c0_i32_0 : i32, i32, i32
  }
  func.func @transform_3(%arg0: i32, %arg1: i32) -> (i32, i32, i32) {
    %c0_i32 = arith.constant 0 : i32
    %c0_i32_0 = arith.constant 0 : i32
    %c0_i32_1 = arith.constant 0 : i32
    return %arg0, %c0_i32, %c0_i32_0 : i32, i32, i32
  }
  func.func @transform_4(%arg0: i32, %arg1: i32) -> (i32, i32) {
    %c0_i32 = arith.constant 0 : i32
    %c0_i32_0 = arith.constant 0 : i32
    %c0_i32_1 = arith.constant 0 : i32
    return %c0_i32, %c0_i32_0 : i32, i32
  }
  func.func @transform_5(%arg0: i32, %arg1: i32) -> (i32, i32) {
    %c0_i32 = arith.constant 0 : i32
    %c0_i32_0 = arith.constant 0 : i32
    %c0_i32_1 = arith.constant 0 : i32
    return %c0_i32, %c0_i32_0 : i32, i32
  }
  func.func @transform_6(%arg0: i32, %arg1: i32) -> (i32, i32) {
    %c0_i32 = arith.constant 0 : i32
    %c0_i32_0 = arith.constant 0 : i32
    %c0_i32_1 = arith.constant 0 : i32
    return %c0_i32, %c0_i32_0 : i32, i32
  }
  func.func @transform_7(%arg0: i32, %arg1: i32) -> (i32, i32) {
    %c0_i32 = arith.constant 0 : i32
    %c0_i32_0 = arith.constant 0 : i32
    %c0_i32_1 = arith.constant 0 : i32
    return %c0_i32, %c0_i32_0 : i32, i32
  }
  func.func @transform_8(%arg0: i32, %arg1: i32) -> (i32, i32) {
    %c0_i32 = arith.constant 0 : i32
    %c0_i32_0 = arith.constant 0 : i32
    %c0_i32_1 = arith.constant 0 : i32
    return %c0_i32, %c0_i32_0 : i32, i32
  }
  func.func @transform_9(%arg0: i32, %arg1: i32) -> (i32, i32) {
    %c0_i32 = arith.constant 0 : i32
    %c0_i32_0 = arith.constant 0 : i32
    %c0_i32_1 = arith.constant 0 : i32
    return %c0_i32, %c0_i32_0 : i32, i32
  }
  func.func @transform_10(%arg0: i32, %arg1: i32) -> (i32, i32) {
    %c0_i32 = arith.constant 0 : i32
    %c0_i32_0 = arith.constant 0 : i32
    %c0_i32_1 = arith.constant 0 : i32
    return %c0_i32, %c0_i32_0 : i32, i32
  }
  func.func @transform_11(%arg0: i32, %arg1: i32) -> (i32, i32) {
    %c0_i32 = arith.constant 0 : i32
    %c0_i32_0 = arith.constant 0 : i32
    %c0_i32_1 = arith.constant 0 : i32
    return %c0_i32, %c0_i32_0 : i32, i32
  }
  func.func @transform_12(%arg0: i32, %arg1: i32) -> (i32, i32) {
    %c0_i32 = arith.constant 0 : i32
    %c0_i32_0 = arith.constant 0 : i32
    %c0_i32_1 = arith.constant 0 : i32
    return %c0_i32, %c0_i32_0 : i32, i32
  }
  func.func @transform_13(%arg0: i32, %arg1: i32) -> (i32, i32) {
    %c0_i32 = arith.constant 0 : i32
    %c0_i32_0 = arith.constant 0 : i32
    %c0_i32_1 = arith.constant 0 : i32
    return %c0_i32, %c0_i32_0 : i32, i32
  }
  func.func @transform_14(%arg0: i32, %arg1: i32) -> (i32, i32, i32) {
    %c0_i32 = arith.constant 0 : i32
    %c0_i32_0 = arith.constant 0 : i32
    return %arg0, %arg1, %c0_i32 : i32, i32, i32
  }
}

</mosaic_0001>

<llo_original>
// kernel: two_way_attention_block.4
$region0: #{two_way_attention_block.4}
  #allocation0 [shape = 'u32[]', space=smem, size = 0x4, offset = 0x4, fixed_abs, tag = 'smem constant byte address 0x4 - core index']
  #allocation1 [shape = 'u32[144,128]{1,0:T(1,128)}', space=vmem, size = 0x12000, scoped, tag = 'internal scratch']
  %s0 = inlined_call_operand.vmem [shape: f32[2,8,32], index: 0, kind: input, shape index: {}]
  %s1 = inlined_call_operand.vmem [shape: f32[2,8,32], index: 1, kind: input, shape index: {}]
  %s2 = inlined_call_operand.vmem [shape: bf16[32,32], index: 2, kind: input, shape index: {}]
  %s3 = inlined_call_operand.vmem [shape: f32[1,32], index: 3, kind: input, shape index: {}]
  %s4 = inlined_call_operand.vmem [shape: bf16[32,32], index: 4, kind: input, shape index: {}]
  %s5 = inlined_call_operand.vmem [shape: f32[1,32], index: 5, kind: input, shape index: {}]
  %s6 = inlined_call_operand.vmem [shape: bf16[32,32], index: 6, kind: input, shape index: {}]
  %s7 = inlined_call_operand.vmem [shape: f32[1,32], index: 7, kind: input, shape index: {}]
  %s8 = inlined_call_operand.vmem [shape: bf16[32,32], index: 8, kind: input, shape index: {}]
  %s9 = inlined_call_operand.vmem [shape: f32[1,32], index: 9, kind: input, shape index: {}]
  %s10 = inlined_call_operand.vmem [shape: f32[1,32], index: 10, kind: input, shape index: {}]
  %s11 = inlined_call_operand.vmem [shape: f32[1,32], index: 11, kind: input, shape index: {}]
  %s12 = inlined_call_operand.vmem [shape: f32[2,8,32], index: 12, kind: output, shape index: {}]
  %s13 = sld [smem:[#allocation0]]
  $region81: #{two_way_attention_block.4} parent=0
    _
  %s15 = ssub.s32 1, %s13
  %s16 = scalar_select 0, %s15, %s13
  loop: start=0, step=1, limit=4
  $region2: #{two_way_attention_block.4} parent=0 // loop_pre_header
    _
  $region3: #{two_way_attention_block.4} parent=0 // loop_header
    %s18 = sphi 0, %s22
    %p19 = scmp.ge.s32.totalorder %s18, 4
    %s25 = sphi 0, %s37
    %s26 = sphi 0, %s33
    %s27 = sphi 0, %s25
    %s28 = sphi 0, %s26
    %s29 = sphi 0, %s27
    %s30 = sphi 0, %s28
    %s42 = sphi 0, %s44
    %s45 = sphi 0, %s42
    %s46 = sphi 0, %s45
    %s62 = sphi 0, %s46
    %s70 = sphi 0, %s72
    %s73 = sphi 0, %s70
    %s74 = sphi 0, %s73
    %s90 = sphi 0, %s74
    %s94 = sphi 0, %s94
    %s96 = sphi 0, %s94
    %s97 = sphi 0, %s96
    %s111 = sphi 0, %s97
    %s115 = sphi 0, %s115
    %s117 = sphi 0, %s115
    %s118 = sphi 0, %s117
    %s132 = sphi 0, %s118
    %s136 = sphi 0, %s136
    %s138 = sphi 0, %s136
    %s139 = sphi 0, %s138
    %s153 = sphi 0, %s139
    %s157 = sphi 0, %s157
    %s159 = sphi 0, %s157
    %s160 = sphi 0, %s159
    %s174 = sphi 0, %s160
    %s178 = sphi 0, %s178
    %s180 = sphi 0, %s178
    %s181 = sphi 0, %s180
    %s195 = sphi 0, %s181
    %s199 = sphi 0, %s199
    %s201 = sphi 0, %s199
    %s202 = sphi 0, %s201
    %s216 = sphi 0, %s202
    %s220 = sphi 0, %s220
    %s222 = sphi 0, %s220
    %s223 = sphi 0, %s222
    %s237 = sphi 0, %s223
    %s241 = sphi 0, %s241
    %s243 = sphi 0, %s241
    %s244 = sphi 0, %s243
    %s258 = sphi 0, %s244
    %s262 = sphi 0, %s262
    %s264 = sphi 0, %s262
    %s265 = sphi 0, %s264
    %s279 = sphi 0, %s265
    %s283 = sphi 0, %s283
    %s285 = sphi 0, %s283
    %s286 = sphi 0, %s285
    %s300 = sphi 0, %s286
    %s308 = sphi 0, %s310
    %s311 = sphi 0, %s308
    %s312 = sphi 0, %s311
    %s328 = sphi 0, %s312
  $region4: #{two_way_attention_block.4} parent=0 // loop_header_branch
    %21 = sbr.rel (%p19) target = $region8
  $region5: #{two_way_attention_block.4} parent=0 // loop_body
    %s23 = ssub.s32 %s18, 1
    %s24 = ssub.s32 %s18, 2
    %s31 = sadd.s32 1, %s26
    %p32 = scmp.ge.s32.totalorder %s31, 1
    %s33 = scalar_select %p32, 0, %s31
    %s34 = sadd.s32 1, %s25
    %s35 = scalar_select %p32, %s34, %s25
    %p36 = scmp.ge.s32.totalorder %s35, 2
    %s37 = scalar_select %p36, 0, %s35
    %s38 = ssub.s32 %s25, %s37
    %s39 = ssub.s32 %s26, %s33
    %s40 = sor.u32 %s38, %s39
    %p41 = scmp.eq.s32.totalorder %s40, 0
    %s43 = sadd.s32 %s42, 1
    %s44 = scalar_select %p41, %s42, %s43
    %p47 = pneg %p41
    %p48 = scmp.eq.s32.totalorder %s18, 1
    %p49 = por %p47, %p48
    %p50 = scmp.ne.s32.totalorder %s42, %s45
    %p51 = scmp.eq.s32.totalorder %s18, 0
    %p52 = por %p50, %p51
    %p53 = scmp.ne.s32.totalorder %s42, %s45
    %p54 = scmp.eq.s32.totalorder %s23, 1
    %p55 = por %p53, %p54
    %p56 = scmp.ne.s32.totalorder %s45, %s46
    %p57 = scmp.eq.s32.totalorder %s23, 0
    %p58 = por %p56, %p57
    %p59 = scmp.ne.s32.totalorder %s45, %s46
    %p60 = scmp.eq.s32.totalorder %s24, 1
    %p61 = por %p59, %p60
    %p63 = scmp.ne.s32.totalorder %s46, %s62
    %p64 = scmp.eq.s32.totalorder %s24, 0
    %p65 = por %p63, %p64
    %s66 = ssub.s32 %s25, %s37
    %s67 = ssub.s32 %s26, %s33
    %s68 = sor.u32 %s66, %s67
    %p69 = scmp.eq.s32.totalorder %s68, 0
    %s71 = sadd.s32 %s70, 1
    %s72 = scalar_select %p69, %s70, %s71
    %p75 = pneg %p69
    %p76 = scmp.eq.s32.totalorder %s18, 1
    %p77 = por %p75, %p76
    %p78 = scmp.ne.s32.totalorder %s70, %s73
    %p79 = scmp.eq.s32.totalorder %s18, 0
    %p80 = por %p78, %p79
    %p81 = scmp.ne.s32.totalorder %s70, %s73
    %p82 = scmp.eq.s32.totalorder %s23, 1
    %p83 = por %p81, %p82
    %p84 = scmp.ne.s32.totalorder %s73, %s74
    %p85 = scmp.eq.s32.totalorder %s23, 0
    %p86 = por %p84, %p85
    %p87 = scmp.ne.s32.totalorder %s73, %s74
    %p88 = scmp.eq.s32.totalorder %s24, 1
    %p89 = por %p87, %p88
    %p91 = scmp.ne.s32.totalorder %s74, %s90
    %p92 = scmp.eq.s32.totalorder %s24, 0
    %p93 = por %p91, %p92
    %s95 = sadd.s32 %s94, 1
    %p98 = scmp.eq.s32.totalorder %s18, 1
    %p99 = scmp.ne.s32.totalorder %s94, %s96
    %p100 = scmp.eq.s32.totalorder %s18, 0
    %p101 = por %p99, %p100
    %p102 = scmp.ne.s32.totalorder %s94, %s96
    %p103 = scmp.eq.s32.totalorder %s23, 1
    %p104 = por %p102, %p103
    %p105 = scmp.ne.s32.totalorder %s96, %s97
    %p106 = scmp.eq.s32.totalorder %s23, 0
    %p107 = por %p105, %p106
    %p108 = scmp.ne.s32.totalorder %s96, %s97
    %p109 = scmp.eq.s32.totalorder %s24, 1
    %p110 = por %p108, %p109
    %p112 = scmp.ne.s32.totalorder %s97, %s111
    %p113 = scmp.eq.s32.totalorder %s24, 0
    %p114 = por %p112, %p113
    %s116 = sadd.s32 %s115, 1
    %p119 = scmp.eq.s32.totalorder %s18, 1
    %p120 = scmp.ne.s32.totalorder %s115, %s117
    %p121 = scmp.eq.s32.totalorder %s18, 0
    %p122 = por %p120, %p121
    %p123 = scmp.ne.s32.totalorder %s115, %s117
    %p124 = scmp.eq.s32.totalorder %s23, 1
    %p125 = por %p123, %p124
    %p126 = scmp.ne.s32.totalorder %s117, %s118
    %p127 = scmp.eq.s32.totalorder %s23, 0
    %p128 = por %p126, %p127
    %p129 = scmp.ne.s32.totalorder %s117, %s118
    %p130 = scmp.eq.s32.totalorder %s24, 1
    %p131 = por %p129, %p130
    %p133 = scmp.ne.s32.totalorder %s118, %s132
    %p134 = scmp.eq.s32.totalorder %s24, 0
    %p135 = por %p133, %p134
    %s137 = sadd.s32 %s136, 1
    %p140 = scmp.eq.s32.totalorder %s18, 1
    %p141 = scmp.ne.s32.totalorder %s136, %s138
    %p142 = scmp.eq.s32.totalorder %s18, 0
    %p143 = por %p141, %p142
    %p144 = scmp.ne.s32.totalorder %s136, %s138
    %p145 = scmp.eq.s32.totalorder %s23, 1
    %p146 = por %p144, %p145
    %p147 = scmp.ne.s32.totalorder %s138, %s139
    %p148 = scmp.eq.s32.totalorder %s23, 0
    %p149 = por %p147, %p148
    %p150 = scmp.ne.s32.totalorder %s138, %s139
    %p151 = scmp.eq.s32.totalorder %s24, 1
    %p152 = por %p150, %p151
    %p154 = scmp.ne.s32.totalorder %s139, %s153
    %p155 = scmp.eq.s32.totalorder %s24, 0
    %p156 = por %p154, %p155
    %s158 = sadd.s32 %s157, 1
    %p161 = scmp.eq.s32.totalorder %s18, 1
    %p162 = scmp.ne.s32.totalorder %s157, %s159
    %p163 = scmp.eq.s32.totalorder %s18, 0
    %p164 = por %p162, %p163
    %p165 = scmp.ne.s32.totalorder %s157, %s159
    %p166 = scmp.eq.s32.totalorder %s23, 1
    %p167 = por %p165, %p166
    %p168 = scmp.ne.s32.totalorder %s159, %s160
    %p169 = scmp.eq.s32.totalorder %s23, 0
    %p170 = por %p168, %p169
    %p171 = scmp.ne.s32.totalorder %s159, %s160
    %p172 = scmp.eq.s32.totalorder %s24, 1
    %p173 = por %p171, %p172
    %p175 = scmp.ne.s32.totalorder %s160, %s174
    %p176 = scmp.eq.s32.totalorder %s24, 0
    %p177 = por %p175, %p176
    %s179 = sadd.s32 %s178, 1
    %p182 = scmp.eq.s32.totalorder %s18, 1
    %p183 = scmp.ne.s32.totalorder %s178, %s180
    %p184 = scmp.eq.s32.totalorder %s18, 0
    %p185 = por %p183, %p184
    %p186 = scmp.ne.s32.totalorder %s178, %s180
    %p187 = scmp.eq.s32.totalorder %s23, 1
    %p188 = por %p186, %p187
    %p189 = scmp.ne.s32.totalorder %s180, %s181
    %p190 = scmp.eq.s32.totalorder %s23, 0
    %p191 = por %p189, %p190
    %p192 = scmp.ne.s32.totalorder %s180, %s181
    %p193 = scmp.eq.s32.totalorder %s24, 1
    %p194 = por %p192, %p193
    %p196 = scmp.ne.s32.totalorder %s181, %s195
    %p197 = scmp.eq.s32.totalorder %s24, 0
    %p198 = por %p196, %p197
    %s200 = sadd.s32 %s199, 1
    %p203 = scmp.eq.s32.totalorder %s18, 1
    %p204 = scmp.ne.s32.totalorder %s199, %s201
    %p205 = scmp.eq.s32.totalorder %s18, 0
    %p206 = por %p204, %p205
    %p207 = scmp.ne.s32.totalorder %s199, %s201
    %p208 = scmp.eq.s32.totalorder %s23, 1
    %p209 = por %p207, %p208
    %p210 = scmp.ne.s32.totalorder %s201, %s202
    %p211 = scmp.eq.s32.totalorder %s23, 0
    %p212 = por %p210, %p211
    %p213 = scmp.ne.s32.totalorder %s201, %s202
    %p214 = scmp.eq.s32.totalorder %s24, 1
    %p215 = por %p213, %p214
    %p217 = scmp.ne.s32.totalorder %s202, %s216
    %p218 = scmp.eq.s32.totalorder %s24, 0
    %p219 = por %p217, %p218
    %s221 = sadd.s32 %s220, 1
    %p224 = scmp.eq.s32.totalorder %s18, 1
    %p225 = scmp.ne.s32.totalorder %s220, %s222
    %p226 = scmp.eq.s32.totalorder %s18, 0
    %p227 = por %p225, %p226
    %p228 = scmp.ne.s32.totalorder %s220, %s222
    %p229 = scmp.eq.s32.totalorder %s23, 1
    %p230 = por %p228, %p229
    %p231 = scmp.ne.s32.totalorder %s222, %s223
    %p232 = scmp.eq.s32.totalorder %s23, 0
    %p233 = por %p231, %p232
    %p234 = scmp.ne.s32.totalorder %s222, %s223
    %p235 = scmp.eq.s32.totalorder %s24, 1
    %p236 = por %p234, %p235
    %p238 = scmp.ne.s32.totalorder %s223, %s237
    %p239 = scmp.eq.s32.totalorder %s24, 0
    %p240 = por %p238, %p239
    %s242 = sadd.s32 %s241, 1
    %p245 = scmp.eq.s32.totalorder %s18, 1
    %p246 = scmp.ne.s32.totalorder %s241, %s243
    %p247 = scmp.eq.s32.totalorder %s18, 0
    %p248 = por %p246, %p247
    %p249 = scmp.ne.s32.totalorder %s241, %s243
    %p250 = scmp.eq.s32.totalorder %s23, 1
    %p251 = por %p249, %p250
    %p252 = scmp.ne.s32.totalorder %s243, %s244
    %p253 = scmp.eq.s32.totalorder %s23, 0
    %p254 = por %p252, %p253
    %p255 = scmp.ne.s32.totalorder %s243, %s244
    %p256 = scmp.eq.s32.totalorder %s24, 1
    %p257 = por %p255, %p256
    %p259 = scmp.ne.s32.totalorder %s244, %s258
    %p260 = scmp.eq.s32.totalorder %s24, 0
    %p261 = por %p259, %p260
    %s263 = sadd.s32 %s262, 1
    %p266 = scmp.eq.s32.totalorder %s18, 1
    %p267 = scmp.ne.s32.totalorder %s262, %s264
    %p268 = scmp.eq.s32.totalorder %s18, 0
    %p269 = por %p267, %p268
    %p270 = scmp.ne.s32.totalorder %s262, %s264
    %p271 = scmp.eq.s32.totalorder %s23, 1
    %p272 = por %p270, %p271
    %p273 = scmp.ne.s32.totalorder %s264, %s265
    %p274 = scmp.eq.s32.totalorder %s23, 0
    %p275 = por %p273, %p274
    %p276 = scmp.ne.s32.totalorder %s264, %s265
    %p277 = scmp.eq.s32.totalorder %s24, 1
    %p278 = por %p276, %p277
    %p280 = scmp.ne.s32.totalorder %s265, %s279
    %p281 = scmp.eq.s32.totalorder %s24, 0
    %p282 = por %p280, %p281
    %s284 = sadd.s32 %s283, 1
    %p287 = scmp.eq.s32.totalorder %s18, 1
    %p288 = scmp.ne.s32.totalorder %s283, %s285
    %p289 = scmp.eq.s32.totalorder %s18, 0
    %p290 = por %p288, %p289
    %p291 = scmp.ne.s32.totalorder %s283, %s285
    %p292 = scmp.eq.s32.totalorder %s23, 1
    %p293 = por %p291, %p292
    %p294 = scmp.ne.s32.totalorder %s285, %s286
    %p295 = scmp.eq.s32.totalorder %s23, 0
    %p296 = por %p294, %p295
    %p297 = scmp.ne.s32.totalorder %s285, %s286
    %p298 = scmp.eq.s32.totalorder %s24, 1
    %p299 = por %p297, %p298
    %p301 = scmp.ne.s32.totalorder %s286, %s300
    %p302 = scmp.eq.s32.totalorder %s24, 0
    %p303 = por %p301, %p302
    %s304 = ssub.s32 %s25, %s37
    %s305 = ssub.s32 %s26, %s33
    %s306 = sor.u32 %s304, %s305
    %p307 = scmp.eq.s32.totalorder %s306, 0
    %s309 = sadd.s32 %s308, 1
    %s310 = scalar_select %p307, %s308, %s309
    %p313 = pneg %p307
    %p314 = scmp.eq.s32.totalorder %s18, 1
    %p315 = por %p313, %p314
    %p316 = scmp.ne.s32.totalorder %s308, %s311
    %p317 = scmp.eq.s32.totalorder %s18, 0
    %p318 = por %p316, %p317
    %p319 = scmp.ne.s32.totalorder %s308, %s311
    %p320 = scmp.eq.s32.totalorder %s23, 1
    %p321 = por %p319, %p320
    %p322 = scmp.ne.s32.totalorder %s311, %s312
    %p323 = scmp.eq.s32.totalorder %s23, 0
    %p324 = por %p322, %p323
    %p325 = scmp.ne.s32.totalorder %s311, %s312
    %p326 = scmp.eq.s32.totalorder %s24, 1
    %p327 = por %p325, %p326
    %p329 = scmp.ne.s32.totalorder %s312, %s328
    %p330 = scmp.eq.s32.totalorder %s24, 0
    %p331 = por %p329, %p330
    %p332 = scmp.le.s32.totalorder 1, %s18
    %p333 = scmp.lt.s32.totalorder %s18, 3
    %p334 = pnand %p332, %p333
    %p335 = pneg %p334
    // Predicated region
    $region9: #{two_way_attention_block.4} parent=5 // pred_check
      _
    $region10: #{two_way_attention_block.4} parent=5 // pred_check_branch
      %337 = sbr.rel (%p334) target = $region12
    $region11: #{two_way_attention_block.4} parent=5 // pred_region
      %s338 = ssub.s32 %s18, 1
      // Predicated region
      $region13: #{two_way_attention_block.4} parent=11 // pred_check
        %p339 = pneg %p107
      $region14: #{two_way_attention_block.4} parent=11 // pred_check_branch
        %341 = sbr.rel (%p339) target = $region16
      $region15: #{two_way_attention_block.4} parent=11 // pred_region
        _
      $region16: #{two_way_attention_block.4} parent=11 // pred_fallthru
        _
      // Predicated region
      $region17: #{two_way_attention_block.4} parent=11 // pred_check
        %p342 = pneg %p128
      $region18: #{two_way_attention_block.4} parent=11 // pred_check_branch
        %344 = sbr.rel (%p342) target = $region20
      $region19: #{two_way_attention_block.4} parent=11 // pred_region
        _
      $region20: #{two_way_attention_block.4} parent=11 // pred_fallthru
        _
      // Predicated region
      $region21: #{two_way_attention_block.4} parent=11 // pred_check
        %p345 = pneg %p149
      $region22: #{two_way_attention_block.4} parent=11 // pred_check_branch
        %347 = sbr.rel (%p345) target = $region24
      $region23: #{two_way_attention_block.4} parent=11 // pred_region
        _
      $region24: #{two_way_attention_block.4} parent=11 // pred_fallthru
        _
      // Predicated region
      $region25: #{two_way_attention_block.4} parent=11 // pred_check
        %p348 = pneg %p170
      $region26: #{two_way_attention_block.4} parent=11 // pred_check_branch
        %350 = sbr.rel (%p348) target = $region28
      $region27: #{two_way_attention_block.4} parent=11 // pred_region
        _
      $region28: #{two_way_attention_block.4} parent=11 // pred_fallthru
        _
      // Predicated region
      $region29: #{two_way_attention_block.4} parent=11 // pred_check
        %p351 = pneg %p191
      $region30: #{two_way_attention_block.4} parent=11 // pred_check_branch
        %353 = sbr.rel (%p351) target = $region32
      $region31: #{two_way_attention_block.4} parent=11 // pred_region
        _
      $region32: #{two_way_attention_block.4} parent=11 // pred_fallthru
        _
      // Predicated region
      $region33: #{two_way_attention_block.4} parent=11 // pred_check
        %p354 = pneg %p212
      $region34: #{two_way_attention_block.4} parent=11 // pred_check_branch
        %356 = sbr.rel (%p354) target = $region36
      $region35: #{two_way_attention_block.4} parent=11 // pred_region
        _
      $region36: #{two_way_attention_block.4} parent=11 // pred_fallthru
        _
      // Predicated region
      $region37: #{two_way_attention_block.4} parent=11 // pred_check
        %p357 = pneg %p233
      $region38: #{two_way_attention_block.4} parent=11 // pred_check_branch
        %359 = sbr.rel (%p357) target = $region40
      $region39: #{two_way_attention_block.4} parent=11 // pred_region
        _
      $region40: #{two_way_attention_block.4} parent=11 // pred_fallthru
        _
      // Predicated region
      $region41: #{two_way_attention_block.4} parent=11 // pred_check
        %p360 = pneg %p254
      $region42: #{two_way_attention_block.4} parent=11 // pred_check_branch
        %362 = sbr.rel (%p360) target = $region44
      $region43: #{two_way_attention_block.4} parent=11 // pred_region
        _
      $region44: #{two_way_attention_block.4} parent=11 // pred_fallthru
        _
      // Predicated region
      $region45: #{two_way_attention_block.4} parent=11 // pred_check
        %p363 = pneg %p275
      $region46: #{two_way_attention_block.4} parent=11 // pred_check_branch
        %365 = sbr.rel (%p363) target = $region48
      $region47: #{two_way_attention_block.4} parent=11 // pred_region
        _
      $region48: #{two_way_attention_block.4} parent=11 // pred_fallthru
        _
      // Predicated region
      $region49: #{two_way_attention_block.4} parent=11 // pred_check
        %p366 = pneg %p296
      $region50: #{two_way_attention_block.4} parent=11 // pred_check_branch
        %368 = sbr.rel (%p366) target = $region52
      $region51: #{two_way_attention_block.4} parent=11 // pred_region
        _
      $region52: #{two_way_attention_block.4} parent=11 // pred_fallthru
        _
    $region12: #{two_way_attention_block.4} parent=5 // pred_fallthru
      _
    %p369 = scmp.lt.s32.totalorder %s18, 2
    // Predicated region
    $region53: #{two_way_attention_block.4} parent=5 // pred_check
      %p370 = pneg %p369
    $region54: #{two_way_attention_block.4} parent=5 // pred_check_branch
      %372 = sbr.rel (%p370) target = $region56
    $region55: #{two_way_attention_block.4} parent=5 // pred_region
      // Predicated region
      $region57: #{two_way_attention_block.4} parent=55 // pred_check
        %p373 = pneg %p52
      $region58: #{two_way_attention_block.4} parent=55 // pred_check_branch
        %375 = sbr.rel (%p373) target = $region60
      $region59: #{two_way_attention_block.4} parent=55 // pred_region
        %p376 = scmp.lt.s32.totalorder %s25, 1
        %s377 = scalar_select %p376, %s25, 1
        %p378 = scmp.lt.s32.totalorder %s26, 0
        %s379 = scalar_select %p378, %s26, 0
        %s380 = sadd.s32 %s379, %s377
        %s381 = smul.addr %s380, 8
        %s382 = scalar_lea.vmem %s0, %s381
      $region60: #{two_way_attention_block.4} parent=55 // pred_fallthru
        _
      // Predicated region
      $region61: #{two_way_attention_block.4} parent=55 // pred_check
        %p383 = pneg %p80
      $region62: #{two_way_attention_block.4} parent=55 // pred_check_branch
        %385 = sbr.rel (%p383) target = $region64
      $region63: #{two_way_attention_block.4} parent=55 // pred_region
        %p386 = scmp.lt.s32.totalorder %s25, 1
        %s387 = scalar_select %p386, %s25, 1
        %p388 = scmp.lt.s32.totalorder %s26, 0
        %s389 = scalar_select %p388, %s26, 0
        %s390 = sadd.s32 %s389, %s387
        %s391 = smul.addr %s390, 8
        %s392 = scalar_lea.vmem %s1, %s391
      $region64: #{two_way_attention_block.4} parent=55 // pred_fallthru
        _
    $region56: #{two_way_attention_block.4} parent=5 // pred_fallthru
      _
    %p393 = scmp.le.s32.totalorder 1, %s18
    %p394 = scmp.lt.s32.totalorder %s18, 3
    %p395 = pnand %p393, %p394
    %p396 = pneg %p395
    // Predicated region
    $region65: #{two_way_attention_block.4} parent=5 // pred_check
      _
    $region66: #{two_way_attention_block.4} parent=5 // pred_check_branch
      %398 = sbr.rel (%p395) target = $region68
    $region67: #{two_way_attention_block.4} parent=5 // pred_region
      %s399 = ssub.s32 %s18, 1
      %p400 = scmp.lt.s32.totalorder %s27, 1
      %s401 = scalar_select %p400, %s27, 1
      %p402 = scmp.lt.s32.totalorder %s28, 0
      %s403 = scalar_select %p402, %s28, 0
      %s404 = sadd.s32 %s403, %s401
      %s405 = smul.addr %s404, 8
      %s406 = scalar_lea.vmem %s0, %s405
      %p407 = pneg %p58
      %p408 = pneg %p55
      %p409 = scmp.lt.s32.totalorder %s27, 1
      %s410 = scalar_select %p409, %s27, 1
      %p411 = scmp.lt.s32.totalorder %s28, 0
      %s412 = scalar_select %p411, %s28, 0
      %s413 = sadd.s32 %s412, %s410
      %s414 = smul.addr %s413, 8
      %s415 = scalar_lea.vmem %s1, %s414
      %p416 = pneg %p86
      %p417 = pneg %p83
      %p418 = pneg %p107
      %p419 = pneg %p104
      %p420 = pneg %p128
      %p421 = pneg %p125
      %p422 = pneg %p149
      %p423 = pneg %p146
      %p424 = pneg %p170
      %p425 = pneg %p167
      %p426 = pneg %p191
      %p427 = pneg %p188
      %p428 = pneg %p212
      %p429 = pneg %p209
      %p430 = pneg %p233
      %p431 = pneg %p230
      %p432 = pneg %p254
      %p433 = pneg %p251
      %p434 = pneg %p275
      %p435 = pneg %p272
      %p436 = pneg %p296
      %p437 = pneg %p293
      %p438 = pneg %p324
      %p439 = pneg %p321
      %p440 = scmp.lt.s32.totalorder %s27, 1
      %s441 = scalar_select %p440, %s27, 1
      %p442 = scmp.lt.s32.totalorder %s28, 0
      %s443 = scalar_select %p442, %s28, 0
      %s444 = sadd.s32 %s443, %s441
      %s445 = smul.addr %s444, 8
      %s446 = scalar_lea.vmem %s12, %s445
      %p447 = scmp.lt.s32.totalorder %s27, 1
      %s448 = scalar_select %p447, %s27, 1
      %p449 = scmp.lt.s32.totalorder %s28, 0
      %s450 = scalar_select %p449, %s28, 0
      %s451 = sadd.s32 %s450, %s448
      %s452 = smul.addr %s451, 8
      %s453 = scalar_lea.vmem %s0, %s452
      %p454 = scmp.lt.s32.totalorder %s27, 1
      %s455 = scalar_select %p454, %s27, 1
      %p456 = scmp.lt.s32.totalorder %s28, 0
      %s457 = scalar_select %p456, %s28, 0
      %s458 = sadd.s32 %s457, %s455
      %s459 = smul.addr %s458, 8
      %s460 = scalar_lea.vmem %s1, %s459
      %p461 = scmp.lt.s32.totalorder %s27, 1
      %s462 = scalar_select %p461, %s27, 1
      %p463 = scmp.lt.s32.totalorder %s28, 0
      %s464 = scalar_select %p463, %s28, 0
      %s465 = sadd.s32 %s464, %s462
      %s466 = smul.addr %s465, 8
      %s467 = scalar_lea.vmem %s12, %s466
      %v469 = vld [vmem:[%s453] sm:$0xff]
      %v470 = vld [vmem:[%s460] sm:$0xff]
      %v471 = vadd.f32 %v469, %v470
      %v472 = vpack.c.bf16 %v471, %v471
      %v473 = vld [vmem:[%s2] sm:$0xf]
      %v474 = vld [vmem:[%s2 + $0x4] sm:$0xf]
      %v475 = vld [vmem:[%s2 + $0x8] sm:$0xf]
      %v476 = vld [vmem:[%s2 + $0xc] sm:$0xf]
      %v477 = vld [vmem:[%s3] sm:$0x1]
      %v479 = vlaneseq
      %v480 = vshrl.u32 %v479, 7
      %v481 = vsub.s32 0, %v480
      %v482 = vrot.slane %v477, %v481
      %v488 = vunpack.c.l.b16 %v473
      %v489 = vunpack.c.l.b16 %v474
      %v490 = vunpack.c.l.b16 %v475
      %v491 = vunpack.c.l.b16 %v476
      %v492 = vpack.c.b16 %v489, %v488
      %v493 = vpack.c.b16 %v491, %v490
      %vm496 = vcmask 261120
      %v498 = vsel %vm496, %v472, 0
      %500 = vmatprep.subr.bf16.mxu0 0
      %501 = vmatpush1.bf16.msra.mxu0 0
      %502 = vmatprep.subr.bf16.mxu0 0
      %503 = vmatpush1.bf16.msra.mxu0 0
      %504 = vmatprep.subr.bf16.mxu0 0
      %505 = vmatpush1.bf16.msra.mxu0 0
      %506 = vmatprep.subr.bf16.mxu0 0
      %507 = vmatpush1.bf16.msra.mxu0 0
      %508 = vmatprep.subr.bf16.mxu0 0
      %509 = vmatpush1.bf16.msra.mxu0 0
      %510 = vmatprep.subr.bf16.mxu0 0
      %511 = vmatpush1.bf16.msra.mxu0 0
      %512 = vmatprep.subr.bf16.mxu0 0
      %513 = vmatpush1.bf16.msra.mxu0 %v493
      %514 = vmatprep.subr.bf16.mxu0 0
      %515 = vmatpush1.bf16.msra.mxu0 %v492
      %516 = vmatprep.subr.bf16.mxu0 0
      %517 = vmatpush2.bf16.msra.mxu0 0
      %518 = vmatprep.subr.bf16.mxu0 0
      %519 = vmatpush2.bf16.msra.mxu0 0
      %520 = vmatprep.subr.bf16.mxu0 0
      %521 = vmatpush2.bf16.msra.mxu0 0
      %522 = vmatprep.subr.bf16.mxu0 0
      %523 = vmatpush2.bf16.msra.mxu0 0
      %524 = vmatprep.subr.bf16.mxu0 0
      %525 = vmatpush2.bf16.msra.mxu0 0
      %526 = vmatprep.subr.bf16.mxu0 0
      %527 = vmatpush2.bf16.msra.mxu0 0
      %528 = vmatprep.subr.bf16.mxu0 0
      %529 = vmatpush2.bf16.msra.mxu0 0
      %530 = vmatprep.subr.bf16.mxu0 0
      %531 = vmatpush2.bf16.msra.mxu0 0
      %532 = vmatprep.mubr.bf16.mxu0 0
      %533 = vmatmul.mubr.bf16.gmra.mxu0 %v498
      %v534 = vpop.f32.mrf.mxu0
      %v535 = vadd.f32 %v482, %v534
      %v536 = vpop.f32.mrf.mxu0
      %v537 = vpop.f32.mrf.mxu0
      %v538 = vpop.f32.mrf.mxu0
      %539 = vdwg.mxu0
      %v540 = vld [vmem:[%s4] sm:$0xf]
      %v541 = vld [vmem:[%s4 + $0x4] sm:$0xf]
      %v542 = vld [vmem:[%s4 + $0x8] sm:$0xf]
      %v543 = vld [vmem:[%s4 + $0xc] sm:$0xf]
      %v544 = vld [vmem:[%s5] sm:$0x1]
      %v546 = vlaneseq
      %v547 = vshrl.u32 %v546, 7
      %v548 = vsub.s32 0, %v547
      %v549 = vrot.slane %v544, %v548
      %v555 = vunpack.c.l.b16 %v540
      %v556 = vunpack.c.l.b16 %v541
      %v557 = vunpack.c.l.b16 %v542
      %v558 = vunpack.c.l.b16 %v543
      %v559 = vpack.c.b16 %v556, %v555
      %v560 = vpack.c.b16 %v558, %v557
      %563 = vmatprep.subr.bf16.mxu0 0
      %564 = vmatpush1.bf16.msra.mxu0 0
      %565 = vmatprep.subr.bf16.mxu0 0
      %566 = vmatpush1.bf16.msra.mxu0 0
      %567 = vmatprep.subr.bf16.mxu0 0
      %568 = vmatpush1.bf16.msra.mxu0 0
      %569 = vmatprep.subr.bf16.mxu0 0
      %570 = vmatpush1.bf16.msra.mxu0 0
      %571 = vmatprep.subr.bf16.mxu0 0
      %572 = vmatpush1.bf16.msra.mxu0 0
      %573 = vmatprep.subr.bf16.mxu0 0
      %574 = vmatpush1.bf16.msra.mxu0 0
      %575 = vmatprep.subr.bf16.mxu0 0
      %576 = vmatpush1.bf16.msra.mxu0 %v560
      %577 = vmatprep.subr.bf16.mxu0 0
      %578 = vmatpush1.bf16.msra.mxu0 %v559
      %579 = vmatprep.subr.bf16.mxu0 0
      %580 = vmatpush2.bf16.msra.mxu0 0
      %581 = vmatprep.subr.bf16.mxu0 0
      %582 = vmatpush2.bf16.msra.mxu0 0
      %583 = vmatprep.subr.bf16.mxu0 0
      %584 = vmatpush2.bf16.msra.mxu0 0
      %585 = vmatprep.subr.bf16.mxu0 0
      %586 = vmatpush2.bf16.msra.mxu0 0
      %587 = vmatprep.subr.bf16.mxu0 0
      %588 = vmatpush2.bf16.msra.mxu0 0
      %589 = vmatprep.subr.bf16.mxu0 0
      %590 = vmatpush2.bf16.msra.mxu0 0
      %591 = vmatprep.subr.bf16.mxu0 0
      %592 = vmatpush2.bf16.msra.mxu0 0
      %593 = vmatprep.subr.bf16.mxu0 0
      %594 = vmatpush2.bf16.msra.mxu0 0
      %595 = vmatprep.mubr.bf16.mxu0 0
      %596 = vmatmul.mubr.bf16.gmra.mxu0 %v498
      %v597 = vpop.f32.mrf.mxu0
      %v598 = vadd.f32 %v549, %v597
      %v599 = vpop.f32.mrf.mxu0
      %v600 = vpop.f32.mrf.mxu0
      %v601 = vpop.f32.mrf.mxu0
      %602 = vdwg.mxu0
      %v603 = vpack.c.bf16 %v469, %v469
      %v604 = vld [vmem:[%s6] sm:$0xf]
      %v605 = vld [vmem:[%s6 + $0x4] sm:$0xf]
      %v606 = vld [vmem:[%s6 + $0x8] sm:$0xf]
      %v607 = vld [vmem:[%s6 + $0xc] sm:$0xf]
      %v608 = vld [vmem:[%s7] sm:$0x1]
      %v610 = vlaneseq
      %v611 = vshrl.u32 %v610, 7
      %v612 = vsub.s32 0, %v611
      %v613 = vrot.slane %v608, %v612
      %v619 = vunpack.c.l.b16 %v604
      %v620 = vunpack.c.l.b16 %v605
      %v621 = vunpack.c.l.b16 %v606
      %v622 = vunpack.c.l.b16 %v607
      %v623 = vpack.c.b16 %v620, %v619
      %v624 = vpack.c.b16 %v622, %v621
      %v628 = vsel %vm496, %v603, 0
      %630 = vmatprep.subr.bf16.mxu0 0
      %631 = vmatpush1.bf16.msra.mxu0 0
      %632 = vmatprep.subr.bf16.mxu0 0
      %633 = vmatpush1.bf16.msra.mxu0 0
      %634 = vmatprep.subr.bf16.mxu0 0
      %635 = vmatpush1.bf16.msra.mxu0 0
      %636 = vmatprep.subr.bf16.mxu0 0
      %637 = vmatpush1.bf16.msra.mxu0 0
      %638 = vmatprep.subr.bf16.mxu0 0
      %639 = vmatpush1.bf16.msra.mxu0 0
      %640 = vmatprep.subr.bf16.mxu0 0
      %641 = vmatpush1.bf16.msra.mxu0 0
      %642 = vmatprep.subr.bf16.mxu0 0
      %643 = vmatpush1.bf16.msra.mxu0 %v624
      %644 = vmatprep.subr.bf16.mxu0 0
      %645 = vmatpush1.bf16.msra.mxu0 %v623
      %646 = vmatprep.subr.bf16.mxu0 0
      %647 = vmatpush2.bf16.msra.mxu0 0
      %648 = vmatprep.subr.bf16.mxu0 0
      %649 = vmatpush2.bf16.msra.mxu0 0
      %650 = vmatprep.subr.bf16.mxu0 0
      %651 = vmatpush2.bf16.msra.mxu0 0
      %652 = vmatprep.subr.bf16.mxu0 0
      %653 = vmatpush2.bf16.msra.mxu0 0
      %654 = vmatprep.subr.bf16.mxu0 0
      %655 = vmatpush2.bf16.msra.mxu0 0
      %656 = vmatprep.subr.bf16.mxu0 0
      %657 = vmatpush2.bf16.msra.mxu0 0
      %658 = vmatprep.subr.bf16.mxu0 0
      %659 = vmatpush2.bf16.msra.mxu0 0
      %660 = vmatprep.subr.bf16.mxu0 0
      %661 = vmatpush2.bf16.msra.mxu0 0
      %662 = vmatprep.mubr.bf16.mxu0 0
      %663 = vmatmul.mubr.bf16.gmra.mxu0 %v628
      %v664 = vpop.f32.mrf.mxu0
      %v665 = vadd.f32 %v613, %v664
      %v666 = vpop.f32.mrf.mxu0
      %v667 = vpop.f32.mrf.mxu0
      %v668 = vpop.f32.mrf.mxu0
      %669 = vdwg.mxu0
      %v670 = vld [vmem:[%s8] sm:$0xf]
      %v671 = vld [vmem:[%s8 + $0x4] sm:$0xf]
      %v672 = vld [vmem:[%s8 + $0x8] sm:$0xf]
      %v673 = vld [vmem:[%s8 + $0xc] sm:$0xf]
      %v674 = vpack.c.bf16 %v535, %v535
      %v675 = vpack.c.bf16 %v598, %v598
      %v676 = vpack.c.bf16 %v665, %v665
      %vm677 = vcmask 64512
      %v679 = vsel %vm677, %v674, 0
      %v682 = vsel %vm677, %v675, 0
      %684 = vmatprep.subr.bf16.mxu0 0
      %685 = vmatpush1.bf16.xpose.msra.mxu0 0
      %686 = vmatprep.subr.bf16.mxu0 0
      %687 = vmatpush1.bf16.xpose.msra.mxu0 0
      %688 = vmatprep.subr.bf16.mxu0 0
      %689 = vmatpush1.bf16.xpose.msra.mxu0 0
      %690 = vmatprep.subr.bf16.mxu0 0
      %691 = vmatpush1.bf16.xpose.msra.mxu0 0
      %692 = vmatprep.subr.bf16.mxu0 0
      %693 = vmatpush1.bf16.xpose.msra.mxu0 0
      %694 = vmatprep.subr.bf16.mxu0 0
      %695 = vmatpush1.bf16.xpose.msra.mxu0 0
      %696 = vmatprep.subr.bf16.mxu0 0
      %697 = vmatpush1.bf16.xpose.msra.mxu0 0
      %698 = vmatprep.subr.bf16.mxu0 0
      %699 = vmatpush1.bf16.xpose.msra.mxu0 %v682
      %700 = vmatprep.subr.bf16.mxu0 0
      %701 = vmatpush2.bf16.xpose.msra.mxu0 0
      %702 = vmatprep.subr.bf16.mxu0 0
      %703 = vmatpush2.bf16.xpose.msra.mxu0 0
      %704 = vmatprep.subr.bf16.mxu0 0
      %705 = vmatpush2.bf16.xpose.msra.mxu0 0
      %706 = vmatprep.subr.bf16.mxu0 0
      %707 = vmatpush2.bf16.xpose.msra.mxu0 0
      %708 = vmatprep.subr.bf16.mxu0 0
      %709 = vmatpush2.bf16.xpose.msra.mxu0 0
      %710 = vmatprep.subr.bf16.mxu0 0
      %711 = vmatpush2.bf16.xpose.msra.mxu0 0
      %712 = vmatprep.subr.bf16.mxu0 0
      %713 = vmatpush2.bf16.xpose.msra.mxu0 0
      %714 = vmatprep.subr.bf16.mxu0 0
      %715 = vmatpush2.bf16.xpose.msra.mxu0 0
      %716 = vmatprep.mubr.bf16.mxu0 0
      %717 = vmatmul.mubr.bf16.gmra.mxu0 %v679
      %v718 = vpop.f32.mrf.mxu0
      %v719 = vadd.f32 0.0, %v718
      %v720 = vpop.f32.mrf.mxu0
      %v721 = vpop.f32.mrf.mxu0
      %v722 = vpop.f32.mrf.mxu0
      %723 = vdwg.mxu0
      %v724 = vsel %vm677, %v719, -inf
      %725 = vmax.xlane.f32.xlu0 %v724
      %v726 = vpop.xlane.xlu0 %725
      %v727 = vsub.f32 %v719, %v726
      %v728 = vmul.f32 %v727, 1.442695
      %v729 = vpow.pop %v728
      %v730 = vsel %vm677, %v729, 0.0
      %731 = vadd.xlane.f32.xlu0 %v730
      %v732 = vpop.xlane.xlu0 %731
      %v733 = vrcp.pop %v732
      %v734 = vpack.c.bf16 %v729, %v729
      %v736 = vsel %vm677, %v734, 0
      %vm738 = vcmask 1043456
      %v740 = vsel %vm738, %v676, 0
      %742 = vmatprep.subr.bf16.mxu0 0
      %743 = vmatpush1.bf16.msra.mxu0 0
      %744 = vmatprep.subr.bf16.mxu0 0
      %745 = vmatpush1.bf16.msra.mxu0 0
      %746 = vmatprep.subr.bf16.mxu0 0
      %747 = vmatpush1.bf16.msra.mxu0 0
      %748 = vmatprep.subr.bf16.mxu0 0
      %749 = vmatpush1.bf16.msra.mxu0 0
      %750 = vmatprep.subr.bf16.mxu0 0
      %751 = vmatpush1.bf16.msra.mxu0 0
      %752 = vmatprep.subr.bf16.mxu0 0
      %753 = vmatpush1.bf16.msra.mxu0 0
      %754 = vmatprep.subr.bf16.mxu0 0
      %755 = vmatpush1.bf16.msra.mxu0 0
      %756 = vmatprep.subr.bf16.mxu0 0
      %757 = vmatpush1.bf16.msra.mxu0 %v740
      %758 = vmatprep.subr.bf16.mxu0 0
      %759 = vmatpush2.bf16.msra.mxu0 0
      %760 = vmatprep.subr.bf16.mxu0 0
      %761 = vmatpush2.bf16.msra.mxu0 0
      %762 = vmatprep.subr.bf16.mxu0 0
      %763 = vmatpush2.bf16.msra.mxu0 0
      %764 = vmatprep.subr.bf16.mxu0 0
      %765 = vmatpush2.bf16.msra.mxu0 0
      %766 = vmatprep.subr.bf16.mxu0 0
      %767 = vmatpush2.bf16.msra.mxu0 0
      %768 = vmatprep.subr.bf16.mxu0 0
      %769 = vmatpush2.bf16.msra.mxu0 0
      %770 = vmatprep.subr.bf16.mxu0 0
      %771 = vmatpush2.bf16.msra.mxu0 0
      %772 = vmatprep.subr.bf16.mxu0 0
      %773 = vmatpush2.bf16.msra.mxu0 0
      %774 = vmatprep.mubr.bf16.mxu0 0
      %775 = vmatmul.mubr.bf16.gmra.mxu0 %v736
      %v776 = vpop.f32.mrf.mxu0
      %v777 = vadd.f32 0.0, %v776
      %v778 = vpop.f32.mrf.mxu0
      %v779 = vpop.f32.mrf.mxu0
      %v780 = vpop.f32.mrf.mxu0
      %781 = vdwg.mxu0
      %v782 = vmul.f32 %v777, %v733
      %v783 = vpack.c.bf16 %v782, %v782
      %785 = vrot.lane.b32.xlu0 %v674, 120
      %v786 = vpop.permute.xlu0 %785
      %788 = vrot.lane.b32.xlu0 %v675, 120
      %v789 = vpop.permute.xlu0 %788
      %v791 = vsel %vm677, %v786, 0
      %v794 = vsel %vm677, %v789, 0
      %796 = vmatprep.subr.bf16.mxu0 0
      %797 = vmatpush1.bf16.xpose.msra.mxu0 0
      %798 = vmatprep.subr.bf16.mxu0 0
      %799 = vmatpush1.bf16.xpose.msra.mxu0 0
      %800 = vmatprep.subr.bf16.mxu0 0
      %801 = vmatpush1.bf16.xpose.msra.mxu0 0
      %802 = vmatprep.subr.bf16.mxu0 0
      %803 = vmatpush1.bf16.xpose.msra.mxu0 0
      %804 = vmatprep.subr.bf16.mxu0 0
      %805 = vmatpush1.bf16.xpose.msra.mxu0 0
      %806 = vmatprep.subr.bf16.mxu0 0
      %807 = vmatpush1.bf16.xpose.msra.mxu0 0
      %808 = vmatprep.subr.bf16.mxu0 0
      %809 = vmatpush1.bf16.xpose.msra.mxu0 0
      %810 = vmatprep.subr.bf16.mxu0 0
      %811 = vmatpush1.bf16.xpose.msra.mxu0 %v794
      %812 = vmatprep.subr.bf16.mxu0 0
      %813 = vmatpush2.bf16.xpose.msra.mxu0 0
      %814 = vmatprep.subr.bf16.mxu0 0
      %815 = vmatpush2.bf16.xpose.msra.mxu0 0
      %816 = vmatprep.subr.bf16.mxu0 0
      %817 = vmatpush2.bf16.xpose.msra.mxu0 0
      %818 = vmatprep.subr.bf16.mxu0 0
      %819 = vmatpush2.bf16.xpose.msra.mxu0 0
      %820 = vmatprep.subr.bf16.mxu0 0
      %821 = vmatpush2.bf16.xpose.msra.mxu0 0
      %822 = vmatprep.subr.bf16.mxu0 0
      %823 = vmatpush2.bf16.xpose.msra.mxu0 0
      %824 = vmatprep.subr.bf16.mxu0 0
      %825 = vmatpush2.bf16.xpose.msra.mxu0 0
      %826 = vmatprep.subr.bf16.mxu0 0
      %827 = vmatpush2.bf16.xpose.msra.mxu0 0
      %828 = vmatprep.mubr.bf16.mxu0 0
      %829 = vmatmul.mubr.bf16.gmra.mxu0 %v791
      %v830 = vpop.f32.mrf.mxu0
      %v831 = vadd.f32 0.0, %v830
      %v832 = vpop.f32.mrf.mxu0
      %v833 = vpop.f32.mrf.mxu0
      %v834 = vpop.f32.mrf.mxu0
      %835 = vdwg.mxu0
      %v836 = vsel %vm677, %v831, -inf
      %837 = vmax.xlane.f32.xlu0 %v836
      %v838 = vpop.xlane.xlu0 %837
      %v839 = vsub.f32 %v831, %v838
      %v840 = vmul.f32 %v839, 1.442695
      %v841 = vpow.pop %v840
      %v842 = vsel %vm677, %v841, 0.0
      %843 = vadd.xlane.f32.xlu0 %v842
      %v844 = vpop.xlane.xlu0 %843
      %v845 = vrcp.pop %v844
      %v846 = vpack.c.bf16 %v841, %v841
      %848 = vrot.lane.b32.xlu0 %v676, 120
      %v849 = vpop.permute.xlu0 %848
      %v851 = vsel %vm677, %v846, 0
      %v854 = vsel %vm738, %v849, 0
      %856 = vmatprep.subr.bf16.mxu0 0
      %857 = vmatpush1.bf16.msra.mxu0 0
      %858 = vmatprep.subr.bf16.mxu0 0
      %859 = vmatpush1.bf16.msra.mxu0 0
      %860 = vmatprep.subr.bf16.mxu0 0
      %861 = vmatpush1.bf16.msra.mxu0 0
      %862 = vmatprep.subr.bf16.mxu0 0
      %863 = vmatpush1.bf16.msra.mxu0 0
      %864 = vmatprep.subr.bf16.mxu0 0
      %865 = vmatpush1.bf16.msra.mxu0 0
      %866 = vmatprep.subr.bf16.mxu0 0
      %867 = vmatpush1.bf16.msra.mxu0 0
      %868 = vmatprep.subr.bf16.mxu0 0
      %869 = vmatpush1.bf16.msra.mxu0 0
      %870 = vmatprep.subr.bf16.mxu0 0
      %871 = vmatpush1.bf16.msra.mxu0 %v854
      %872 = vmatprep.subr.bf16.mxu0 0
      %873 = vmatpush2.bf16.msra.mxu0 0
      %874 = vmatprep.subr.bf16.mxu0 0
      %875 = vmatpush2.bf16.msra.mxu0 0
      %876 = vmatprep.subr.bf16.mxu0 0
      %877 = vmatpush2.bf16.msra.mxu0 0
      %878 = vmatprep.subr.bf16.mxu0 0
      %879 = vmatpush2.bf16.msra.mxu0 0
      %880 = vmatprep.subr.bf16.mxu0 0
      %881 = vmatpush2.bf16.msra.mxu0 0
      %882 = vmatprep.subr.bf16.mxu0 0
      %883 = vmatpush2.bf16.msra.mxu0 0
      %884 = vmatprep.subr.bf16.mxu0 0
      %885 = vmatpush2.bf16.msra.mxu0 0
      %886 = vmatprep.subr.bf16.mxu0 0
      %887 = vmatpush2.bf16.msra.mxu0 0
      %888 = vmatprep.mubr.bf16.mxu0 0
      %889 = vmatmul.mubr.bf16.gmra.mxu0 %v851
      %v890 = vpop.f32.mrf.mxu0
      %v891 = vadd.f32 0.0, %v890
      %v892 = vpop.f32.mrf.mxu0
      %v893 = vpop.f32.mrf.mxu0
      %v894 = vpop.f32.mrf.mxu0
      %895 = vdwg.mxu0
      %v896 = vmul.f32 %v891, %v845
      %v897 = vpack.c.bf16 %v896, %v896
      %v899 = vsel %vm677, %v897, 0
      %v902 = vsel %vm738, %v671, 0
      %904 = vmatprep.subr.bf16.mxu0 0
      %905 = vmatpush1.bf16.msra.mxu0 0
      %906 = vmatprep.subr.bf16.mxu0 0
      %907 = vmatpush1.bf16.msra.mxu0 0
      %908 = vmatprep.subr.bf16.mxu0 0
      %909 = vmatpush1.bf16.msra.mxu0 0
      %910 = vmatprep.subr.bf16.mxu0 0
      %911 = vmatpush1.bf16.msra.mxu0 0
      %912 = vmatprep.subr.bf16.mxu0 0
      %913 = vmatpush1.bf16.msra.mxu0 0
      %914 = vmatprep.subr.bf16.mxu0 0
      %915 = vmatpush1.bf16.msra.mxu0 0
      %916 = vmatprep.subr.bf16.mxu0 0
      %917 = vmatpush1.bf16.msra.mxu0 0
      %918 = vmatprep.subr.bf16.mxu0 0
      %919 = vmatpush1.bf16.msra.mxu0 %v902
      %920 = vmatprep.subr.bf16.mxu0 0
      %921 = vmatpush2.bf16.msra.mxu0 0
      %922 = vmatprep.subr.bf16.mxu0 0
      %923 = vmatpush2.bf16.msra.mxu0 0
      %924 = vmatprep.subr.bf16.mxu0 0
      %925 = vmatpush2.bf16.msra.mxu0 0
      %926 = vmatprep.subr.bf16.mxu0 0
      %927 = vmatpush2.bf16.msra.mxu0 0
      %928 = vmatprep.subr.bf16.mxu0 0
      %929 = vmatpush2.bf16.msra.mxu0 0
      %930 = vmatprep.subr.bf16.mxu0 0
      %931 = vmatpush2.bf16.msra.mxu0 0
      %932 = vmatprep.subr.bf16.mxu0 0
      %933 = vmatpush2.bf16.msra.mxu0 0
      %934 = vmatprep.subr.bf16.mxu0 0
      %935 = vmatpush2.bf16.msra.mxu0 0
      %936 = vmatprep.mubr.bf16.mxu0 0
      %937 = vmatmul.mubr.bf16.gmra.mxu0 %v899
      %v938 = vpop.f32.mrf.mxu0
      %v939 = vadd.f32 0.0, %v938
      %v940 = vpop.f32.mrf.mxu0
      %v941 = vpop.f32.mrf.mxu0
      %v942 = vpop.f32.mrf.mxu0
      %943 = vdwg.mxu0
      %v945 = vsel %vm677, %v783, 0
      %v948 = vsel %vm738, %v670, 0
      %950 = vmatprep.subr.bf16.mxu0 0
      %951 = vmatpush1.bf16.msra.mxu0 0
      %952 = vmatprep.subr.bf16.mxu0 0
      %953 = vmatpush1.bf16.msra.mxu0 0
      %954 = vmatprep.subr.bf16.mxu0 0
      %955 = vmatpush1.bf16.msra.mxu0 0
      %956 = vmatprep.subr.bf16.mxu0 0
      %957 = vmatpush1.bf16.msra.mxu0 0
      %958 = vmatprep.subr.bf16.mxu0 0
      %959 = vmatpush1.bf16.msra.mxu0 0
      %960 = vmatprep.subr.bf16.mxu0 0
      %961 = vmatpush1.bf16.msra.mxu0 0
      %962 = vmatprep.subr.bf16.mxu0 0
      %963 = vmatpush1.bf16.msra.mxu0 0
      %964 = vmatprep.subr.bf16.mxu0 0
      %965 = vmatpush1.bf16.msra.mxu0 %v948
      %966 = vmatprep.subr.bf16.mxu0 0
      %967 = vmatpush2.bf16.msra.mxu0 0
      %968 = vmatprep.subr.bf16.mxu0 0
      %969 = vmatpush2.bf16.msra.mxu0 0
      %970 = vmatprep.subr.bf16.mxu0 0
      %971 = vmatpush2.bf16.msra.mxu0 0
      %972 = vmatprep.subr.bf16.mxu0 0
      %973 = vmatpush2.bf16.msra.mxu0 0
      %974 = vmatprep.subr.bf16.mxu0 0
      %975 = vmatpush2.bf16.msra.mxu0 0
      %976 = vmatprep.subr.bf16.mxu0 0
      %977 = vmatpush2.bf16.msra.mxu0 0
      %978 = vmatprep.subr.bf16.mxu0 0
      %979 = vmatpush2.bf16.msra.mxu0 0
      %980 = vmatprep.subr.bf16.mxu0 0
      %981 = vmatpush2.bf16.msra.mxu0 0
      %982 = vmatprep.mubr.bf16.mxu0 0
      %983 = vmatmul.mubr.bf16.gmra.mxu0 %v945
      %v984 = vpop.f32.mrf.mxu0
      %v985 = vadd.f32 %v939, %v984
      %v986 = vpop.f32.mrf.mxu0
      %v987 = vpop.f32.mrf.mxu0
      %v988 = vpop.f32.mrf.mxu0
      %989 = vdwg.mxu0
      %990 = vrot.lane.b32.xlu0 %v674, 112
      %v991 = vpop.permute.xlu0 %990
      %992 = vrot.lane.b32.xlu0 %v675, 112
      %v993 = vpop.permute.xlu0 %992
      %v995 = vsel %vm677, %v991, 0
      %v998 = vsel %vm677, %v993, 0
      %1000 = vmatprep.subr.bf16.mxu0 0
      %1001 = vmatpush1.bf16.xpose.msra.mxu0 0
      %1002 = vmatprep.subr.bf16.mxu0 0
      %1003 = vmatpush1.bf16.xpose.msra.mxu0 0
      %1004 = vmatprep.subr.bf16.mxu0 0
      %1005 = vmatpush1.bf16.xpose.msra.mxu0 0
      %1006 = vmatprep.subr.bf16.mxu0 0
      %1007 = vmatpush1.bf16.xpose.msra.mxu0 0
      %1008 = vmatprep.subr.bf16.mxu0 0
      %1009 = vmatpush1.bf16.xpose.msra.mxu0 0
      %1010 = vmatprep.subr.bf16.mxu0 0
      %1011 = vmatpush1.bf16.xpose.msra.mxu0 0
      %1012 = vmatprep.subr.bf16.mxu0 0
      %1013 = vmatpush1.bf16.xpose.msra.mxu0 0
      %1014 = vmatprep.subr.bf16.mxu0 0
      %1015 = vmatpush1.bf16.xpose.msra.mxu0 %v998
      %1016 = vmatprep.subr.bf16.mxu0 0
      %1017 = vmatpush2.bf16.xpose.msra.mxu0 0
      %1018 = vmatprep.subr.bf16.mxu0 0
      %1019 = vmatpush2.bf16.xpose.msra.mxu0 0
      %1020 = vmatprep.subr.bf16.mxu0 0
      %1021 = vmatpush2.bf16.xpose.msra.mxu0 0
      %1022 = vmatprep.subr.bf16.mxu0 0
      %1023 = vmatpush2.bf16.xpose.msra.mxu0 0
      %1024 = vmatprep.subr.bf16.mxu0 0
      %1025 = vmatpush2.bf16.xpose.msra.mxu0 0
      %1026 = vmatprep.subr.bf16.mxu0 0
      %1027 = vmatpush2.bf16.xpose.msra.mxu0 0
      %1028 = vmatprep.subr.bf16.mxu0 0
      %1029 = vmatpush2.bf16.xpose.msra.mxu0 0
      %1030 = vmatprep.subr.bf16.mxu0 0
      %1031 = vmatpush2.bf16.xpose.msra.mxu0 0
      %1032 = vmatprep.mubr.bf16.mxu0 0
      %1033 = vmatmul.mubr.bf16.gmra.mxu0 %v995
      %v1034 = vpop.f32.mrf.mxu0
      %v1035 = vadd.f32 0.0, %v1034
      %v1036 = vpop.f32.mrf.mxu0
      %v1037 = vpop.f32.mrf.mxu0
      %v1038 = vpop.f32.mrf.mxu0
      %1039 = vdwg.mxu0
      %v1040 = vsel %vm677, %v1035, -inf
      %1041 = vmax.xlane.f32.xlu0 %v1040
      %v1042 = vpop.xlane.xlu0 %1041
      %v1043 = vsub.f32 %v1035, %v1042
      %v1044 = vmul.f32 %v1043, 1.442695
      %v1045 = vpow.pop %v1044
      %v1046 = vsel %vm677, %v1045, 0.0
      %1047 = vadd.xlane.f32.xlu0 %v1046
      %v1048 = vpop.xlane.xlu0 %1047
      %v1049 = vrcp.pop %v1048
      %v1050 = vpack.c.bf16 %v1045, %v1045
      %1051 = vrot.lane.b32.xlu0 %v676, 112
      %v1052 = vpop.permute.xlu0 %1051
      %v1054 = vsel %vm677, %v1050, 0
      %v1057 = vsel %vm738, %v1052, 0
      %1059 = vmatprep.subr.bf16.mxu0 0
      %1060 = vmatpush1.bf16.msra.mxu0 0
      %1061 = vmatprep.subr.bf16.mxu0 0
      %1062 = vmatpush1.bf16.msra.mxu0 0
      %1063 = vmatprep.subr.bf16.mxu0 0
      %1064 = vmatpush1.bf16.msra.mxu0 0
      %1065 = vmatprep.subr.bf16.mxu0 0
      %1066 = vmatpush1.bf16.msra.mxu0 0
      %1067 = vmatprep.subr.bf16.mxu0 0
      %1068 = vmatpush1.bf16.msra.mxu0 0
      %1069 = vmatprep.subr.bf16.mxu0 0
      %1070 = vmatpush1.bf16.msra.mxu0 0
      %1071 = vmatprep.subr.bf16.mxu0 0
      %1072 = vmatpush1.bf16.msra.mxu0 0
      %1073 = vmatprep.subr.bf16.mxu0 0
      %1074 = vmatpush1.bf16.msra.mxu0 %v1057
      %1075 = vmatprep.subr.bf16.mxu0 0
      %1076 = vmatpush2.bf16.msra.mxu0 0
      %1077 = vmatprep.subr.bf16.mxu0 0
      %1078 = vmatpush2.bf16.msra.mxu0 0
      %1079 = vmatprep.subr.bf16.mxu0 0
      %1080 = vmatpush2.bf16.msra.mxu0 0
      %1081 = vmatprep.subr.bf16.mxu0 0
      %1082 = vmatpush2.bf16.msra.mxu0 0
      %1083 = vmatprep.subr.bf16.mxu0 0
      %1084 = vmatpush2.bf16.msra.mxu0 0
      %1085 = vmatprep.subr.bf16.mxu0 0
      %1086 = vmatpush2.bf16.msra.mxu0 0
      %1087 = vmatprep.subr.bf16.mxu0 0
      %1088 = vmatpush2.bf16.msra.mxu0 0
      %1089 = vmatprep.subr.bf16.mxu0 0
      %1090 = vmatpush2.bf16.msra.mxu0 0
      %1091 = vmatprep.mubr.bf16.mxu0 0
      %1092 = vmatmul.mubr.bf16.gmra.mxu0 %v1054
      %v1093 = vpop.f32.mrf.mxu0
      %v1094 = vadd.f32 0.0, %v1093
      %v1095 = vpop.f32.mrf.mxu0
      %v1096 = vpop.f32.mrf.mxu0
      %v1097 = vpop.f32.mrf.mxu0
      %1098 = vdwg.mxu0
      %v1099 = vmul.f32 %v1094, %v1049
      %v1100 = vpack.c.bf16 %v1099, %v1099
      %v1102 = vsel %vm677, %v1100, 0
      %v1105 = vsel %vm738, %v672, 0
      %1107 = vmatprep.subr.bf16.mxu0 0
      %1108 = vmatpush1.bf16.msra.mxu0 0
      %1109 = vmatprep.subr.bf16.mxu0 0
      %1110 = vmatpush1.bf16.msra.mxu0 0
      %1111 = vmatprep.subr.bf16.mxu0 0
      %1112 = vmatpush1.bf16.msra.mxu0 0
      %1113 = vmatprep.subr.bf16.mxu0 0
      %1114 = vmatpush1.bf16.msra.mxu0 0
      %1115 = vmatprep.subr.bf16.mxu0 0
      %1116 = vmatpush1.bf16.msra.mxu0 0
      %1117 = vmatprep.subr.bf16.mxu0 0
      %1118 = vmatpush1.bf16.msra.mxu0 0
      %1119 = vmatprep.subr.bf16.mxu0 0
      %1120 = vmatpush1.bf16.msra.mxu0 0
      %1121 = vmatprep.subr.bf16.mxu0 0
      %1122 = vmatpush1.bf16.msra.mxu0 %v1105
      %1123 = vmatprep.subr.bf16.mxu0 0
      %1124 = vmatpush2.bf16.msra.mxu0 0
      %1125 = vmatprep.subr.bf16.mxu0 0
      %1126 = vmatpush2.bf16.msra.mxu0 0
      %1127 = vmatprep.subr.bf16.mxu0 0
      %1128 = vmatpush2.bf16.msra.mxu0 0
      %1129 = vmatprep.subr.bf16.mxu0 0
      %1130 = vmatpush2.bf16.msra.mxu0 0
      %1131 = vmatprep.subr.bf16.mxu0 0
      %1132 = vmatpush2.bf16.msra.mxu0 0
      %1133 = vmatprep.subr.bf16.mxu0 0
      %1134 = vmatpush2.bf16.msra.mxu0 0
      %1135 = vmatprep.subr.bf16.mxu0 0
      %1136 = vmatpush2.bf16.msra.mxu0 0
      %1137 = vmatprep.subr.bf16.mxu0 0
      %1138 = vmatpush2.bf16.msra.mxu0 0
      %1139 = vmatprep.mubr.bf16.mxu0 0
      %1140 = vmatmul.mubr.bf16.gmra.mxu0 %v1102
      %v1141 = vpop.f32.mrf.mxu0
      %v1142 = vadd.f32 0.0, %v1141
      %v1143 = vpop.f32.mrf.mxu0
      %v1144 = vpop.f32.mrf.mxu0
      %v1145 = vpop.f32.mrf.mxu0
      %1146 = vdwg.mxu0
      %v1147 = vadd.f32 %v985, %v1142
      %1148 = vrot.lane.b32.xlu0 %v674, 104
      %v1149 = vpop.permute.xlu0 %1148
      %1150 = vrot.lane.b32.xlu0 %v675, 104
      %v1151 = vpop.permute.xlu0 %1150
      %v1153 = vsel %vm677, %v1149, 0
      %v1156 = vsel %vm677, %v1151, 0
      %1158 = vmatprep.subr.bf16.mxu0 0
      %1159 = vmatpush1.bf16.xpose.msra.mxu0 0
      %1160 = vmatprep.subr.bf16.mxu0 0
      %1161 = vmatpush1.bf16.xpose.msra.mxu0 0
      %1162 = vmatprep.subr.bf16.mxu0 0
      %1163 = vmatpush1.bf16.xpose.msra.mxu0 0
      %1164 = vmatprep.subr.bf16.mxu0 0
      %1165 = vmatpush1.bf16.xpose.msra.mxu0 0
      %1166 = vmatprep.subr.bf16.mxu0 0
      %1167 = vmatpush1.bf16.xpose.msra.mxu0 0
      %1168 = vmatprep.subr.bf16.mxu0 0
      %1169 = vmatpush1.bf16.xpose.msra.mxu0 0
      %1170 = vmatprep.subr.bf16.mxu0 0
      %1171 = vmatpush1.bf16.xpose.msra.mxu0 0
      %1172 = vmatprep.subr.bf16.mxu0 0
      %1173 = vmatpush1.bf16.xpose.msra.mxu0 %v1156
      %1174 = vmatprep.subr.bf16.mxu0 0
      %1175 = vmatpush2.bf16.xpose.msra.mxu0 0
      %1176 = vmatprep.subr.bf16.mxu0 0
      %1177 = vmatpush2.bf16.xpose.msra.mxu0 0
      %1178 = vmatprep.subr.bf16.mxu0 0
      %1179 = vmatpush2.bf16.xpose.msra.mxu0 0
      %1180 = vmatprep.subr.bf16.mxu0 0
      %1181 = vmatpush2.bf16.xpose.msra.mxu0 0
      %1182 = vmatprep.subr.bf16.mxu0 0
      %1183 = vmatpush2.bf16.xpose.msra.mxu0 0
      %1184 = vmatprep.subr.bf16.mxu0 0
      %1185 = vmatpush2.bf16.xpose.msra.mxu0 0
      %1186 = vmatprep.subr.bf16.mxu0 0
      %1187 = vmatpush2.bf16.xpose.msra.mxu0 0
      %1188 = vmatprep.subr.bf16.mxu0 0
      %1189 = vmatpush2.bf16.xpose.msra.mxu0 0
      %1190 = vmatprep.mubr.bf16.mxu0 0
      %1191 = vmatmul.mubr.bf16.gmra.mxu0 %v1153
      %v1192 = vpop.f32.mrf.mxu0
      %v1193 = vadd.f32 0.0, %v1192
      %v1194 = vpop.f32.mrf.mxu0
      %v1195 = vpop.f32.mrf.mxu0
      %v1196 = vpop.f32.mrf.mxu0
      %1197 = vdwg.mxu0
      %v1198 = vsel %vm677, %v1193, -inf
      %1199 = vmax.xlane.f32.xlu0 %v1198
      %v1200 = vpop.xlane.xlu0 %1199
      %v1201 = vsub.f32 %v1193, %v1200
      %v1202 = vmul.f32 %v1201, 1.442695
      %v1203 = vpow.pop %v1202
      %v1204 = vsel %vm677, %v1203, 0.0
      %1205 = vadd.xlane.f32.xlu0 %v1204
      %v1206 = vpop.xlane.xlu0 %1205
      %v1207 = vrcp.pop %v1206
      %v1208 = vpack.c.bf16 %v1203, %v1203
      %1209 = vrot.lane.b32.xlu0 %v676, 104
      %v1210 = vpop.permute.xlu0 %1209
      %v1212 = vsel %vm677, %v1208, 0
      %v1215 = vsel %vm738, %v1210, 0
      %1217 = vmatprep.subr.bf16.mxu0 0
      %1218 = vmatpush1.bf16.msra.mxu0 0
      %1219 = vmatprep.subr.bf16.mxu0 0
      %1220 = vmatpush1.bf16.msra.mxu0 0
      %1221 = vmatprep.subr.bf16.mxu0 0
      %1222 = vmatpush1.bf16.msra.mxu0 0
      %1223 = vmatprep.subr.bf16.mxu0 0
      %1224 = vmatpush1.bf16.msra.mxu0 0
      %1225 = vmatprep.subr.bf16.mxu0 0
      %1226 = vmatpush1.bf16.msra.mxu0 0
      %1227 = vmatprep.subr.bf16.mxu0 0
      %1228 = vmatpush1.bf16.msra.mxu0 0
      %1229 = vmatprep.subr.bf16.mxu0 0
      %1230 = vmatpush1.bf16.msra.mxu0 0
      %1231 = vmatprep.subr.bf16.mxu0 0
      %1232 = vmatpush1.bf16.msra.mxu0 %v1215
      %1233 = vmatprep.subr.bf16.mxu0 0
      %1234 = vmatpush2.bf16.msra.mxu0 0
      %1235 = vmatprep.subr.bf16.mxu0 0
      %1236 = vmatpush2.bf16.msra.mxu0 0
      %1237 = vmatprep.subr.bf16.mxu0 0
      %1238 = vmatpush2.bf16.msra.mxu0 0
      %1239 = vmatprep.subr.bf16.mxu0 0
      %1240 = vmatpush2.bf16.msra.mxu0 0
      %1241 = vmatprep.subr.bf16.mxu0 0
      %1242 = vmatpush2.bf16.msra.mxu0 0
      %1243 = vmatprep.subr.bf16.mxu0 0
      %1244 = vmatpush2.bf16.msra.mxu0 0
      %1245 = vmatprep.subr.bf16.mxu0 0
      %1246 = vmatpush2.bf16.msra.mxu0 0
      %1247 = vmatprep.subr.bf16.mxu0 0
      %1248 = vmatpush2.bf16.msra.mxu0 0
      %1249 = vmatprep.mubr.bf16.mxu0 0
      %1250 = vmatmul.mubr.bf16.gmra.mxu0 %v1212
      %v1251 = vpop.f32.mrf.mxu0
      %v1252 = vadd.f32 0.0, %v1251
      %v1253 = vpop.f32.mrf.mxu0
      %v1254 = vpop.f32.mrf.mxu0
      %v1255 = vpop.f32.mrf.mxu0
      %1256 = vdwg.mxu0
      %v1257 = vmul.f32 %v1252, %v1207
      %v1258 = vpack.c.bf16 %v1257, %v1257
      %v1260 = vsel %vm677, %v1258, 0
      %v1263 = vsel %vm738, %v673, 0
      %1265 = vmatprep.subr.bf16.mxu0 0
      %1266 = vmatpush1.bf16.msra.mxu0 0
      %1267 = vmatprep.subr.bf16.mxu0 0
      %1268 = vmatpush1.bf16.msra.mxu0 0
      %1269 = vmatprep.subr.bf16.mxu0 0
      %1270 = vmatpush1.bf16.msra.mxu0 0
      %1271 = vmatprep.subr.bf16.mxu0 0
      %1272 = vmatpush1.bf16.msra.mxu0 0
      %1273 = vmatprep.subr.bf16.mxu0 0
      %1274 = vmatpush1.bf16.msra.mxu0 0
      %1275 = vmatprep.subr.bf16.mxu0 0
      %1276 = vmatpush1.bf16.msra.mxu0 0
      %1277 = vmatprep.subr.bf16.mxu0 0
      %1278 = vmatpush1.bf16.msra.mxu0 0
      %1279 = vmatprep.subr.bf16.mxu0 0
      %1280 = vmatpush1.bf16.msra.mxu0 %v1263
      %1281 = vmatprep.subr.bf16.mxu0 0
      %1282 = vmatpush2.bf16.msra.mxu0 0
      %1283 = vmatprep.subr.bf16.mxu0 0
      %1284 = vmatpush2.bf16.msra.mxu0 0
      %1285 = vmatprep.subr.bf16.mxu0 0
      %1286 = vmatpush2.bf16.msra.mxu0 0
      %1287 = vmatprep.subr.bf16.mxu0 0
      %1288 = vmatpush2.bf16.msra.mxu0 0
      %1289 = vmatprep.subr.bf16.mxu0 0
      %1290 = vmatpush2.bf16.msra.mxu0 0
      %1291 = vmatprep.subr.bf16.mxu0 0
      %1292 = vmatpush2.bf16.msra.mxu0 0
      %1293 = vmatprep.subr.bf16.mxu0 0
      %1294 = vmatpush2.bf16.msra.mxu0 0
      %1295 = vmatprep.subr.bf16.mxu0 0
      %1296 = vmatpush2.bf16.msra.mxu0 0
      %1297 = vmatprep.mubr.bf16.mxu0 0
      %1298 = vmatmul.mubr.bf16.gmra.mxu0 %v1260
      %v1299 = vpop.f32.mrf.mxu0
      %v1300 = vadd.f32 0.0, %v1299
      %v1301 = vpop.f32.mrf.mxu0
      %v1302 = vpop.f32.mrf.mxu0
      %v1303 = vpop.f32.mrf.mxu0
      %1304 = vdwg.mxu0
      %v1305 = vadd.f32 %v1147, %v1300
      %v1306 = vld [vmem:[%s9] sm:$0x1]
      %v1308 = vlaneseq
      %v1309 = vshrl.u32 %v1308, 7
      %v1310 = vsub.s32 0, %v1309
      %v1311 = vrot.slane %v1306, %v1310
      %v1313 = vadd.f32 %v1305, %v1311
      %v1314 = vadd.f32 %v469, %v1313
      %v1315 = vsel %vm496, %v1314, 0.0
      %1316 = vadd.xlane.f32.xlu0 %v1315
      %v1317 = vpop.xlane.xlu0 %1316
      %v1318 = vrcp.pop 32.0
      %v1319 = vmul.f32 %v1317, %v1318
      %v1320 = vsub.f32 %v1314, %v1319
      %v1321 = vmul.f32 %v1320, %v1320
      %v1322 = vsel %vm496, %v1321, 0.0
      %1323 = vadd.xlane.f32.xlu0 %v1322
      %v1324 = vpop.xlane.xlu0 %1323
      %v1325 = vmul.f32 %v1324, %v1318
      %v1326 = vadd.f32 %v1325, 1e-05
      %v1327 = vrsqrt.pop %v1326
      %v1328 = vmul.f32 %v1320, %v1327
      %v1329 = vld [vmem:[%s10] sm:$0x1]
      %v1331 = vlaneseq
      %v1332 = vshrl.u32 %v1331, 7
      %v1333 = vsub.s32 0, %v1332
      %v1334 = vrot.slane %v1329, %v1333
      %v1336 = vmul.f32 %v1328, %v1334
      %v1337 = vld [vmem:[%s11] sm:$0x1]
      %v1339 = vlaneseq
      %v1340 = vshrl.u32 %v1339, 7
      %v1341 = vsub.s32 0, %v1340
      %v1342 = vrot.slane %v1337, %v1341
      %v1344 = vadd.f32 %v1336, %v1342
      %1345 = vst.msk [vmem:[%s467] sm:$0xff] %vm496, %v1344
      %p1346 = scmp.lt.s32.totalorder %s27, 1
      %s1347 = scalar_select %p1346, %s27, 1
      %p1348 = scmp.lt.s32.totalorder %s28, 0
      %s1349 = scalar_select %p1348, %s28, 0
      %s1350 = sadd.s32 %s1349, %s1347
      %s1351 = smul.addr %s1350, 8
      %s1352 = scalar_lea.vmem %s12, %s1351
      // Predicated region
      $region69: #{two_way_attention_block.4} parent=67 // pred_check
        %p1353 = pneg %p321
      $region70: #{two_way_attention_block.4} parent=67 // pred_check_branch
        %1355 = sbr.rel (%p1353) target = $region72
      $region71: #{two_way_attention_block.4} parent=67 // pred_region
        _
      $region72: #{two_way_attention_block.4} parent=67 // pred_fallthru
        _
    $region68: #{two_way_attention_block.4} parent=5 // pred_fallthru
      _
    %p1356 = scmp.le.s32.totalorder 2, %s18
    // Predicated region
    $region73: #{two_way_attention_block.4} parent=5 // pred_check
      %p1357 = pneg %p1356
    $region74: #{two_way_attention_block.4} parent=5 // pred_check_branch
      %1359 = sbr.rel (%p1357) target = $region76
    $region75: #{two_way_attention_block.4} parent=5 // pred_region
      %s1360 = ssub.s32 %s18, 2
      // Predicated region
      $region77: #{two_way_attention_block.4} parent=75 // pred_check
        %p1361 = pneg %p327
      $region78: #{two_way_attention_block.4} parent=75 // pred_check_branch
        %1363 = sbr.rel (%p1361) target = $region80
      $region79: #{two_way_attention_block.4} parent=75 // pred_region
        %p1364 = scmp.lt.s32.totalorder %s29, 1
        %s1365 = scalar_select %p1364, %s29, 1
        %p1366 = scmp.lt.s32.totalorder %s30, 0
        %s1367 = scalar_select %p1366, %s30, 0
        %s1368 = sadd.s32 %s1367, %s1365
        %s1369 = smul.addr %s1368, 8
        %s1370 = scalar_lea.vmem %s12, %s1369
      $region80: #{two_way_attention_block.4} parent=75 // pred_fallthru
        _
    $region76: #{two_way_attention_block.4} parent=5 // pred_fallthru
      _
  $region6: #{two_way_attention_block.4} parent=0 // loop_footer
    %s22 = sadd.s32 1, %s18
  $region7: #{two_way_attention_block.4} parent=0 // loop_footer_branch
    %17 = sbr.rel target = $region3
  $region8: #{two_way_attention_block.4} parent=0 // loop_exit
    _

// kernel: two_way_attention_block.6
$region0: #{two_way_attention_block.6}
  #allocation0 [shape = 'u32[]', space=smem, size = 0x4, offset = 0x4, fixed_abs, tag = 'smem constant byte address 0x4 - core index']
  #allocation1 [shape = 'u32[144,128]{1,0:T(1,128)}', space=vmem, size = 0x12000, scoped, tag = 'internal scratch']
  %s0 = inlined_call_operand.vmem [shape: f32[16,32], index: 0, kind: input, shape index: {}]
  %s1 = inlined_call_operand.vmem [shape: bf16[32,64], index: 1, kind: input, shape index: {}]
  %s2 = inlined_call_operand.vmem [shape: f32[1,64], index: 2, kind: input, shape index: {}]
  %s3 = inlined_call_operand.vmem [shape: bf16[64,32], index: 3, kind: input, shape index: {}]
  %s4 = inlined_call_operand.vmem [shape: f32[1,32], index: 4, kind: input, shape index: {}]
  %s5 = inlined_call_operand.vmem [shape: f32[1,32], index: 5, kind: input, shape index: {}]
  %s6 = inlined_call_operand.vmem [shape: f32[1,32], index: 6, kind: input, shape index: {}]
  %s7 = inlined_call_operand.vmem [shape: f32[16,32], index: 7, kind: output, shape index: {}]
  %s8 = sld [smem:[#allocation0]]
  $region38: #{two_way_attention_block.6} parent=0
    _
  %s10 = ssub.s32 1, %s8
  %s11 = scalar_select 0, %s10, %s8
  // Predicated region
  $region2: #{two_way_attention_block.6} parent=0 // pred_check
    _
  $region3: #{two_way_attention_block.6} parent=0 // pred_check_branch
    %13 = sbr.rel (0) target = $region5
  $region4: #{two_way_attention_block.6} parent=0 // pred_region
    _
  $region5: #{two_way_attention_block.6} parent=0 // pred_fallthru
    _
  // Predicated region
  $region6: #{two_way_attention_block.6} parent=0 // pred_check
    _
  $region7: #{two_way_attention_block.6} parent=0 // pred_check_branch
    %15 = sbr.rel (0) target = $region9
  $region8: #{two_way_attention_block.6} parent=0 // pred_region
    _
  $region9: #{two_way_attention_block.6} parent=0 // pred_fallthru
    _
  // Predicated region
  $region10: #{two_way_attention_block.6} parent=0 // pred_check
    _
  $region11: #{two_way_attention_block.6} parent=0 // pred_check_branch
    %17 = sbr.rel (0) target = $region13
  $region12: #{two_way_attention_block.6} parent=0 // pred_region
    _
  $region13: #{two_way_attention_block.6} parent=0 // pred_fallthru
    _
  // Predicated region
  $region14: #{two_way_attention_block.6} parent=0 // pred_check
    _
  $region15: #{two_way_attention_block.6} parent=0 // pred_check_branch
    %19 = sbr.rel (0) target = $region17
  $region16: #{two_way_attention_block.6} parent=0 // pred_region
    _
  $region17: #{two_way_attention_block.6} parent=0 // pred_fallthru
    _
  // Predicated region
  $region18: #{two_way_attention_block.6} parent=0 // pred_check
    _
  $region19: #{two_way_attention_block.6} parent=0 // pred_check_branch
    %21 = sbr.rel (0) target = $region21
  $region20: #{two_way_attention_block.6} parent=0 // pred_region
    _
  $region21: #{two_way_attention_block.6} parent=0 // pred_fallthru
    _
  // Predicated region
  $region22: #{two_way_attention_block.6} parent=0 // pred_check
    _
  $region23: #{two_way_attention_block.6} parent=0 // pred_check_branch
    %23 = sbr.rel (0) target = $region25
  $region24: #{two_way_attention_block.6} parent=0 // pred_region
    _
  $region25: #{two_way_attention_block.6} parent=0 // pred_fallthru
    _
  // Predicated region
  $region26: #{two_way_attention_block.6} parent=0 // pred_check
    _
  $region27: #{two_way_attention_block.6} parent=0 // pred_check_branch
    %25 = sbr.rel (0) target = $region29
  $region28: #{two_way_attention_block.6} parent=0 // pred_region
    _
  $region29: #{two_way_attention_block.6} parent=0 // pred_fallthru
    _
  %v27 = vld [vmem:[%s0] sm:$0xff]
  %v28 = vld [vmem:[%s0 + $0x8] sm:$0xff]
  %v29 = vpack.c.bf16 %v28, %v27
  %v30 = vld [vmem:[%s1] sm:$0xf]
  %v31 = vld [vmem:[%s1 + $0x4] sm:$0xf]
  %v32 = vld [vmem:[%s1 + $0x8] sm:$0xf]
  %v33 = vld [vmem:[%s1 + $0xc] sm:$0xf]
  %v34 = vld [vmem:[%s2] sm:$0x1]
  %v36 = vlaneseq
  %v37 = vshrl.u32 %v36, 7
  %v38 = vsub.s32 0, %v37
  %v39 = vrot.slane %v34, %v38
  %v45 = vunpack.c.l.b16 %v30
  %v46 = vunpack.c.l.b16 %v31
  %v47 = vunpack.c.l.b16 %v32
  %v48 = vunpack.c.l.b16 %v33
  %v49 = vpack.c.b16 %v46, %v45
  %v50 = vpack.c.b16 %v48, %v47
  %vm53 = vcmask 261120
  %v55 = vsel %vm53, %v29, 0
  %57 = vmatprep.subr.bf16.mxu0 0
  %58 = vmatpush1.bf16.msra.mxu0 0
  %59 = vmatprep.subr.bf16.mxu0 0
  %60 = vmatpush1.bf16.msra.mxu0 0
  %61 = vmatprep.subr.bf16.mxu0 0
  %62 = vmatpush1.bf16.msra.mxu0 0
  %63 = vmatprep.subr.bf16.mxu0 0
  %64 = vmatpush1.bf16.msra.mxu0 0
  %65 = vmatprep.subr.bf16.mxu0 0
  %66 = vmatpush1.bf16.msra.mxu0 0
  %67 = vmatprep.subr.bf16.mxu0 0
  %68 = vmatpush1.bf16.msra.mxu0 0
  %69 = vmatprep.subr.bf16.mxu0 0
  %70 = vmatpush1.bf16.msra.mxu0 %v50
  %71 = vmatprep.subr.bf16.mxu0 0
  %72 = vmatpush1.bf16.msra.mxu0 %v49
  %73 = vmatprep.subr.bf16.mxu0 0
  %74 = vmatpush2.bf16.msra.mxu0 0
  %75 = vmatprep.subr.bf16.mxu0 0
  %76 = vmatpush2.bf16.msra.mxu0 0
  %77 = vmatprep.subr.bf16.mxu0 0
  %78 = vmatpush2.bf16.msra.mxu0 0
  %79 = vmatprep.subr.bf16.mxu0 0
  %80 = vmatpush2.bf16.msra.mxu0 0
  %81 = vmatprep.subr.bf16.mxu0 0
  %82 = vmatpush2.bf16.msra.mxu0 0
  %83 = vmatprep.subr.bf16.mxu0 0
  %84 = vmatpush2.bf16.msra.mxu0 0
  %85 = vmatprep.subr.bf16.mxu0 0
  %86 = vmatpush2.bf16.msra.mxu0 0
  %87 = vmatprep.subr.bf16.mxu0 0
  %88 = vmatpush2.bf16.msra.mxu0 0
  %89 = vmatprep.mubr.bf16.mxu0 0
  %90 = vmatmul.mubr.bf16.gmra.mxu0 %v55
  %v91 = vpop.f32.mrf.mxu0
  %v92 = vadd.f32 %v39, %v91
  %v93 = vpop.f32.mrf.mxu0
  %v94 = vpop.f32.mrf.mxu0
  %v95 = vadd.f32 %v39, %v94
  %v96 = vpop.f32.mrf.mxu0
  %97 = vdwg.mxu0
  %v98 = vmax.f32 %v92, 0.0
  %v99 = vmax.f32 %v95, 0.0
  %v100 = vpack.c.bf16 %v99, %v98
  %v101 = vld [vmem:[%s3] sm:$0xf]
  %v102 = vld [vmem:[%s3 + $0x4] sm:$0xf]
  %v103 = vld [vmem:[%s3 + $0x8] sm:$0xf]
  %v104 = vld [vmem:[%s3 + $0xc] sm:$0xf]
  %v105 = vld [vmem:[%s3 + $0x10] sm:$0xf]
  %v106 = vld [vmem:[%s3 + $0x14] sm:$0xf]
  %v107 = vld [vmem:[%s3 + $0x18] sm:$0xf]
  %v108 = vld [vmem:[%s3 + $0x1c] sm:$0xf]
  %v109 = vld [vmem:[%s4] sm:$0x1]
  %v111 = vlaneseq
  %v112 = vshrl.u32 %v111, 7
  %v113 = vsub.s32 0, %v112
  %v114 = vrot.slane %v109, %v113
  %v124 = vunpack.c.l.b16 %v101
  %v125 = vunpack.c.l.b16 %v102
  %v126 = vunpack.c.l.b16 %v103
  %v127 = vunpack.c.l.b16 %v104
  %v128 = vunpack.c.l.b16 %v105
  %v129 = vunpack.c.l.b16 %v106
  %v130 = vunpack.c.l.b16 %v107
  %v131 = vunpack.c.l.b16 %v108
  %v132 = vpack.c.b16 %v125, %v124
  %v133 = vpack.c.b16 %v127, %v126
  %v134 = vpack.c.b16 %v129, %v128
  %v135 = vpack.c.b16 %v131, %v130
  %vm140 = vcmask 523264
  %v142 = vsel %vm140, %v100, 0
  %144 = vmatprep.subr.bf16.mxu0 0
  %145 = vmatpush1.bf16.msra.mxu0 0
  %146 = vmatprep.subr.bf16.mxu0 0
  %147 = vmatpush1.bf16.msra.mxu0 0
  %148 = vmatprep.subr.bf16.mxu0 0
  %149 = vmatpush1.bf16.msra.mxu0 0
  %150 = vmatprep.subr.bf16.mxu0 0
  %151 = vmatpush1.bf16.msra.mxu0 0
  %152 = vmatprep.subr.bf16.mxu0 0
  %153 = vmatpush1.bf16.msra.mxu0 %v135
  %154 = vmatprep.subr.bf16.mxu0 0
  %155 = vmatpush1.bf16.msra.mxu0 %v134
  %156 = vmatprep.subr.bf16.mxu0 0
  %157 = vmatpush1.bf16.msra.mxu0 %v133
  %158 = vmatprep.subr.bf16.mxu0 0
  %159 = vmatpush1.bf16.msra.mxu0 %v132
  %160 = vmatprep.subr.bf16.mxu0 0
  %161 = vmatpush2.bf16.msra.mxu0 0
  %162 = vmatprep.subr.bf16.mxu0 0
  %163 = vmatpush2.bf16.msra.mxu0 0
  %164 = vmatprep.subr.bf16.mxu0 0
  %165 = vmatpush2.bf16.msra.mxu0 0
  %166 = vmatprep.subr.bf16.mxu0 0
  %167 = vmatpush2.bf16.msra.mxu0 0
  %168 = vmatprep.subr.bf16.mxu0 0
  %169 = vmatpush2.bf16.msra.mxu0 0
  %170 = vmatprep.subr.bf16.mxu0 0
  %171 = vmatpush2.bf16.msra.mxu0 0
  %172 = vmatprep.subr.bf16.mxu0 0
  %173 = vmatpush2.bf16.msra.mxu0 0
  %174 = vmatprep.subr.bf16.mxu0 0
  %175 = vmatpush2.bf16.msra.mxu0 0
  %176 = vmatprep.mubr.bf16.mxu0 0
  %177 = vmatmul.mubr.bf16.gmra.mxu0 %v142
  %v178 = vpop.f32.mrf.mxu0
  %v179 = vadd.f32 %v114, %v178
  %v180 = vpop.f32.mrf.mxu0
  %v181 = vpop.f32.mrf.mxu0
  %v182 = vadd.f32 %v114, %v181
  %v183 = vpop.f32.mrf.mxu0
  %184 = vdwg.mxu0
  %v185 = vadd.f32 %v27, %v179
  %v186 = vadd.f32 %v28, %v182
  %v187 = vsel %vm53, %v185, 0.0
  %188 = vadd.xlane.f32.xlu0 %v187
  %v189 = vpop.xlane.xlu0 %188
  %v190 = vsel %vm53, %v186, 0.0
  %191 = vadd.xlane.f32.xlu0 %v190
  %v192 = vpop.xlane.xlu0 %191
  %v193 = vrcp.pop 32.0
  %v194 = vmul.f32 %v189, %v193
  %v195 = vmul.f32 %v192, %v193
  %v196 = vsub.f32 %v185, %v194
  %v197 = vsub.f32 %v186, %v195
  %v198 = vmul.f32 %v196, %v196
  %v199 = vmul.f32 %v197, %v197
  %v200 = vsel %vm53, %v198, 0.0
  %201 = vadd.xlane.f32.xlu0 %v200
  %v202 = vpop.xlane.xlu0 %201
  %v203 = vsel %vm53, %v199, 0.0
  %204 = vadd.xlane.f32.xlu0 %v203
  %v205 = vpop.xlane.xlu0 %204
  %v206 = vmul.f32 %v202, %v193
  %v207 = vmul.f32 %v205, %v193
  %v208 = vadd.f32 %v206, 1e-05
  %v209 = vadd.f32 %v207, 1e-05
  %v210 = vrsqrt.pop %v208
  %v211 = vrsqrt.pop %v209
  %v212 = vmul.f32 %v196, %v210
  %v213 = vmul.f32 %v197, %v211
  %v214 = vld [vmem:[%s5] sm:$0x1]
  %v216 = vlaneseq
  %v217 = vshrl.u32 %v216, 7
  %v218 = vsub.s32 0, %v217
  %v219 = vrot.slane %v214, %v218
  %v221 = vmul.f32 %v212, %v219
  %v222 = vmul.f32 %v213, %v219
  %v223 = vld [vmem:[%s6] sm:$0x1]
  %v225 = vlaneseq
  %v226 = vshrl.u32 %v225, 7
  %v227 = vsub.s32 0, %v226
  %v228 = vrot.slane %v223, %v227
  %v230 = vadd.f32 %v221, %v228
  %v231 = vadd.f32 %v222, %v228
  %232 = vst.msk [vmem:[%s7] sm:$0xff] %vm53, %v230
  %233 = vst.msk [vmem:[%s7 + $0x8] sm:$0xff] %vm53, %v231
  // Predicated region
  $region30: #{two_way_attention_block.6} parent=0 // pred_check
    _
  $region31: #{two_way_attention_block.6} parent=0 // pred_check_branch
    %235 = sbr.rel (0) target = $region33
  $region32: #{two_way_attention_block.6} parent=0 // pred_region
    _
  $region33: #{two_way_attention_block.6} parent=0 // pred_fallthru
    _
  // Predicated region
  $region34: #{two_way_attention_block.6} parent=0 // pred_check
    _
  $region35: #{two_way_attention_block.6} parent=0 // pred_check_branch
    %237 = sbr.rel (0) target = $region37
  $region36: #{two_way_attention_block.6} parent=0 // pred_region
    _
  $region37: #{two_way_attention_block.6} parent=0 // pred_fallthru
    _

// kernel: two_way_attention_block.5
$region0: #{two_way_attention_block.5}
  #allocation0 [shape = 'u32[]', space=smem, size = 0x4, offset = 0x4, fixed_abs, tag = 'smem constant byte address 0x4 - core index']
  #allocation1 [shape = 'u32[144,128]{1,0:T(1,128)}', space=vmem, size = 0x12000, scoped, tag = 'internal scratch']
  %s0 = inlined_call_operand.vmem [shape: f32[2,8,32], index: 0, kind: input, shape index: {}]
  %s1 = inlined_call_operand.vmem [shape: f32[2,8,32], index: 1, kind: input, shape index: {}]
  %s2 = inlined_call_operand.vmem [shape: f32[2,16,32], index: 2, kind: input, shape index: {}]
  %s3 = inlined_call_operand.vmem [shape: f32[2,16,32], index: 3, kind: input, shape index: {}]
  %s4 = inlined_call_operand.vmem [shape: bf16[32,16], index: 4, kind: input, shape index: {}]
  %s5 = inlined_call_operand.vmem [shape: f32[1,16], index: 5, kind: input, shape index: {}]
  %s6 = inlined_call_operand.vmem [shape: bf16[32,16], index: 6, kind: input, shape index: {}]
  %s7 = inlined_call_operand.vmem [shape: f32[1,16], index: 7, kind: input, shape index: {}]
  %s8 = inlined_call_operand.vmem [shape: bf16[32,16], index: 8, kind: input, shape index: {}]
  %s9 = inlined_call_operand.vmem [shape: f32[1,16], index: 9, kind: input, shape index: {}]
  %s10 = inlined_call_operand.vmem [shape: bf16[16,32], index: 10, kind: input, shape index: {}]
  %s11 = inlined_call_operand.vmem [shape: f32[1,32], index: 11, kind: input, shape index: {}]
  %s12 = inlined_call_operand.vmem [shape: f32[1,32], index: 12, kind: input, shape index: {}]
  %s13 = inlined_call_operand.vmem [shape: f32[1,32], index: 13, kind: input, shape index: {}]
  %s14 = inlined_call_operand.vmem [shape: f32[2,8,32], index: 14, kind: output, shape index: {}]
  %s15 = sld [smem:[#allocation0]]
  $region89: #{two_way_attention_block.5} parent=0
    _
  %s17 = ssub.s32 1, %s15
  %s18 = scalar_select 0, %s17, %s15
  loop: start=0, step=1, limit=4
  $region2: #{two_way_attention_block.5} parent=0 // loop_pre_header
    _
  $region3: #{two_way_attention_block.5} parent=0 // loop_header
    %s20 = sphi 0, %s24
    %p21 = scmp.ge.s32.totalorder %s20, 4
    %s27 = sphi 0, %s39
    %s28 = sphi 0, %s35
    %s29 = sphi 0, %s27
    %s30 = sphi 0, %s28
    %s31 = sphi 0, %s29
    %s32 = sphi 0, %s30
    %s44 = sphi 0, %s46
    %s47 = sphi 0, %s44
    %s48 = sphi 0, %s47
    %s64 = sphi 0, %s48
    %s72 = sphi 0, %s74
    %s75 = sphi 0, %s72
    %s76 = sphi 0, %s75
    %s92 = sphi 0, %s76
    %s98 = sphi 0, %s100
    %s101 = sphi 0, %s98
    %s102 = sphi 0, %s101
    %s118 = sphi 0, %s102
    %s124 = sphi 0, %s126
    %s127 = sphi 0, %s124
    %s128 = sphi 0, %s127
    %s144 = sphi 0, %s128
    %s148 = sphi 0, %s148
    %s150 = sphi 0, %s148
    %s151 = sphi 0, %s150
    %s165 = sphi 0, %s151
    %s169 = sphi 0, %s169
    %s171 = sphi 0, %s169
    %s172 = sphi 0, %s171
    %s186 = sphi 0, %s172
    %s190 = sphi 0, %s190
    %s192 = sphi 0, %s190
    %s193 = sphi 0, %s192
    %s207 = sphi 0, %s193
    %s211 = sphi 0, %s211
    %s213 = sphi 0, %s211
    %s214 = sphi 0, %s213
    %s228 = sphi 0, %s214
    %s232 = sphi 0, %s232
    %s234 = sphi 0, %s232
    %s235 = sphi 0, %s234
    %s249 = sphi 0, %s235
    %s253 = sphi 0, %s253
    %s255 = sphi 0, %s253
    %s256 = sphi 0, %s255
    %s270 = sphi 0, %s256
    %s274 = sphi 0, %s274
    %s276 = sphi 0, %s274
    %s277 = sphi 0, %s276
    %s291 = sphi 0, %s277
    %s295 = sphi 0, %s295
    %s297 = sphi 0, %s295
    %s298 = sphi 0, %s297
    %s312 = sphi 0, %s298
    %s316 = sphi 0, %s316
    %s318 = sphi 0, %s316
    %s319 = sphi 0, %s318
    %s333 = sphi 0, %s319
    %s337 = sphi 0, %s337
    %s339 = sphi 0, %s337
    %s340 = sphi 0, %s339
    %s354 = sphi 0, %s340
    %s362 = sphi 0, %s364
    %s365 = sphi 0, %s362
    %s366 = sphi 0, %s365
    %s382 = sphi 0, %s366
  $region4: #{two_way_attention_block.5} parent=0 // loop_header_branch
    %23 = sbr.rel (%p21) target = $region8
  $region5: #{two_way_attention_block.5} parent=0 // loop_body
    %s25 = ssub.s32 %s20, 1
    %s26 = ssub.s32 %s20, 2
    %s33 = sadd.s32 1, %s28
    %p34 = scmp.ge.s32.totalorder %s33, 1
    %s35 = scalar_select %p34, 0, %s33
    %s36 = sadd.s32 1, %s27
    %s37 = scalar_select %p34, %s36, %s27
    %p38 = scmp.ge.s32.totalorder %s37, 2
    %s39 = scalar_select %p38, 0, %s37
    %s40 = ssub.s32 %s27, %s39
    %s41 = ssub.s32 %s28, %s35
    %s42 = sor.u32 %s40, %s41
    %p43 = scmp.eq.s32.totalorder %s42, 0
    %s45 = sadd.s32 %s44, 1
    %s46 = scalar_select %p43, %s44, %s45
    %p49 = pneg %p43
    %p50 = scmp.eq.s32.totalorder %s20, 1
    %p51 = por %p49, %p50
    %p52 = scmp.ne.s32.totalorder %s44, %s47
    %p53 = scmp.eq.s32.totalorder %s20, 0
    %p54 = por %p52, %p53
    %p55 = scmp.ne.s32.totalorder %s44, %s47
    %p56 = scmp.eq.s32.totalorder %s25, 1
    %p57 = por %p55, %p56
    %p58 = scmp.ne.s32.totalorder %s47, %s48
    %p59 = scmp.eq.s32.totalorder %s25, 0
    %p60 = por %p58, %p59
    %p61 = scmp.ne.s32.totalorder %s47, %s48
    %p62 = scmp.eq.s32.totalorder %s26, 1
    %p63 = por %p61, %p62
    %p65 = scmp.ne.s32.totalorder %s48, %s64
    %p66 = scmp.eq.s32.totalorder %s26, 0
    %p67 = por %p65, %p66
    %s68 = ssub.s32 %s27, %s39
    %s69 = ssub.s32 %s28, %s35
    %s70 = sor.u32 %s68, %s69
    %p71 = scmp.eq.s32.totalorder %s70, 0
    %s73 = sadd.s32 %s72, 1
    %s74 = scalar_select %p71, %s72, %s73
    %p77 = pneg %p71
    %p78 = scmp.eq.s32.totalorder %s20, 1
    %p79 = por %p77, %p78
    %p80 = scmp.ne.s32.totalorder %s72, %s75
    %p81 = scmp.eq.s32.totalorder %s20, 0
    %p82 = por %p80, %p81
    %p83 = scmp.ne.s32.totalorder %s72, %s75
    %p84 = scmp.eq.s32.totalorder %s25, 1
    %p85 = por %p83, %p84
    %p86 = scmp.ne.s32.totalorder %s75, %s76
    %p87 = scmp.eq.s32.totalorder %s25, 0
    %p88 = por %p86, %p87
    %p89 = scmp.ne.s32.totalorder %s75, %s76
    %p90 = scmp.eq.s32.totalorder %s26, 1
    %p91 = por %p89, %p90
    %p93 = scmp.ne.s32.totalorder %s76, %s92
    %p94 = scmp.eq.s32.totalorder %s26, 0
    %p95 = por %p93, %p94
    %s96 = ssub.s32 %s27, %s39
    %p97 = scmp.eq.s32.totalorder %s96, 0
    %s99 = sadd.s32 %s98, 1
    %s100 = scalar_select %p97, %s98, %s99
    %p103 = pneg %p97
    %p104 = scmp.eq.s32.totalorder %s20, 1
    %p105 = por %p103, %p104
    %p106 = scmp.ne.s32.totalorder %s98, %s101
    %p107 = scmp.eq.s32.totalorder %s20, 0
    %p108 = por %p106, %p107
    %p109 = scmp.ne.s32.totalorder %s98, %s101
    %p110 = scmp.eq.s32.totalorder %s25, 1
    %p111 = por %p109, %p110
    %p112 = scmp.ne.s32.totalorder %s101, %s102
    %p113 = scmp.eq.s32.totalorder %s25, 0
    %p114 = por %p112, %p113
    %p115 = scmp.ne.s32.totalorder %s101, %s102
    %p116 = scmp.eq.s32.totalorder %s26, 1
    %p117 = por %p115, %p116
    %p119 = scmp.ne.s32.totalorder %s102, %s118
    %p120 = scmp.eq.s32.totalorder %s26, 0
    %p121 = por %p119, %p120
    %s122 = ssub.s32 %s27, %s39
    %p123 = scmp.eq.s32.totalorder %s122, 0
    %s125 = sadd.s32 %s124, 1
    %s126 = scalar_select %p123, %s124, %s125
    %p129 = pneg %p123
    %p130 = scmp.eq.s32.totalorder %s20, 1
    %p131 = por %p129, %p130
    %p132 = scmp.ne.s32.totalorder %s124, %s127
    %p133 = scmp.eq.s32.totalorder %s20, 0
    %p134 = por %p132, %p133
    %p135 = scmp.ne.s32.totalorder %s124, %s127
    %p136 = scmp.eq.s32.totalorder %s25, 1
    %p137 = por %p135, %p136
    %p138 = scmp.ne.s32.totalorder %s127, %s128
    %p139 = scmp.eq.s32.totalorder %s25, 0
    %p140 = por %p138, %p139
    %p141 = scmp.ne.s32.totalorder %s127, %s128
    %p142 = scmp.eq.s32.totalorder %s26, 1
    %p143 = por %p141, %p142
    %p145 = scmp.ne.s32.totalorder %s128, %s144
    %p146 = scmp.eq.s32.totalorder %s26, 0
    %p147 = por %p145, %p146
    %s149 = sadd.s32 %s148, 1
    %p152 = scmp.eq.s32.totalorder %s20, 1
    %p153 = scmp.ne.s32.totalorder %s148, %s150
    %p154 = scmp.eq.s32.totalorder %s20, 0
    %p155 = por %p153, %p154
    %p156 = scmp.ne.s32.totalorder %s148, %s150
    %p157 = scmp.eq.s32.totalorder %s25, 1
    %p158 = por %p156, %p157
    %p159 = scmp.ne.s32.totalorder %s150, %s151
    %p160 = scmp.eq.s32.totalorder %s25, 0
    %p161 = por %p159, %p160
    %p162 = scmp.ne.s32.totalorder %s150, %s151
    %p163 = scmp.eq.s32.totalorder %s26, 1
    %p164 = por %p162, %p163
    %p166 = scmp.ne.s32.totalorder %s151, %s165
    %p167 = scmp.eq.s32.totalorder %s26, 0
    %p168 = por %p166, %p167
    %s170 = sadd.s32 %s169, 1
    %p173 = scmp.eq.s32.totalorder %s20, 1
    %p174 = scmp.ne.s32.totalorder %s169, %s171
    %p175 = scmp.eq.s32.totalorder %s20, 0
    %p176 = por %p174, %p175
    %p177 = scmp.ne.s32.totalorder %s169, %s171
    %p178 = scmp.eq.s32.totalorder %s25, 1
    %p179 = por %p177, %p178
    %p180 = scmp.ne.s32.totalorder %s171, %s172
    %p181 = scmp.eq.s32.totalorder %s25, 0
    %p182 = por %p180, %p181
    %p183 = scmp.ne.s32.totalorder %s171, %s172
    %p184 = scmp.eq.s32.totalorder %s26, 1
    %p185 = por %p183, %p184
    %p187 = scmp.ne.s32.totalorder %s172, %s186
    %p188 = scmp.eq.s32.totalorder %s26, 0
    %p189 = por %p187, %p188
    %s191 = sadd.s32 %s190, 1
    %p194 = scmp.eq.s32.totalorder %s20, 1
    %p195 = scmp.ne.s32.totalorder %s190, %s192
    %p196 = scmp.eq.s32.totalorder %s20, 0
    %p197 = por %p195, %p196
    %p198 = scmp.ne.s32.totalorder %s190, %s192
    %p199 = scmp.eq.s32.totalorder %s25, 1
    %p200 = por %p198, %p199
    %p201 = scmp.ne.s32.totalorder %s192, %s193
    %p202 = scmp.eq.s32.totalorder %s25, 0
    %p203 = por %p201, %p202
    %p204 = scmp.ne.s32.totalorder %s192, %s193
    %p205 = scmp.eq.s32.totalorder %s26, 1
    %p206 = por %p204, %p205
    %p208 = scmp.ne.s32.totalorder %s193, %s207
    %p209 = scmp.eq.s32.totalorder %s26, 0
    %p210 = por %p208, %p209
    %s212 = sadd.s32 %s211, 1
    %p215 = scmp.eq.s32.totalorder %s20, 1
    %p216 = scmp.ne.s32.totalorder %s211, %s213
    %p217 = scmp.eq.s32.totalorder %s20, 0
    %p218 = por %p216, %p217
    %p219 = scmp.ne.s32.totalorder %s211, %s213
    %p220 = scmp.eq.s32.totalorder %s25, 1
    %p221 = por %p219, %p220
    %p222 = scmp.ne.s32.totalorder %s213, %s214
    %p223 = scmp.eq.s32.totalorder %s25, 0
    %p224 = por %p222, %p223
    %p225 = scmp.ne.s32.totalorder %s213, %s214
    %p226 = scmp.eq.s32.totalorder %s26, 1
    %p227 = por %p225, %p226
    %p229 = scmp.ne.s32.totalorder %s214, %s228
    %p230 = scmp.eq.s32.totalorder %s26, 0
    %p231 = por %p229, %p230
    %s233 = sadd.s32 %s232, 1
    %p236 = scmp.eq.s32.totalorder %s20, 1
    %p237 = scmp.ne.s32.totalorder %s232, %s234
    %p238 = scmp.eq.s32.totalorder %s20, 0
    %p239 = por %p237, %p238
    %p240 = scmp.ne.s32.totalorder %s232, %s234
    %p241 = scmp.eq.s32.totalorder %s25, 1
    %p242 = por %p240, %p241
    %p243 = scmp.ne.s32.totalorder %s234, %s235
    %p244 = scmp.eq.s32.totalorder %s25, 0
    %p245 = por %p243, %p244
    %p246 = scmp.ne.s32.totalorder %s234, %s235
    %p247 = scmp.eq.s32.totalorder %s26, 1
    %p248 = por %p246, %p247
    %p250 = scmp.ne.s32.totalorder %s235, %s249
    %p251 = scmp.eq.s32.totalorder %s26, 0
    %p252 = por %p250, %p251
    %s254 = sadd.s32 %s253, 1
    %p257 = scmp.eq.s32.totalorder %s20, 1
    %p258 = scmp.ne.s32.totalorder %s253, %s255
    %p259 = scmp.eq.s32.totalorder %s20, 0
    %p260 = por %p258, %p259
    %p261 = scmp.ne.s32.totalorder %s253, %s255
    %p262 = scmp.eq.s32.totalorder %s25, 1
    %p263 = por %p261, %p262
    %p264 = scmp.ne.s32.totalorder %s255, %s256
    %p265 = scmp.eq.s32.totalorder %s25, 0
    %p266 = por %p264, %p265
    %p267 = scmp.ne.s32.totalorder %s255, %s256
    %p268 = scmp.eq.s32.totalorder %s26, 1
    %p269 = por %p267, %p268
    %p271 = scmp.ne.s32.totalorder %s256, %s270
    %p272 = scmp.eq.s32.totalorder %s26, 0
    %p273 = por %p271, %p272
    %s275 = sadd.s32 %s274, 1
    %p278 = scmp.eq.s32.totalorder %s20, 1
    %p279 = scmp.ne.s32.totalorder %s274, %s276
    %p280 = scmp.eq.s32.totalorder %s20, 0
    %p281 = por %p279, %p280
    %p282 = scmp.ne.s32.totalorder %s274, %s276
    %p283 = scmp.eq.s32.totalorder %s25, 1
    %p284 = por %p282, %p283
    %p285 = scmp.ne.s32.totalorder %s276, %s277
    %p286 = scmp.eq.s32.totalorder %s25, 0
    %p287 = por %p285, %p286
    %p288 = scmp.ne.s32.totalorder %s276, %s277
    %p289 = scmp.eq.s32.totalorder %s26, 1
    %p290 = por %p288, %p289
    %p292 = scmp.ne.s32.totalorder %s277, %s291
    %p293 = scmp.eq.s32.totalorder %s26, 0
    %p294 = por %p292, %p293
    %s296 = sadd.s32 %s295, 1
    %p299 = scmp.eq.s32.totalorder %s20, 1
    %p300 = scmp.ne.s32.totalorder %s295, %s297
    %p301 = scmp.eq.s32.totalorder %s20, 0
    %p302 = por %p300, %p301
    %p303 = scmp.ne.s32.totalorder %s295, %s297
    %p304 = scmp.eq.s32.totalorder %s25, 1
    %p305 = por %p303, %p304
    %p306 = scmp.ne.s32.totalorder %s297, %s298
    %p307 = scmp.eq.s32.totalorder %s25, 0
    %p308 = por %p306, %p307
    %p309 = scmp.ne.s32.totalorder %s297, %s298
    %p310 = scmp.eq.s32.totalorder %s26, 1
    %p311 = por %p309, %p310
    %p313 = scmp.ne.s32.totalorder %s298, %s312
    %p314 = scmp.eq.s32.totalorder %s26, 0
    %p315 = por %p313, %p314
    %s317 = sadd.s32 %s316, 1
    %p320 = scmp.eq.s32.totalorder %s20, 1
    %p321 = scmp.ne.s32.totalorder %s316, %s318
    %p322 = scmp.eq.s32.totalorder %s20, 0
    %p323 = por %p321, %p322
    %p324 = scmp.ne.s32.totalorder %s316, %s318
    %p325 = scmp.eq.s32.totalorder %s25, 1
    %p326 = por %p324, %p325
    %p327 = scmp.ne.s32.totalorder %s318, %s319
    %p328 = scmp.eq.s32.totalorder %s25, 0
    %p329 = por %p327, %p328
    %p330 = scmp.ne.s32.totalorder %s318, %s319
    %p331 = scmp.eq.s32.totalorder %s26, 1
    %p332 = por %p330, %p331
    %p334 = scmp.ne.s32.totalorder %s319, %s333
    %p335 = scmp.eq.s32.totalorder %s26, 0
    %p336 = por %p334, %p335
    %s338 = sadd.s32 %s337, 1
    %p341 = scmp.eq.s32.totalorder %s20, 1
    %p342 = scmp.ne.s32.totalorder %s337, %s339
    %p343 = scmp.eq.s32.totalorder %s20, 0
    %p344 = por %p342, %p343
    %p345 = scmp.ne.s32.totalorder %s337, %s339
    %p346 = scmp.eq.s32.totalorder %s25, 1
    %p347 = por %p345, %p346
    %p348 = scmp.ne.s32.totalorder %s339, %s340
    %p349 = scmp.eq.s32.totalorder %s25, 0
    %p350 = por %p348, %p349
    %p351 = scmp.ne.s32.totalorder %s339, %s340
    %p352 = scmp.eq.s32.totalorder %s26, 1
    %p353 = por %p351, %p352
    %p355 = scmp.ne.s32.totalorder %s340, %s354
    %p356 = scmp.eq.s32.totalorder %s26, 0
    %p357 = por %p355, %p356
    %s358 = ssub.s32 %s27, %s39
    %s359 = ssub.s32 %s28, %s35
    %s360 = sor.u32 %s358, %s359
    %p361 = scmp.eq.s32.totalorder %s360, 0
    %s363 = sadd.s32 %s362, 1
    %s364 = scalar_select %p361, %s362, %s363
    %p367 = pneg %p361
    %p368 = scmp.eq.s32.totalorder %s20, 1
    %p369 = por %p367, %p368
    %p370 = scmp.ne.s32.totalorder %s362, %s365
    %p371 = scmp.eq.s32.totalorder %s20, 0
    %p372 = por %p370, %p371
    %p373 = scmp.ne.s32.totalorder %s362, %s365
    %p374 = scmp.eq.s32.totalorder %s25, 1
    %p375 = por %p373, %p374
    %p376 = scmp.ne.s32.totalorder %s365, %s366
    %p377 = scmp.eq.s32.totalorder %s25, 0
    %p378 = por %p376, %p377
    %p379 = scmp.ne.s32.totalorder %s365, %s366
    %p380 = scmp.eq.s32.totalorder %s26, 1
    %p381 = por %p379, %p380
    %p383 = scmp.ne.s32.totalorder %s366, %s382
    %p384 = scmp.eq.s32.totalorder %s26, 0
    %p385 = por %p383, %p384
    %p386 = scmp.le.s32.totalorder 1, %s20
    %p387 = scmp.lt.s32.totalorder %s20, 3
    %p388 = pnand %p386, %p387
    %p389 = pneg %p388
    // Predicated region
    $region9: #{two_way_attention_block.5} parent=5 // pred_check
      _
    $region10: #{two_way_attention_block.5} parent=5 // pred_check_branch
      %391 = sbr.rel (%p388) target = $region12
    $region11: #{two_way_attention_block.5} parent=5 // pred_region
      %s392 = ssub.s32 %s20, 1
      // Predicated region
      $region13: #{two_way_attention_block.5} parent=11 // pred_check
        %p393 = pneg %p161
      $region14: #{two_way_attention_block.5} parent=11 // pred_check_branch
        %395 = sbr.rel (%p393) target = $region16
      $region15: #{two_way_attention_block.5} parent=11 // pred_region
        _
      $region16: #{two_way_attention_block.5} parent=11 // pred_fallthru
        _
      // Predicated region
      $region17: #{two_way_attention_block.5} parent=11 // pred_check
        %p396 = pneg %p182
      $region18: #{two_way_attention_block.5} parent=11 // pred_check_branch
        %398 = sbr.rel (%p396) target = $region20
      $region19: #{two_way_attention_block.5} parent=11 // pred_region
        _
      $region20: #{two_way_attention_block.5} parent=11 // pred_fallthru
        _
      // Predicated region
      $region21: #{two_way_attention_block.5} parent=11 // pred_check
        %p399 = pneg %p203
      $region22: #{two_way_attention_block.5} parent=11 // pred_check_branch
        %401 = sbr.rel (%p399) target = $region24
      $region23: #{two_way_attention_block.5} parent=11 // pred_region
        _
      $region24: #{two_way_attention_block.5} parent=11 // pred_fallthru
        _
      // Predicated region
      $region25: #{two_way_attention_block.5} parent=11 // pred_check
        %p402 = pneg %p224
      $region26: #{two_way_attention_block.5} parent=11 // pred_check_branch
        %404 = sbr.rel (%p402) target = $region28
      $region27: #{two_way_attention_block.5} parent=11 // pred_region
        _
      $region28: #{two_way_attention_block.5} parent=11 // pred_fallthru
        _
      // Predicated region
      $region29: #{two_way_attention_block.5} parent=11 // pred_check
        %p405 = pneg %p245
      $region30: #{two_way_attention_block.5} parent=11 // pred_check_branch
        %407 = sbr.rel (%p405) target = $region32
      $region31: #{two_way_attention_block.5} parent=11 // pred_region
        _
      $region32: #{two_way_attention_block.5} parent=11 // pred_fallthru
        _
      // Predicated region
      $region33: #{two_way_attention_block.5} parent=11 // pred_check
        %p408 = pneg %p266
      $region34: #{two_way_attention_block.5} parent=11 // pred_check_branch
        %410 = sbr.rel (%p408) target = $region36
      $region35: #{two_way_attention_block.5} parent=11 // pred_region
        _
      $region36: #{two_way_attention_block.5} parent=11 // pred_fallthru
        _
      // Predicated region
      $region37: #{two_way_attention_block.5} parent=11 // pred_check
        %p411 = pneg %p287
      $region38: #{two_way_attention_block.5} parent=11 // pred_check_branch
        %413 = sbr.rel (%p411) target = $region40
      $region39: #{two_way_attention_block.5} parent=11 // pred_region
        _
      $region40: #{two_way_attention_block.5} parent=11 // pred_fallthru
        _
      // Predicated region
      $region41: #{two_way_attention_block.5} parent=11 // pred_check
        %p414 = pneg %p308
      $region42: #{two_way_attention_block.5} parent=11 // pred_check_branch
        %416 = sbr.rel (%p414) target = $region44
      $region43: #{two_way_attention_block.5} parent=11 // pred_region
        _
      $region44: #{two_way_attention_block.5} parent=11 // pred_fallthru
        _
      // Predicated region
      $region45: #{two_way_attention_block.5} parent=11 // pred_check
        %p417 = pneg %p329
      $region46: #{two_way_attention_block.5} parent=11 // pred_check_branch
        %419 = sbr.rel (%p417) target = $region48
      $region47: #{two_way_attention_block.5} parent=11 // pred_region
        _
      $region48: #{two_way_attention_block.5} parent=11 // pred_fallthru
        _
      // Predicated region
      $region49: #{two_way_attention_block.5} parent=11 // pred_check
        %p420 = pneg %p350
      $region50: #{two_way_attention_block.5} parent=11 // pred_check_branch
        %422 = sbr.rel (%p420) target = $region52
      $region51: #{two_way_attention_block.5} parent=11 // pred_region
        _
      $region52: #{two_way_attention_block.5} parent=11 // pred_fallthru
        _
    $region12: #{two_way_attention_block.5} parent=5 // pred_fallthru
      _
    %p423 = scmp.lt.s32.totalorder %s20, 2
    // Predicated region
    $region53: #{two_way_attention_block.5} parent=5 // pred_check
      %p424 = pneg %p423
    $region54: #{two_way_attention_block.5} parent=5 // pred_check_branch
      %426 = sbr.rel (%p424) target = $region56
    $region55: #{two_way_attention_block.5} parent=5 // pred_region
      // Predicated region
      $region57: #{two_way_attention_block.5} parent=55 // pred_check
        %p427 = pneg %p54
      $region58: #{two_way_attention_block.5} parent=55 // pred_check_branch
        %429 = sbr.rel (%p427) target = $region60
      $region59: #{two_way_attention_block.5} parent=55 // pred_region
        %p430 = scmp.lt.s32.totalorder %s27, 1
        %s431 = scalar_select %p430, %s27, 1
        %p432 = scmp.lt.s32.totalorder %s28, 0
        %s433 = scalar_select %p432, %s28, 0
        %s434 = sadd.s32 %s433, %s431
        %s435 = smul.addr %s434, 8
        %s436 = scalar_lea.vmem %s0, %s435
      $region60: #{two_way_attention_block.5} parent=55 // pred_fallthru
        _
      // Predicated region
      $region61: #{two_way_attention_block.5} parent=55 // pred_check
        %p437 = pneg %p82
      $region62: #{two_way_attention_block.5} parent=55 // pred_check_branch
        %439 = sbr.rel (%p437) target = $region64
      $region63: #{two_way_attention_block.5} parent=55 // pred_region
        %p440 = scmp.lt.s32.totalorder %s27, 1
        %s441 = scalar_select %p440, %s27, 1
        %p442 = scmp.lt.s32.totalorder %s28, 0
        %s443 = scalar_select %p442, %s28, 0
        %s444 = sadd.s32 %s443, %s441
        %s445 = smul.addr %s444, 8
        %s446 = scalar_lea.vmem %s1, %s445
      $region64: #{two_way_attention_block.5} parent=55 // pred_fallthru
        _
      // Predicated region
      $region65: #{two_way_attention_block.5} parent=55 // pred_check
        %p447 = pneg %p108
      $region66: #{two_way_attention_block.5} parent=55 // pred_check_branch
        %449 = sbr.rel (%p447) target = $region68
      $region67: #{two_way_attention_block.5} parent=55 // pred_region
        %p450 = scmp.lt.s32.totalorder %s27, 1
        %s451 = scalar_select %p450, %s27, 1
        %s452 = smul.addr %s451, 2
        %s453 = smul.addr %s452, 8
        %s454 = scalar_lea.vmem %s2, %s453
      $region68: #{two_way_attention_block.5} parent=55 // pred_fallthru
        _
      // Predicated region
      $region69: #{two_way_attention_block.5} parent=55 // pred_check
        %p455 = pneg %p134
      $region70: #{two_way_attention_block.5} parent=55 // pred_check_branch
        %457 = sbr.rel (%p455) target = $region72
      $region71: #{two_way_attention_block.5} parent=55 // pred_region
        %p458 = scmp.lt.s32.totalorder %s27, 1
        %s459 = scalar_select %p458, %s27, 1
        %s460 = smul.addr %s459, 2
        %s461 = smul.addr %s460, 8
        %s462 = scalar_lea.vmem %s3, %s461
      $region72: #{two_way_attention_block.5} parent=55 // pred_fallthru
        _
    $region56: #{two_way_attention_block.5} parent=5 // pred_fallthru
      _
    %p463 = scmp.le.s32.totalorder 1, %s20
    %p464 = scmp.lt.s32.totalorder %s20, 3
    %p465 = pnand %p463, %p464
    %p466 = pneg %p465
    // Predicated region
    $region73: #{two_way_attention_block.5} parent=5 // pred_check
      _
    $region74: #{two_way_attention_block.5} parent=5 // pred_check_branch
      %468 = sbr.rel (%p465) target = $region76
    $region75: #{two_way_attention_block.5} parent=5 // pred_region
      %s469 = ssub.s32 %s20, 1
      %p470 = scmp.lt.s32.totalorder %s29, 1
      %s471 = scalar_select %p470, %s29, 1
      %p472 = scmp.lt.s32.totalorder %s30, 0
      %s473 = scalar_select %p472, %s30, 0
      %s474 = sadd.s32 %s473, %s471
      %s475 = smul.addr %s474, 8
      %s476 = scalar_lea.vmem %s0, %s475
      %p477 = pneg %p60
      %p478 = pneg %p57
      %p479 = scmp.lt.s32.totalorder %s29, 1
      %s480 = scalar_select %p479, %s29, 1
      %p481 = scmp.lt.s32.totalorder %s30, 0
      %s482 = scalar_select %p481, %s30, 0
      %s483 = sadd.s32 %s482, %s480
      %s484 = smul.addr %s483, 8
      %s485 = scalar_lea.vmem %s1, %s484
      %p486 = pneg %p88
      %p487 = pneg %p85
      %p488 = scmp.lt.s32.totalorder %s29, 1
      %s489 = scalar_select %p488, %s29, 1
      %s490 = smul.addr %s489, 2
      %s491 = smul.addr %s490, 8
      %s492 = scalar_lea.vmem %s2, %s491
      %p493 = pneg %p114
      %p494 = pneg %p111
      %p495 = scmp.lt.s32.totalorder %s29, 1
      %s496 = scalar_select %p495, %s29, 1
      %s497 = smul.addr %s496, 2
      %s498 = smul.addr %s497, 8
      %s499 = scalar_lea.vmem %s3, %s498
      %p500 = pneg %p140
      %p501 = pneg %p137
      %p502 = pneg %p161
      %p503 = pneg %p158
      %p504 = pneg %p182
      %p505 = pneg %p179
      %p506 = pneg %p203
      %p507 = pneg %p200
      %p508 = pneg %p224
      %p509 = pneg %p221
      %p510 = pneg %p245
      %p511 = pneg %p242
      %p512 = pneg %p266
      %p513 = pneg %p263
      %p514 = pneg %p287
      %p515 = pneg %p284
      %p516 = pneg %p308
      %p517 = pneg %p305
      %p518 = pneg %p329
      %p519 = pneg %p326
      %p520 = pneg %p350
      %p521 = pneg %p347
      %p522 = pneg %p378
      %p523 = pneg %p375
      %p524 = scmp.lt.s32.totalorder %s29, 1
      %s525 = scalar_select %p524, %s29, 1
      %p526 = scmp.lt.s32.totalorder %s30, 0
      %s527 = scalar_select %p526, %s30, 0
      %s528 = sadd.s32 %s527, %s525
      %s529 = smul.addr %s528, 8
      %s530 = scalar_lea.vmem %s14, %s529
      %p531 = scmp.lt.s32.totalorder %s29, 1
      %s532 = scalar_select %p531, %s29, 1
      %p533 = scmp.lt.s32.totalorder %s30, 0
      %s534 = scalar_select %p533, %s30, 0
      %s535 = sadd.s32 %s534, %s532
      %s536 = smul.addr %s535, 8
      %s537 = scalar_lea.vmem %s0, %s536
      %p538 = scmp.lt.s32.totalorder %s29, 1
      %s539 = scalar_select %p538, %s29, 1
      %p540 = scmp.lt.s32.totalorder %s30, 0
      %s541 = scalar_select %p540, %s30, 0
      %s542 = sadd.s32 %s541, %s539
      %s543 = smul.addr %s542, 8
      %s544 = scalar_lea.vmem %s1, %s543
      %p545 = scmp.lt.s32.totalorder %s29, 1
      %s546 = scalar_select %p545, %s29, 1
      %s547 = smul.addr %s546, 2
      %s548 = smul.addr %s547, 8
      %s549 = scalar_lea.vmem %s2, %s548
      %p550 = scmp.lt.s32.totalorder %s29, 1
      %s551 = scalar_select %p550, %s29, 1
      %s552 = smul.addr %s551, 2
      %s553 = smul.addr %s552, 8
      %s554 = scalar_lea.vmem %s3, %s553
      %p555 = scmp.lt.s32.totalorder %s29, 1
      %s556 = scalar_select %p555, %s29, 1
      %p557 = scmp.lt.s32.totalorder %s30, 0
      %s558 = scalar_select %p557, %s30, 0
      %s559 = sadd.s32 %s558, %s556
      %s560 = smul.addr %s559, 8
      %s561 = scalar_lea.vmem %s14, %s560
      %v563 = vld [vmem:[%s537] sm:$0xff]
      %v564 = vld [vmem:[%s544] sm:$0xff]
      %v565 = vadd.f32 %v563, %v564
      %v566 = vld [vmem:[%s549] sm:$0xff]
      %v567 = vld [vmem:[%s549 + $0x8] sm:$0xff]
      %v568 = vld [vmem:[%s554] sm:$0xff]
      %v569 = vld [vmem:[%s554 + $0x8] sm:$0xff]
      %v570 = vadd.f32 %v566, %v568
      %v571 = vadd.f32 %v567, %v569
      %v572 = vpack.c.bf16 %v565, %v565
      %v573 = vld [vmem:[%s4] sm:$0xf]
      %v574 = vld [vmem:[%s4 + $0x4] sm:$0xf]
      %v575 = vld [vmem:[%s4 + $0x8] sm:$0xf]
      %v576 = vld [vmem:[%s4 + $0xc] sm:$0xf]
      %v577 = vld [vmem:[%s5] sm:$0x1]
      %v579 = vlaneseq
      %v580 = vshrl.u32 %v579, 7
      %v581 = vsub.s32 0, %v580
      %v582 = vrot.slane %v577, %v581
      %v588 = vunpack.c.l.b16 %v573
      %v589 = vunpack.c.l.b16 %v574
      %v590 = vunpack.c.l.b16 %v575
      %v591 = vunpack.c.l.b16 %v576
      %v592 = vpack.c.b16 %v589, %v588
      %v593 = vpack.c.b16 %v591, %v590
      %vm596 = vcmask 261120
      %v598 = vsel %vm596, %v572, 0
      %600 = vmatprep.subr.bf16.mxu0 0
      %601 = vmatpush1.bf16.msra.mxu0 0
      %602 = vmatprep.subr.bf16.mxu0 0
      %603 = vmatpush1.bf16.msra.mxu0 0
      %604 = vmatprep.subr.bf16.mxu0 0
      %605 = vmatpush1.bf16.msra.mxu0 0
      %606 = vmatprep.subr.bf16.mxu0 0
      %607 = vmatpush1.bf16.msra.mxu0 0
      %608 = vmatprep.subr.bf16.mxu0 0
      %609 = vmatpush1.bf16.msra.mxu0 0
      %610 = vmatprep.subr.bf16.mxu0 0
      %611 = vmatpush1.bf16.msra.mxu0 0
      %612 = vmatprep.subr.bf16.mxu0 0
      %613 = vmatpush1.bf16.msra.mxu0 %v593
      %614 = vmatprep.subr.bf16.mxu0 0
      %615 = vmatpush1.bf16.msra.mxu0 %v592
      %616 = vmatprep.subr.bf16.mxu0 0
      %617 = vmatpush2.bf16.msra.mxu0 0
      %618 = vmatprep.subr.bf16.mxu0 0
      %619 = vmatpush2.bf16.msra.mxu0 0
      %620 = vmatprep.subr.bf16.mxu0 0
      %621 = vmatpush2.bf16.msra.mxu0 0
      %622 = vmatprep.subr.bf16.mxu0 0
      %623 = vmatpush2.bf16.msra.mxu0 0
      %624 = vmatprep.subr.bf16.mxu0 0
      %625 = vmatpush2.bf16.msra.mxu0 0
      %626 = vmatprep.subr.bf16.mxu0 0
      %627 = vmatpush2.bf16.msra.mxu0 0
      %628 = vmatprep.subr.bf16.mxu0 0
      %629 = vmatpush2.bf16.msra.mxu0 0
      %630 = vmatprep.subr.bf16.mxu0 0
      %631 = vmatpush2.bf16.msra.mxu0 0
      %632 = vmatprep.mubr.bf16.mxu0 0
      %633 = vmatmul.mubr.bf16.gmra.mxu0 %v598
      %v634 = vpop.f32.mrf.mxu0
      %v635 = vadd.f32 %v582, %v634
      %v636 = vpop.f32.mrf.mxu0
      %v637 = vpop.f32.mrf.mxu0
      %v638 = vpop.f32.mrf.mxu0
      %639 = vdwg.mxu0
      %v640 = vpack.c.bf16 %v571, %v570
      %v641 = vld [vmem:[%s6] sm:$0xf]
      %v642 = vld [vmem:[%s6 + $0x4] sm:$0xf]
      %v643 = vld [vmem:[%s6 + $0x8] sm:$0xf]
      %v644 = vld [vmem:[%s6 + $0xc] sm:$0xf]
      %v645 = vld [vmem:[%s7] sm:$0x1]
      %v647 = vlaneseq
      %v648 = vshrl.u32 %v647, 7
      %v649 = vsub.s32 0, %v648
      %v650 = vrot.slane %v645, %v649
      %v656 = vunpack.c.l.b16 %v641
      %v657 = vunpack.c.l.b16 %v642
      %v658 = vunpack.c.l.b16 %v643
      %v659 = vunpack.c.l.b16 %v644
      %v660 = vpack.c.b16 %v657, %v656
      %v661 = vpack.c.b16 %v659, %v658
      %v665 = vsel %vm596, %v640, 0
      %667 = vmatprep.subr.bf16.mxu0 0
      %668 = vmatpush1.bf16.msra.mxu0 0
      %669 = vmatprep.subr.bf16.mxu0 0
      %670 = vmatpush1.bf16.msra.mxu0 0
      %671 = vmatprep.subr.bf16.mxu0 0
      %672 = vmatpush1.bf16.msra.mxu0 0
      %673 = vmatprep.subr.bf16.mxu0 0
      %674 = vmatpush1.bf16.msra.mxu0 0
      %675 = vmatprep.subr.bf16.mxu0 0
      %676 = vmatpush1.bf16.msra.mxu0 0
      %677 = vmatprep.subr.bf16.mxu0 0
      %678 = vmatpush1.bf16.msra.mxu0 0
      %679 = vmatprep.subr.bf16.mxu0 0
      %680 = vmatpush1.bf16.msra.mxu0 %v661
      %681 = vmatprep.subr.bf16.mxu0 0
      %682 = vmatpush1.bf16.msra.mxu0 %v660
      %683 = vmatprep.subr.bf16.mxu0 0
      %684 = vmatpush2.bf16.msra.mxu0 0
      %685 = vmatprep.subr.bf16.mxu0 0
      %686 = vmatpush2.bf16.msra.mxu0 0
      %687 = vmatprep.subr.bf16.mxu0 0
      %688 = vmatpush2.bf16.msra.mxu0 0
      %689 = vmatprep.subr.bf16.mxu0 0
      %690 = vmatpush2.bf16.msra.mxu0 0
      %691 = vmatprep.subr.bf16.mxu0 0
      %692 = vmatpush2.bf16.msra.mxu0 0
      %693 = vmatprep.subr.bf16.mxu0 0
      %694 = vmatpush2.bf16.msra.mxu0 0
      %695 = vmatprep.subr.bf16.mxu0 0
      %696 = vmatpush2.bf16.msra.mxu0 0
      %697 = vmatprep.subr.bf16.mxu0 0
      %698 = vmatpush2.bf16.msra.mxu0 0
      %699 = vmatprep.mubr.bf16.mxu0 0
      %700 = vmatmul.mubr.bf16.gmra.mxu0 %v665
      %v701 = vpop.f32.mrf.mxu0
      %v702 = vadd.f32 %v650, %v701
      %v703 = vpop.f32.mrf.mxu0
      %v704 = vpop.f32.mrf.mxu0
      %v705 = vadd.f32 %v650, %v704
      %v706 = vpop.f32.mrf.mxu0
      %707 = vdwg.mxu0
      %v708 = vpack.c.bf16 %v567, %v566
      %v709 = vld [vmem:[%s8] sm:$0xf]
      %v710 = vld [vmem:[%s8 + $0x4] sm:$0xf]
      %v711 = vld [vmem:[%s8 + $0x8] sm:$0xf]
      %v712 = vld [vmem:[%s8 + $0xc] sm:$0xf]
      %v713 = vld [vmem:[%s9] sm:$0x1]
      %v715 = vlaneseq
      %v716 = vshrl.u32 %v715, 7
      %v717 = vsub.s32 0, %v716
      %v718 = vrot.slane %v713, %v717
      %v724 = vunpack.c.l.b16 %v709
      %v725 = vunpack.c.l.b16 %v710
      %v726 = vunpack.c.l.b16 %v711
      %v727 = vunpack.c.l.b16 %v712
      %v728 = vpack.c.b16 %v725, %v724
      %v729 = vpack.c.b16 %v727, %v726
      %v733 = vsel %vm596, %v708, 0
      %735 = vmatprep.subr.bf16.mxu0 0
      %736 = vmatpush1.bf16.msra.mxu0 0
      %737 = vmatprep.subr.bf16.mxu0 0
      %738 = vmatpush1.bf16.msra.mxu0 0
      %739 = vmatprep.subr.bf16.mxu0 0
      %740 = vmatpush1.bf16.msra.mxu0 0
      %741 = vmatprep.subr.bf16.mxu0 0
      %742 = vmatpush1.bf16.msra.mxu0 0
      %743 = vmatprep.subr.bf16.mxu0 0
      %744 = vmatpush1.bf16.msra.mxu0 0
      %745 = vmatprep.subr.bf16.mxu0 0
      %746 = vmatpush1.bf16.msra.mxu0 0
      %747 = vmatprep.subr.bf16.mxu0 0
      %748 = vmatpush1.bf16.msra.mxu0 %v729
      %749 = vmatprep.subr.bf16.mxu0 0
      %750 = vmatpush1.bf16.msra.mxu0 %v728
      %751 = vmatprep.subr.bf16.mxu0 0
      %752 = vmatpush2.bf16.msra.mxu0 0
      %753 = vmatprep.subr.bf16.mxu0 0
      %754 = vmatpush2.bf16.msra.mxu0 0
      %755 = vmatprep.subr.bf16.mxu0 0
      %756 = vmatpush2.bf16.msra.mxu0 0
      %757 = vmatprep.subr.bf16.mxu0 0
      %758 = vmatpush2.bf16.msra.mxu0 0
      %759 = vmatprep.subr.bf16.mxu0 0
      %760 = vmatpush2.bf16.msra.mxu0 0
      %761 = vmatprep.subr.bf16.mxu0 0
      %762 = vmatpush2.bf16.msra.mxu0 0
      %763 = vmatprep.subr.bf16.mxu0 0
      %764 = vmatpush2.bf16.msra.mxu0 0
      %765 = vmatprep.subr.bf16.mxu0 0
      %766 = vmatpush2.bf16.msra.mxu0 0
      %767 = vmatprep.mubr.bf16.mxu0 0
      %768 = vmatmul.mubr.bf16.gmra.mxu0 %v733
      %v769 = vpop.f32.mrf.mxu0
      %v770 = vadd.f32 %v718, %v769
      %v771 = vpop.f32.mrf.mxu0
      %v772 = vpop.f32.mrf.mxu0
      %v773 = vadd.f32 %v718, %v772
      %v774 = vpop.f32.mrf.mxu0
      %775 = vdwg.mxu0
      %v776 = vld [vmem:[%s10] sm:$0xf]
      %v777 = vld [vmem:[%s10 + $0x4] sm:$0xf]
      %v778 = vpack.c.bf16 %v635, %v635
      %v779 = vpack.c.bf16 %v705, %v702
      %v780 = vpack.c.bf16 %v773, %v770
      %vm781 = vcmask 31744
      %v783 = vsel %vm781, %v778, 0
      %v786 = vsel %vm781, %v779, 0
      %788 = vmatprep.subr.bf16.mxu0 0
      %789 = vmatpush1.bf16.xpose.msra.mxu0 0
      %790 = vmatprep.subr.bf16.mxu0 0
      %791 = vmatpush1.bf16.xpose.msra.mxu0 0
      %792 = vmatprep.subr.bf16.mxu0 0
      %793 = vmatpush1.bf16.xpose.msra.mxu0 0
      %794 = vmatprep.subr.bf16.mxu0 0
      %795 = vmatpush1.bf16.xpose.msra.mxu0 0
      %796 = vmatprep.subr.bf16.mxu0 0
      %797 = vmatpush1.bf16.xpose.msra.mxu0 0
      %798 = vmatprep.subr.bf16.mxu0 0
      %799 = vmatpush1.bf16.xpose.msra.mxu0 0
      %800 = vmatprep.subr.bf16.mxu0 0
      %801 = vmatpush1.bf16.xpose.msra.mxu0 0
      %802 = vmatprep.subr.bf16.mxu0 0
      %803 = vmatpush1.bf16.xpose.msra.mxu0 %v786
      %804 = vmatprep.subr.bf16.mxu0 0
      %805 = vmatpush2.bf16.xpose.msra.mxu0 0
      %806 = vmatprep.subr.bf16.mxu0 0
      %807 = vmatpush2.bf16.xpose.msra.mxu0 0
      %808 = vmatprep.subr.bf16.mxu0 0
      %809 = vmatpush2.bf16.xpose.msra.mxu0 0
      %810 = vmatprep.subr.bf16.mxu0 0
      %811 = vmatpush2.bf16.xpose.msra.mxu0 0
      %812 = vmatprep.subr.bf16.mxu0 0
      %813 = vmatpush2.bf16.xpose.msra.mxu0 0
      %814 = vmatprep.subr.bf16.mxu0 0
      %815 = vmatpush2.bf16.xpose.msra.mxu0 0
      %816 = vmatprep.subr.bf16.mxu0 0
      %817 = vmatpush2.bf16.xpose.msra.mxu0 0
      %818 = vmatprep.subr.bf16.mxu0 0
      %819 = vmatpush2.bf16.xpose.msra.mxu0 0
      %820 = vmatprep.mubr.bf16.mxu0 0
      %821 = vmatmul.mubr.bf16.gmra.mxu0 %v783
      %v822 = vpop.f32.mrf.mxu0
      %v823 = vadd.f32 0.0, %v822
      %v824 = vpop.f32.mrf.mxu0
      %v825 = vpop.f32.mrf.mxu0
      %v826 = vpop.f32.mrf.mxu0
      %827 = vdwg.mxu0
      %vm828 = vcmask 130048
      %v829 = vsel %vm828, %v823, -inf
      %830 = vmax.xlane.f32.xlu0 %v829
      %v831 = vpop.xlane.xlu0 %830
      %v832 = vsub.f32 %v823, %v831
      %v833 = vmul.f32 %v832, 1.442695
      %v834 = vpow.pop %v833
      %v835 = vsel %vm828, %v834, 0.0
      %836 = vadd.xlane.f32.xlu0 %v835
      %v837 = vpop.xlane.xlu0 %836
      %v838 = vrcp.pop %v837
      %v839 = vpack.c.bf16 %v834, %v834
      %v841 = vsel %vm828, %v839, 0
      %843 = vmatprep.subr.bf16.mxu0 0
      %844 = vmatpush1.bf16.msra.mxu0 0
      %845 = vmatprep.subr.bf16.mxu0 0
      %846 = vmatpush1.bf16.msra.mxu0 0
      %847 = vmatprep.subr.bf16.mxu0 0
      %848 = vmatpush1.bf16.msra.mxu0 0
      %849 = vmatprep.subr.bf16.mxu0 0
      %850 = vmatpush1.bf16.msra.mxu0 0
      %851 = vmatprep.subr.bf16.mxu0 0
      %852 = vmatpush1.bf16.msra.mxu0 0
      %853 = vmatprep.subr.bf16.mxu0 0
      %854 = vmatpush1.bf16.msra.mxu0 0
      %855 = vmatprep.subr.bf16.mxu0 0
      %856 = vmatpush1.bf16.msra.mxu0 0
      %857 = vmatprep.subr.bf16.mxu0 0
      %858 = vmatpush1.bf16.msra.mxu0 %v780
      %859 = vmatprep.subr.bf16.mxu0 0
      %860 = vmatpush2.bf16.msra.mxu0 0
      %861 = vmatprep.subr.bf16.mxu0 0
      %862 = vmatpush2.bf16.msra.mxu0 0
      %863 = vmatprep.subr.bf16.mxu0 0
      %864 = vmatpush2.bf16.msra.mxu0 0
      %865 = vmatprep.subr.bf16.mxu0 0
      %866 = vmatpush2.bf16.msra.mxu0 0
      %867 = vmatprep.subr.bf16.mxu0 0
      %868 = vmatpush2.bf16.msra.mxu0 0
      %869 = vmatprep.subr.bf16.mxu0 0
      %870 = vmatpush2.bf16.msra.mxu0 0
      %871 = vmatprep.subr.bf16.mxu0 0
      %872 = vmatpush2.bf16.msra.mxu0 0
      %873 = vmatprep.subr.bf16.mxu0 0
      %874 = vmatpush2.bf16.msra.mxu0 0
      %875 = vmatprep.mubr.bf16.mxu0 0
      %876 = vmatmul.mubr.bf16.gmra.mxu0 %v841
      %v877 = vpop.f32.mrf.mxu0
      %v878 = vadd.f32 0.0, %v877
      %v879 = vpop.f32.mrf.mxu0
      %v880 = vpop.f32.mrf.mxu0
      %v881 = vpop.f32.mrf.mxu0
      %882 = vdwg.mxu0
      %v883 = vmul.f32 %v878, %v838
      %v884 = vpack.c.bf16 %v883, %v883
      %886 = vrot.lane.b32.xlu0 %v778, 124
      %v887 = vpop.permute.xlu0 %886
      %889 = vrot.lane.b32.xlu0 %v779, 124
      %v890 = vpop.permute.xlu0 %889
      %v892 = vsel %vm781, %v887, 0
      %v895 = vsel %vm781, %v890, 0
      %897 = vmatprep.subr.bf16.mxu0 0
      %898 = vmatpush1.bf16.xpose.msra.mxu0 0
      %899 = vmatprep.subr.bf16.mxu0 0
      %900 = vmatpush1.bf16.xpose.msra.mxu0 0
      %901 = vmatprep.subr.bf16.mxu0 0
      %902 = vmatpush1.bf16.xpose.msra.mxu0 0
      %903 = vmatprep.subr.bf16.mxu0 0
      %904 = vmatpush1.bf16.xpose.msra.mxu0 0
      %905 = vmatprep.subr.bf16.mxu0 0
      %906 = vmatpush1.bf16.xpose.msra.mxu0 0
      %907 = vmatprep.subr.bf16.mxu0 0
      %908 = vmatpush1.bf16.xpose.msra.mxu0 0
      %909 = vmatprep.subr.bf16.mxu0 0
      %910 = vmatpush1.bf16.xpose.msra.mxu0 0
      %911 = vmatprep.subr.bf16.mxu0 0
      %912 = vmatpush1.bf16.xpose.msra.mxu0 %v895
      %913 = vmatprep.subr.bf16.mxu0 0
      %914 = vmatpush2.bf16.xpose.msra.mxu0 0
      %915 = vmatprep.subr.bf16.mxu0 0
      %916 = vmatpush2.bf16.xpose.msra.mxu0 0
      %917 = vmatprep.subr.bf16.mxu0 0
      %918 = vmatpush2.bf16.xpose.msra.mxu0 0
      %919 = vmatprep.subr.bf16.mxu0 0
      %920 = vmatpush2.bf16.xpose.msra.mxu0 0
      %921 = vmatprep.subr.bf16.mxu0 0
      %922 = vmatpush2.bf16.xpose.msra.mxu0 0
      %923 = vmatprep.subr.bf16.mxu0 0
      %924 = vmatpush2.bf16.xpose.msra.mxu0 0
      %925 = vmatprep.subr.bf16.mxu0 0
      %926 = vmatpush2.bf16.xpose.msra.mxu0 0
      %927 = vmatprep.subr.bf16.mxu0 0
      %928 = vmatpush2.bf16.xpose.msra.mxu0 0
      %929 = vmatprep.mubr.bf16.mxu0 0
      %930 = vmatmul.mubr.bf16.gmra.mxu0 %v892
      %v931 = vpop.f32.mrf.mxu0
      %v932 = vadd.f32 0.0, %v931
      %v933 = vpop.f32.mrf.mxu0
      %v934 = vpop.f32.mrf.mxu0
      %v935 = vpop.f32.mrf.mxu0
      %936 = vdwg.mxu0
      %v937 = vsel %vm828, %v932, -inf
      %938 = vmax.xlane.f32.xlu0 %v937
      %v939 = vpop.xlane.xlu0 %938
      %v940 = vsub.f32 %v932, %v939
      %v941 = vmul.f32 %v940, 1.442695
      %v942 = vpow.pop %v941
      %v943 = vsel %vm828, %v942, 0.0
      %944 = vadd.xlane.f32.xlu0 %v943
      %v945 = vpop.xlane.xlu0 %944
      %v946 = vrcp.pop %v945
      %v947 = vpack.c.bf16 %v942, %v942
      %949 = vrot.lane.b32.xlu0 %v780, 124
      %v950 = vpop.permute.xlu0 %949
      %v953 = vsel %vm828, %v947, 0
      %955 = vmatprep.subr.bf16.mxu0 0
      %956 = vmatpush1.bf16.msra.mxu0 0
      %957 = vmatprep.subr.bf16.mxu0 0
      %958 = vmatpush1.bf16.msra.mxu0 0
      %959 = vmatprep.subr.bf16.mxu0 0
      %960 = vmatpush1.bf16.msra.mxu0 0
      %961 = vmatprep.subr.bf16.mxu0 0
      %962 = vmatpush1.bf16.msra.mxu0 0
      %963 = vmatprep.subr.bf16.mxu0 0
      %964 = vmatpush1.bf16.msra.mxu0 0
      %965 = vmatprep.subr.bf16.mxu0 0
      %966 = vmatpush1.bf16.msra.mxu0 0
      %967 = vmatprep.subr.bf16.mxu0 0
      %968 = vmatpush1.bf16.msra.mxu0 0
      %969 = vmatprep.subr.bf16.mxu0 0
      %970 = vmatpush1.bf16.msra.mxu0 %v950
      %971 = vmatprep.subr.bf16.mxu0 0
      %972 = vmatpush2.bf16.msra.mxu0 0
      %973 = vmatprep.subr.bf16.mxu0 0
      %974 = vmatpush2.bf16.msra.mxu0 0
      %975 = vmatprep.subr.bf16.mxu0 0
      %976 = vmatpush2.bf16.msra.mxu0 0
      %977 = vmatprep.subr.bf16.mxu0 0
      %978 = vmatpush2.bf16.msra.mxu0 0
      %979 = vmatprep.subr.bf16.mxu0 0
      %980 = vmatpush2.bf16.msra.mxu0 0
      %981 = vmatprep.subr.bf16.mxu0 0
      %982 = vmatpush2.bf16.msra.mxu0 0
      %983 = vmatprep.subr.bf16.mxu0 0
      %984 = vmatpush2.bf16.msra.mxu0 0
      %985 = vmatprep.subr.bf16.mxu0 0
      %986 = vmatpush2.bf16.msra.mxu0 0
      %987 = vmatprep.mubr.bf16.mxu0 0
      %988 = vmatmul.mubr.bf16.gmra.mxu0 %v953
      %v989 = vpop.f32.mrf.mxu0
      %v990 = vadd.f32 0.0, %v989
      %v991 = vpop.f32.mrf.mxu0
      %v992 = vpop.f32.mrf.mxu0
      %v993 = vpop.f32.mrf.mxu0
      %994 = vdwg.mxu0
      %v995 = vmul.f32 %v990, %v946
      %v996 = vpack.c.bf16 %v995, %v995
      %v998 = vunpack.c.l.b16 %v776
      %v999 = vpack.c.b16 %v998, %v998
      %v1000 = vrot.slane %v999, 2
      %v1002 = vsel %vm781, %v996, 0
      %vm1004 = vcmask 1041408
      %v1006 = vsel %vm1004, %v1000, 0
      %1008 = vmatprep.subr.bf16.mxu0 0
      %1009 = vmatpush1.bf16.msra.mxu0 0
      %1010 = vmatprep.subr.bf16.mxu0 0
      %1011 = vmatpush1.bf16.msra.mxu0 0
      %1012 = vmatprep.subr.bf16.mxu0 0
      %1013 = vmatpush1.bf16.msra.mxu0 0
      %1014 = vmatprep.subr.bf16.mxu0 0
      %1015 = vmatpush1.bf16.msra.mxu0 0
      %1016 = vmatprep.subr.bf16.mxu0 0
      %1017 = vmatpush1.bf16.msra.mxu0 0
      %1018 = vmatprep.subr.bf16.mxu0 0
      %1019 = vmatpush1.bf16.msra.mxu0 0
      %1020 = vmatprep.subr.bf16.mxu0 0
      %1021 = vmatpush1.bf16.msra.mxu0 0
      %1022 = vmatprep.subr.bf16.mxu0 0
      %1023 = vmatpush1.bf16.msra.mxu0 %v1006
      %1024 = vmatprep.subr.bf16.mxu0 0
      %1025 = vmatpush2.bf16.msra.mxu0 0
      %1026 = vmatprep.subr.bf16.mxu0 0
      %1027 = vmatpush2.bf16.msra.mxu0 0
      %1028 = vmatprep.subr.bf16.mxu0 0
      %1029 = vmatpush2.bf16.msra.mxu0 0
      %1030 = vmatprep.subr.bf16.mxu0 0
      %1031 = vmatpush2.bf16.msra.mxu0 0
      %1032 = vmatprep.subr.bf16.mxu0 0
      %1033 = vmatpush2.bf16.msra.mxu0 0
      %1034 = vmatprep.subr.bf16.mxu0 0
      %1035 = vmatpush2.bf16.msra.mxu0 0
      %1036 = vmatprep.subr.bf16.mxu0 0
      %1037 = vmatpush2.bf16.msra.mxu0 0
      %1038 = vmatprep.subr.bf16.mxu0 0
      %1039 = vmatpush2.bf16.msra.mxu0 0
      %1040 = vmatprep.mubr.bf16.mxu0 0
      %1041 = vmatmul.mubr.bf16.gmra.mxu0 %v1002
      %v1042 = vpop.f32.mrf.mxu0
      %v1043 = vadd.f32 0.0, %v1042
      %v1044 = vpop.f32.mrf.mxu0
      %v1045 = vpop.f32.mrf.mxu0
      %v1046 = vpop.f32.mrf.mxu0
      %1047 = vdwg.mxu0
      %v1049 = vsel %vm781, %v884, 0
      %v1052 = vsel %vm1004, %v776, 0
      %1054 = vmatprep.subr.bf16.mxu0 0
      %1055 = vmatpush1.bf16.msra.mxu0 0
      %1056 = vmatprep.subr.bf16.mxu0 0
      %1057 = vmatpush1.bf16.msra.mxu0 0
      %1058 = vmatprep.subr.bf16.mxu0 0
      %1059 = vmatpush1.bf16.msra.mxu0 0
      %1060 = vmatprep.subr.bf16.mxu0 0
      %1061 = vmatpush1.bf16.msra.mxu0 0
      %1062 = vmatprep.subr.bf16.mxu0 0
      %1063 = vmatpush1.bf16.msra.mxu0 0
      %1064 = vmatprep.subr.bf16.mxu0 0
      %1065 = vmatpush1.bf16.msra.mxu0 0
      %1066 = vmatprep.subr.bf16.mxu0 0
      %1067 = vmatpush1.bf16.msra.mxu0 0
      %1068 = vmatprep.subr.bf16.mxu0 0
      %1069 = vmatpush1.bf16.msra.mxu0 %v1052
      %1070 = vmatprep.subr.bf16.mxu0 0
      %1071 = vmatpush2.bf16.msra.mxu0 0
      %1072 = vmatprep.subr.bf16.mxu0 0
      %1073 = vmatpush2.bf16.msra.mxu0 0
      %1074 = vmatprep.subr.bf16.mxu0 0
      %1075 = vmatpush2.bf16.msra.mxu0 0
      %1076 = vmatprep.subr.bf16.mxu0 0
      %1077 = vmatpush2.bf16.msra.mxu0 0
      %1078 = vmatprep.subr.bf16.mxu0 0
      %1079 = vmatpush2.bf16.msra.mxu0 0
      %1080 = vmatprep.subr.bf16.mxu0 0
      %1081 = vmatpush2.bf16.msra.mxu0 0
      %1082 = vmatprep.subr.bf16.mxu0 0
      %1083 = vmatpush2.bf16.msra.mxu0 0
      %1084 = vmatprep.subr.bf16.mxu0 0
      %1085 = vmatpush2.bf16.msra.mxu0 0
      %1086 = vmatprep.mubr.bf16.mxu0 0
      %1087 = vmatmul.mubr.bf16.gmra.mxu0 %v1049
      %v1088 = vpop.f32.mrf.mxu0
      %v1089 = vadd.f32 %v1043, %v1088
      %v1090 = vpop.f32.mrf.mxu0
      %v1091 = vpop.f32.mrf.mxu0
      %v1092 = vpop.f32.mrf.mxu0
      %1093 = vdwg.mxu0
      %1094 = vrot.lane.b32.xlu0 %v778, 120
      %v1095 = vpop.permute.xlu0 %1094
      %1096 = vrot.lane.b32.xlu0 %v779, 120
      %v1097 = vpop.permute.xlu0 %1096
      %v1099 = vsel %vm781, %v1095, 0
      %v1102 = vsel %vm781, %v1097, 0
      %1104 = vmatprep.subr.bf16.mxu0 0
      %1105 = vmatpush1.bf16.xpose.msra.mxu0 0
      %1106 = vmatprep.subr.bf16.mxu0 0
      %1107 = vmatpush1.bf16.xpose.msra.mxu0 0
      %1108 = vmatprep.subr.bf16.mxu0 0
      %1109 = vmatpush1.bf16.xpose.msra.mxu0 0
      %1110 = vmatprep.subr.bf16.mxu0 0
      %1111 = vmatpush1.bf16.xpose.msra.mxu0 0
      %1112 = vmatprep.subr.bf16.mxu0 0
      %1113 = vmatpush1.bf16.xpose.msra.mxu0 0
      %1114 = vmatprep.subr.bf16.mxu0 0
      %1115 = vmatpush1.bf16.xpose.msra.mxu0 0
      %1116 = vmatprep.subr.bf16.mxu0 0
      %1117 = vmatpush1.bf16.xpose.msra.mxu0 0
      %1118 = vmatprep.subr.bf16.mxu0 0
      %1119 = vmatpush1.bf16.xpose.msra.mxu0 %v1102
      %1120 = vmatprep.subr.bf16.mxu0 0
      %1121 = vmatpush2.bf16.xpose.msra.mxu0 0
      %1122 = vmatprep.subr.bf16.mxu0 0
      %1123 = vmatpush2.bf16.xpose.msra.mxu0 0
      %1124 = vmatprep.subr.bf16.mxu0 0
      %1125 = vmatpush2.bf16.xpose.msra.mxu0 0
      %1126 = vmatprep.subr.bf16.mxu0 0
      %1127 = vmatpush2.bf16.xpose.msra.mxu0 0
      %1128 = vmatprep.subr.bf16.mxu0 0
      %1129 = vmatpush2.bf16.xpose.msra.mxu0 0
      %1130 = vmatprep.subr.bf16.mxu0 0
      %1131 = vmatpush2.bf16.xpose.msra.mxu0 0
      %1132 = vmatprep.subr.bf16.mxu0 0
      %1133 = vmatpush2.bf16.xpose.msra.mxu0 0
      %1134 = vmatprep.subr.bf16.mxu0 0
      %1135 = vmatpush2.bf16.xpose.msra.mxu0 0
      %1136 = vmatprep.mubr.bf16.mxu0 0
      %1137 = vmatmul.mubr.bf16.gmra.mxu0 %v1099
      %v1138 = vpop.f32.mrf.mxu0
      %v1139 = vadd.f32 0.0, %v1138
      %v1140 = vpop.f32.mrf.mxu0
      %v1141 = vpop.f32.mrf.mxu0
      %v1142 = vpop.f32.mrf.mxu0
      %1143 = vdwg.mxu0
      %v1144 = vsel %vm828, %v1139, -inf
      %1145 = vmax.xlane.f32.xlu0 %v1144
      %v1146 = vpop.xlane.xlu0 %1145
      %v1147 = vsub.f32 %v1139, %v1146
      %v1148 = vmul.f32 %v1147, 1.442695
      %v1149 = vpow.pop %v1148
      %v1150 = vsel %vm828, %v1149, 0.0
      %1151 = vadd.xlane.f32.xlu0 %v1150
      %v1152 = vpop.xlane.xlu0 %1151
      %v1153 = vrcp.pop %v1152
      %v1154 = vpack.c.bf16 %v1149, %v1149
      %1155 = vrot.lane.b32.xlu0 %v780, 120
      %v1156 = vpop.permute.xlu0 %1155
      %v1159 = vsel %vm828, %v1154, 0
      %1161 = vmatprep.subr.bf16.mxu0 0
      %1162 = vmatpush1.bf16.msra.mxu0 0
      %1163 = vmatprep.subr.bf16.mxu0 0
      %1164 = vmatpush1.bf16.msra.mxu0 0
      %1165 = vmatprep.subr.bf16.mxu0 0
      %1166 = vmatpush1.bf16.msra.mxu0 0
      %1167 = vmatprep.subr.bf16.mxu0 0
      %1168 = vmatpush1.bf16.msra.mxu0 0
      %1169 = vmatprep.subr.bf16.mxu0 0
      %1170 = vmatpush1.bf16.msra.mxu0 0
      %1171 = vmatprep.subr.bf16.mxu0 0
      %1172 = vmatpush1.bf16.msra.mxu0 0
      %1173 = vmatprep.subr.bf16.mxu0 0
      %1174 = vmatpush1.bf16.msra.mxu0 0
      %1175 = vmatprep.subr.bf16.mxu0 0
      %1176 = vmatpush1.bf16.msra.mxu0 %v1156
      %1177 = vmatprep.subr.bf16.mxu0 0
      %1178 = vmatpush2.bf16.msra.mxu0 0
      %1179 = vmatprep.subr.bf16.mxu0 0
      %1180 = vmatpush2.bf16.msra.mxu0 0
      %1181 = vmatprep.subr.bf16.mxu0 0
      %1182 = vmatpush2.bf16.msra.mxu0 0
      %1183 = vmatprep.subr.bf16.mxu0 0
      %1184 = vmatpush2.bf16.msra.mxu0 0
      %1185 = vmatprep.subr.bf16.mxu0 0
      %1186 = vmatpush2.bf16.msra.mxu0 0
      %1187 = vmatprep.subr.bf16.mxu0 0
      %1188 = vmatpush2.bf16.msra.mxu0 0
      %1189 = vmatprep.subr.bf16.mxu0 0
      %1190 = vmatpush2.bf16.msra.mxu0 0
      %1191 = vmatprep.subr.bf16.mxu0 0
      %1192 = vmatpush2.bf16.msra.mxu0 0
      %1193 = vmatprep.mubr.bf16.mxu0 0
      %1194 = vmatmul.mubr.bf16.gmra.mxu0 %v1159
      %v1195 = vpop.f32.mrf.mxu0
      %v1196 = vadd.f32 0.0, %v1195
      %v1197 = vpop.f32.mrf.mxu0
      %v1198 = vpop.f32.mrf.mxu0
      %v1199 = vpop.f32.mrf.mxu0
      %1200 = vdwg.mxu0
      %v1201 = vmul.f32 %v1196, %v1153
      %v1202 = vpack.c.bf16 %v1201, %v1201
      %v1204 = vsel %vm781, %v1202, 0
      %v1207 = vsel %vm1004, %v777, 0
      %1209 = vmatprep.subr.bf16.mxu0 0
      %1210 = vmatpush1.bf16.msra.mxu0 0
      %1211 = vmatprep.subr.bf16.mxu0 0
      %1212 = vmatpush1.bf16.msra.mxu0 0
      %1213 = vmatprep.subr.bf16.mxu0 0
      %1214 = vmatpush1.bf16.msra.mxu0 0
      %1215 = vmatprep.subr.bf16.mxu0 0
      %1216 = vmatpush1.bf16.msra.mxu0 0
      %1217 = vmatprep.subr.bf16.mxu0 0
      %1218 = vmatpush1.bf16.msra.mxu0 0
      %1219 = vmatprep.subr.bf16.mxu0 0
      %1220 = vmatpush1.bf16.msra.mxu0 0
      %1221 = vmatprep.subr.bf16.mxu0 0
      %1222 = vmatpush1.bf16.msra.mxu0 0
      %1223 = vmatprep.subr.bf16.mxu0 0
      %1224 = vmatpush1.bf16.msra.mxu0 %v1207
      %1225 = vmatprep.subr.bf16.mxu0 0
      %1226 = vmatpush2.bf16.msra.mxu0 0
      %1227 = vmatprep.subr.bf16.mxu0 0
      %1228 = vmatpush2.bf16.msra.mxu0 0
      %1229 = vmatprep.subr.bf16.mxu0 0
      %1230 = vmatpush2.bf16.msra.mxu0 0
      %1231 = vmatprep.subr.bf16.mxu0 0
      %1232 = vmatpush2.bf16.msra.mxu0 0
      %1233 = vmatprep.subr.bf16.mxu0 0
      %1234 = vmatpush2.bf16.msra.mxu0 0
      %1235 = vmatprep.subr.bf16.mxu0 0
      %1236 = vmatpush2.bf16.msra.mxu0 0
      %1237 = vmatprep.subr.bf16.mxu0 0
      %1238 = vmatpush2.bf16.msra.mxu0 0
      %1239 = vmatprep.subr.bf16.mxu0 0
      %1240 = vmatpush2.bf16.msra.mxu0 0
      %1241 = vmatprep.mubr.bf16.mxu0 0
      %1242 = vmatmul.mubr.bf16.gmra.mxu0 %v1204
      %v1243 = vpop.f32.mrf.mxu0
      %v1244 = vadd.f32 0.0, %v1243
      %v1245 = vpop.f32.mrf.mxu0
      %v1246 = vpop.f32.mrf.mxu0
      %v1247 = vpop.f32.mrf.mxu0
      %1248 = vdwg.mxu0
      %v1249 = vadd.f32 %v1089, %v1244
      %1250 = vrot.lane.b32.xlu0 %v778, 116
      %v1251 = vpop.permute.xlu0 %1250
      %1252 = vrot.lane.b32.xlu0 %v779, 116
      %v1253 = vpop.permute.xlu0 %1252
      %v1255 = vsel %vm781, %v1251, 0
      %v1258 = vsel %vm781, %v1253, 0
      %1260 = vmatprep.subr.bf16.mxu0 0
      %1261 = vmatpush1.bf16.xpose.msra.mxu0 0
      %1262 = vmatprep.subr.bf16.mxu0 0
      %1263 = vmatpush1.bf16.xpose.msra.mxu0 0
      %1264 = vmatprep.subr.bf16.mxu0 0
      %1265 = vmatpush1.bf16.xpose.msra.mxu0 0
      %1266 = vmatprep.subr.bf16.mxu0 0
      %1267 = vmatpush1.bf16.xpose.msra.mxu0 0
      %1268 = vmatprep.subr.bf16.mxu0 0
      %1269 = vmatpush1.bf16.xpose.msra.mxu0 0
      %1270 = vmatprep.subr.bf16.mxu0 0
      %1271 = vmatpush1.bf16.xpose.msra.mxu0 0
      %1272 = vmatprep.subr.bf16.mxu0 0
      %1273 = vmatpush1.bf16.xpose.msra.mxu0 0
      %1274 = vmatprep.subr.bf16.mxu0 0
      %1275 = vmatpush1.bf16.xpose.msra.mxu0 %v1258
      %1276 = vmatprep.subr.bf16.mxu0 0
      %1277 = vmatpush2.bf16.xpose.msra.mxu0 0
      %1278 = vmatprep.subr.bf16.mxu0 0
      %1279 = vmatpush2.bf16.xpose.msra.mxu0 0
      %1280 = vmatprep.subr.bf16.mxu0 0
      %1281 = vmatpush2.bf16.xpose.msra.mxu0 0
      %1282 = vmatprep.subr.bf16.mxu0 0
      %1283 = vmatpush2.bf16.xpose.msra.mxu0 0
      %1284 = vmatprep.subr.bf16.mxu0 0
      %1285 = vmatpush2.bf16.xpose.msra.mxu0 0
      %1286 = vmatprep.subr.bf16.mxu0 0
      %1287 = vmatpush2.bf16.xpose.msra.mxu0 0
      %1288 = vmatprep.subr.bf16.mxu0 0
      %1289 = vmatpush2.bf16.xpose.msra.mxu0 0
      %1290 = vmatprep.subr.bf16.mxu0 0
      %1291 = vmatpush2.bf16.xpose.msra.mxu0 0
      %1292 = vmatprep.mubr.bf16.mxu0 0
      %1293 = vmatmul.mubr.bf16.gmra.mxu0 %v1255
      %v1294 = vpop.f32.mrf.mxu0
      %v1295 = vadd.f32 0.0, %v1294
      %v1296 = vpop.f32.mrf.mxu0
      %v1297 = vpop.f32.mrf.mxu0
      %v1298 = vpop.f32.mrf.mxu0
      %1299 = vdwg.mxu0
      %v1300 = vsel %vm828, %v1295, -inf
      %1301 = vmax.xlane.f32.xlu0 %v1300
      %v1302 = vpop.xlane.xlu0 %1301
      %v1303 = vsub.f32 %v1295, %v1302
      %v1304 = vmul.f32 %v1303, 1.442695
      %v1305 = vpow.pop %v1304
      %v1306 = vsel %vm828, %v1305, 0.0
      %1307 = vadd.xlane.f32.xlu0 %v1306
      %v1308 = vpop.xlane.xlu0 %1307
      %v1309 = vrcp.pop %v1308
      %v1310 = vpack.c.bf16 %v1305, %v1305
      %1311 = vrot.lane.b32.xlu0 %v780, 116
      %v1312 = vpop.permute.xlu0 %1311
      %v1315 = vsel %vm828, %v1310, 0
      %1317 = vmatprep.subr.bf16.mxu0 0
      %1318 = vmatpush1.bf16.msra.mxu0 0
      %1319 = vmatprep.subr.bf16.mxu0 0
      %1320 = vmatpush1.bf16.msra.mxu0 0
      %1321 = vmatprep.subr.bf16.mxu0 0
      %1322 = vmatpush1.bf16.msra.mxu0 0
      %1323 = vmatprep.subr.bf16.mxu0 0
      %1324 = vmatpush1.bf16.msra.mxu0 0
      %1325 = vmatprep.subr.bf16.mxu0 0
      %1326 = vmatpush1.bf16.msra.mxu0 0
      %1327 = vmatprep.subr.bf16.mxu0 0
      %1328 = vmatpush1.bf16.msra.mxu0 0
      %1329 = vmatprep.subr.bf16.mxu0 0
      %1330 = vmatpush1.bf16.msra.mxu0 0
      %1331 = vmatprep.subr.bf16.mxu0 0
      %1332 = vmatpush1.bf16.msra.mxu0 %v1312
      %1333 = vmatprep.subr.bf16.mxu0 0
      %1334 = vmatpush2.bf16.msra.mxu0 0
      %1335 = vmatprep.subr.bf16.mxu0 0
      %1336 = vmatpush2.bf16.msra.mxu0 0
      %1337 = vmatprep.subr.bf16.mxu0 0
      %1338 = vmatpush2.bf16.msra.mxu0 0
      %1339 = vmatprep.subr.bf16.mxu0 0
      %1340 = vmatpush2.bf16.msra.mxu0 0
      %1341 = vmatprep.subr.bf16.mxu0 0
      %1342 = vmatpush2.bf16.msra.mxu0 0
      %1343 = vmatprep.subr.bf16.mxu0 0
      %1344 = vmatpush2.bf16.msra.mxu0 0
      %1345 = vmatprep.subr.bf16.mxu0 0
      %1346 = vmatpush2.bf16.msra.mxu0 0
      %1347 = vmatprep.subr.bf16.mxu0 0
      %1348 = vmatpush2.bf16.msra.mxu0 0
      %1349 = vmatprep.mubr.bf16.mxu0 0
      %1350 = vmatmul.mubr.bf16.gmra.mxu0 %v1315
      %v1351 = vpop.f32.mrf.mxu0
      %v1352 = vadd.f32 0.0, %v1351
      %v1353 = vpop.f32.mrf.mxu0
      %v1354 = vpop.f32.mrf.mxu0
      %v1355 = vpop.f32.mrf.mxu0
      %1356 = vdwg.mxu0
      %v1357 = vmul.f32 %v1352, %v1309
      %v1358 = vpack.c.bf16 %v1357, %v1357
      %v1360 = vunpack.c.l.b16 %v777
      %v1361 = vpack.c.b16 %v1360, %v1360
      %v1362 = vrot.slane %v1361, 2
      %v1364 = vsel %vm781, %v1358, 0
      %v1367 = vsel %vm1004, %v1362, 0
      %1369 = vmatprep.subr.bf16.mxu0 0
      %1370 = vmatpush1.bf16.msra.mxu0 0
      %1371 = vmatprep.subr.bf16.mxu0 0
      %1372 = vmatpush1.bf16.msra.mxu0 0
      %1373 = vmatprep.subr.bf16.mxu0 0
      %1374 = vmatpush1.bf16.msra.mxu0 0
      %1375 = vmatprep.subr.bf16.mxu0 0
      %1376 = vmatpush1.bf16.msra.mxu0 0
      %1377 = vmatprep.subr.bf16.mxu0 0
      %1378 = vmatpush1.bf16.msra.mxu0 0
      %1379 = vmatprep.subr.bf16.mxu0 0
      %1380 = vmatpush1.bf16.msra.mxu0 0
      %1381 = vmatprep.subr.bf16.mxu0 0
      %1382 = vmatpush1.bf16.msra.mxu0 0
      %1383 = vmatprep.subr.bf16.mxu0 0
      %1384 = vmatpush1.bf16.msra.mxu0 %v1367
      %1385 = vmatprep.subr.bf16.mxu0 0
      %1386 = vmatpush2.bf16.msra.mxu0 0
      %1387 = vmatprep.subr.bf16.mxu0 0
      %1388 = vmatpush2.bf16.msra.mxu0 0
      %1389 = vmatprep.subr.bf16.mxu0 0
      %1390 = vmatpush2.bf16.msra.mxu0 0
      %1391 = vmatprep.subr.bf16.mxu0 0
      %1392 = vmatpush2.bf16.msra.mxu0 0
      %1393 = vmatprep.subr.bf16.mxu0 0
      %1394 = vmatpush2.bf16.msra.mxu0 0
      %1395 = vmatprep.subr.bf16.mxu0 0
      %1396 = vmatpush2.bf16.msra.mxu0 0
      %1397 = vmatprep.subr.bf16.mxu0 0
      %1398 = vmatpush2.bf16.msra.mxu0 0
      %1399 = vmatprep.subr.bf16.mxu0 0
      %1400 = vmatpush2.bf16.msra.mxu0 0
      %1401 = vmatprep.mubr.bf16.mxu0 0
      %1402 = vmatmul.mubr.bf16.gmra.mxu0 %v1364
      %v1403 = vpop.f32.mrf.mxu0
      %v1404 = vadd.f32 0.0, %v1403
      %v1405 = vpop.f32.mrf.mxu0
      %v1406 = vpop.f32.mrf.mxu0
      %v1407 = vpop.f32.mrf.mxu0
      %1408 = vdwg.mxu0
      %v1409 = vadd.f32 %v1249, %v1404
      %v1410 = vld [vmem:[%s11] sm:$0x1]
      %v1412 = vlaneseq
      %v1413 = vshrl.u32 %v1412, 7
      %v1414 = vsub.s32 0, %v1413
      %v1415 = vrot.slane %v1410, %v1414
      %v1417 = vadd.f32 %v1409, %v1415
      %v1418 = vadd.f32 %v563, %v1417
      %v1419 = vsel %vm596, %v1418, 0.0
      %1420 = vadd.xlane.f32.xlu0 %v1419
      %v1421 = vpop.xlane.xlu0 %1420
      %v1422 = vrcp.pop 32.0
      %v1423 = vmul.f32 %v1421, %v1422
      %v1424 = vsub.f32 %v1418, %v1423
      %v1425 = vmul.f32 %v1424, %v1424
      %v1426 = vsel %vm596, %v1425, 0.0
      %1427 = vadd.xlane.f32.xlu0 %v1426
      %v1428 = vpop.xlane.xlu0 %1427
      %v1429 = vmul.f32 %v1428, %v1422
      %v1430 = vadd.f32 %v1429, 1e-05
      %v1431 = vrsqrt.pop %v1430
      %v1432 = vmul.f32 %v1424, %v1431
      %v1433 = vld [vmem:[%s12] sm:$0x1]
      %v1435 = vlaneseq
      %v1436 = vshrl.u32 %v1435, 7
      %v1437 = vsub.s32 0, %v1436
      %v1438 = vrot.slane %v1433, %v1437
      %v1440 = vmul.f32 %v1432, %v1438
      %v1441 = vld [vmem:[%s13] sm:$0x1]
      %v1443 = vlaneseq
      %v1444 = vshrl.u32 %v1443, 7
      %v1445 = vsub.s32 0, %v1444
      %v1446 = vrot.slane %v1441, %v1445
      %v1448 = vadd.f32 %v1440, %v1446
      %1449 = vst.msk [vmem:[%s561] sm:$0xff] %vm596, %v1448
      %p1450 = scmp.lt.s32.totalorder %s29, 1
      %s1451 = scalar_select %p1450, %s29, 1
      %p1452 = scmp.lt.s32.totalorder %s30, 0
      %s1453 = scalar_select %p1452, %s30, 0
      %s1454 = sadd.s32 %s1453, %s1451
      %s1455 = smul.addr %s1454, 8
      %s1456 = scalar_lea.vmem %s14, %s1455
      // Predicated region
      $region77: #{two_way_attention_block.5} parent=75 // pred_check
        %p1457 = pneg %p375
      $region78: #{two_way_attention_block.5} parent=75 // pred_check_branch
        %1459 = sbr.rel (%p1457) target = $region80
      $region79: #{two_way_attention_block.5} parent=75 // pred_region
        _
      $region80: #{two_way_attention_block.5} parent=75 // pred_fallthru
        _
    $region76: #{two_way_attention_block.5} parent=5 // pred_fallthru
      _
    %p1460 = scmp.le.s32.totalorder 2, %s20
    // Predicated region
    $region81: #{two_way_attention_block.5} parent=5 // pred_check
      %p1461 = pneg %p1460
    $region82: #{two_way_attention_block.5} parent=5 // pred_check_branch
      %1463 = sbr.rel (%p1461) target = $region84
    $region83: #{two_way_attention_block.5} parent=5 // pred_region
      %s1464 = ssub.s32 %s20, 2
      // Predicated region
      $region85: #{two_way_attention_block.5} parent=83 // pred_check
        %p1465 = pneg %p381
      $region86: #{two_way_attention_block.5} parent=83 // pred_check_branch
        %1467 = sbr.rel (%p1465) target = $region88
      $region87: #{two_way_attention_block.5} parent=83 // pred_region
        %p1468 = scmp.lt.s32.totalorder %s31, 1
        %s1469 = scalar_select %p1468, %s31, 1
        %p1470 = scmp.lt.s32.totalorder %s32, 0
        %s1471 = scalar_select %p1470, %s32, 0
        %s1472 = sadd.s32 %s1471, %s1469
        %s1473 = smul.addr %s1472, 8
        %s1474 = scalar_lea.vmem %s14, %s1473
      $region88: #{two_way_attention_block.5} parent=83 // pred_fallthru
        _
    $region84: #{two_way_attention_block.5} parent=5 // pred_fallthru
      _
  $region6: #{two_way_attention_block.5} parent=0 // loop_footer
    %s24 = sadd.s32 1, %s20
  $region7: #{two_way_attention_block.5} parent=0 // loop_footer_branch
    %19 = sbr.rel target = $region3
  $region8: #{two_way_attention_block.5} parent=0 // loop_exit
    _

// kernel: two_way_attention_block.7
$region0: #{two_way_attention_block.7}
  #allocation0 [shape = 'u32[]', space=smem, size = 0x4, offset = 0x4, fixed_abs, tag = 'smem constant byte address 0x4 - core index']
  #allocation1 [shape = 'u32[144,128]{1,0:T(1,128)}', space=vmem, size = 0x12000, scoped, tag = 'internal scratch']
  %s0 = inlined_call_operand.vmem [shape: f32[2,16,32], index: 0, kind: input, shape index: {}]
  %s1 = inlined_call_operand.vmem [shape: f32[2,16,32], index: 1, kind: input, shape index: {}]
  %s2 = inlined_call_operand.vmem [shape: f32[2,8,32], index: 2, kind: input, shape index: {}]
  %s3 = inlined_call_operand.vmem [shape: f32[2,8,32], index: 3, kind: input, shape index: {}]
  %s4 = inlined_call_operand.vmem [shape: bf16[32,16], index: 4, kind: input, shape index: {}]
  %s5 = inlined_call_operand.vmem [shape: f32[1,16], index: 5, kind: input, shape index: {}]
  %s6 = inlined_call_operand.vmem [shape: bf16[32,16], index: 6, kind: input, shape index: {}]
  %s7 = inlined_call_operand.vmem [shape: f32[1,16], index: 7, kind: input, shape index: {}]
  %s8 = inlined_call_operand.vmem [shape: bf16[32,16], index: 8, kind: input, shape index: {}]
  %s9 = inlined_call_operand.vmem [shape: f32[1,16], index: 9, kind: input, shape index: {}]
  %s10 = inlined_call_operand.vmem [shape: bf16[16,32], index: 10, kind: input, shape index: {}]
  %s11 = inlined_call_operand.vmem [shape: f32[1,32], index: 11, kind: input, shape index: {}]
  %s12 = inlined_call_operand.vmem [shape: f32[1,32], index: 12, kind: input, shape index: {}]
  %s13 = inlined_call_operand.vmem [shape: f32[1,32], index: 13, kind: input, shape index: {}]
  %s14 = inlined_call_operand.hbm [shape: f32[2,16,32], index: 14, kind: output, shape index: {}]
  %s15 = sld [smem:[#allocation0]]
  $region89: #{two_way_attention_block.7} parent=0
    _
  %s17 = ssub.s32 1, %s15
  %s18 = scalar_select 0, %s17, %s15
  $region1: #{two_way_attention_block.7} parent=0
    #allocation2 [shape = 'u8[16384]{0}', space=vmem, size = 0x4000, scoped, tag = 'output window, operand 0']
    #allocation3 [shape = 's32[2]{0}', space=sflag, size = 0x8, scoped, tag = 'scoped memory for two_way_attention_block.7']
    %19 = vsyncpa [#allocation3], 0
    %s20 = scalar_lea.sflag [#allocation3], 1
    %21 = vsyncpa %s20, 0
    loop: start=0, step=1, limit=4
    $region2: #{two_way_attention_block.7} parent=1 // loop_pre_header
      _
    $region3: #{two_way_attention_block.7} parent=1 // loop_header
      %s23 = sphi 0, %s27
      %p24 = scmp.ge.s32.totalorder %s23, 4
      %s30 = sphi 0, %s42
      %s31 = sphi 0, %s38
      %s32 = sphi 0, %s30
      %s33 = sphi 0, %s31
      %s34 = sphi 0, %s32
      %s35 = sphi 0, %s33
      %s47 = sphi 0, %s49
      %s50 = sphi 0, %s47
      %s51 = sphi 0, %s50
      %s67 = sphi 0, %s51
      %s75 = sphi 0, %s77
      %s78 = sphi 0, %s75
      %s79 = sphi 0, %s78
      %s95 = sphi 0, %s79
      %s101 = sphi 0, %s103
      %s104 = sphi 0, %s101
      %s105 = sphi 0, %s104
      %s121 = sphi 0, %s105
      %s127 = sphi 0, %s129
      %s130 = sphi 0, %s127
      %s131 = sphi 0, %s130
      %s147 = sphi 0, %s131
      %s151 = sphi 0, %s151
      %s153 = sphi 0, %s151
      %s154 = sphi 0, %s153
      %s168 = sphi 0, %s154
      %s172 = sphi 0, %s172
      %s174 = sphi 0, %s172
      %s175 = sphi 0, %s174
      %s189 = sphi 0, %s175
      %s193 = sphi 0, %s193
      %s195 = sphi 0, %s193
      %s196 = sphi 0, %s195
      %s210 = sphi 0, %s196
      %s214 = sphi 0, %s214
      %s216 = sphi 0, %s214
      %s217 = sphi 0, %s216
      %s231 = sphi 0, %s217
      %s235 = sphi 0, %s235
      %s237 = sphi 0, %s235
      %s238 = sphi 0, %s237
      %s252 = sphi 0, %s238
      %s256 = sphi 0, %s256
      %s258 = sphi 0, %s256
      %s259 = sphi 0, %s258
      %s273 = sphi 0, %s259
      %s277 = sphi 0, %s277
      %s279 = sphi 0, %s277
      %s280 = sphi 0, %s279
      %s294 = sphi 0, %s280
      %s298 = sphi 0, %s298
      %s300 = sphi 0, %s298
      %s301 = sphi 0, %s300
      %s315 = sphi 0, %s301
      %s319 = sphi 0, %s319
      %s321 = sphi 0, %s319
      %s322 = sphi 0, %s321
      %s336 = sphi 0, %s322
      %s340 = sphi 0, %s340
      %s342 = sphi 0, %s340
      %s343 = sphi 0, %s342
      %s357 = sphi 0, %s343
      %s365 = sphi 0, %s367
      %s368 = sphi 0, %s365
      %s369 = sphi 0, %s368
      %s385 = sphi 0, %s369
    $region4: #{two_way_attention_block.7} parent=1 // loop_header_branch
      %26 = sbr.rel (%p24) target = $region8
    $region5: #{two_way_attention_block.7} parent=1 // loop_body
      %s28 = ssub.s32 %s23, 1
      %s29 = ssub.s32 %s23, 2
      %s36 = sadd.s32 1, %s31
      %p37 = scmp.ge.s32.totalorder %s36, 1
      %s38 = scalar_select %p37, 0, %s36
      %s39 = sadd.s32 1, %s30
      %s40 = scalar_select %p37, %s39, %s30
      %p41 = scmp.ge.s32.totalorder %s40, 2
      %s42 = scalar_select %p41, 0, %s40
      %s43 = ssub.s32 %s30, %s42
      %s44 = ssub.s32 %s31, %s38
      %s45 = sor.u32 %s43, %s44
      %p46 = scmp.eq.s32.totalorder %s45, 0
      %s48 = sadd.s32 %s47, 1
      %s49 = scalar_select %p46, %s47, %s48
      %p52 = pneg %p46
      %p53 = scmp.eq.s32.totalorder %s23, 1
      %p54 = por %p52, %p53
      %p55 = scmp.ne.s32.totalorder %s47, %s50
      %p56 = scmp.eq.s32.totalorder %s23, 0
      %p57 = por %p55, %p56
      %p58 = scmp.ne.s32.totalorder %s47, %s50
      %p59 = scmp.eq.s32.totalorder %s28, 1
      %p60 = por %p58, %p59
      %p61 = scmp.ne.s32.totalorder %s50, %s51
      %p62 = scmp.eq.s32.totalorder %s28, 0
      %p63 = por %p61, %p62
      %p64 = scmp.ne.s32.totalorder %s50, %s51
      %p65 = scmp.eq.s32.totalorder %s29, 1
      %p66 = por %p64, %p65
      %p68 = scmp.ne.s32.totalorder %s51, %s67
      %p69 = scmp.eq.s32.totalorder %s29, 0
      %p70 = por %p68, %p69
      %s71 = ssub.s32 %s30, %s42
      %s72 = ssub.s32 %s31, %s38
      %s73 = sor.u32 %s71, %s72
      %p74 = scmp.eq.s32.totalorder %s73, 0
      %s76 = sadd.s32 %s75, 1
      %s77 = scalar_select %p74, %s75, %s76
      %p80 = pneg %p74
      %p81 = scmp.eq.s32.totalorder %s23, 1
      %p82 = por %p80, %p81
      %p83 = scmp.ne.s32.totalorder %s75, %s78
      %p84 = scmp.eq.s32.totalorder %s23, 0
      %p85 = por %p83, %p84
      %p86 = scmp.ne.s32.totalorder %s75, %s78
      %p87 = scmp.eq.s32.totalorder %s28, 1
      %p88 = por %p86, %p87
      %p89 = scmp.ne.s32.totalorder %s78, %s79
      %p90 = scmp.eq.s32.totalorder %s28, 0
      %p91 = por %p89, %p90
      %p92 = scmp.ne.s32.totalorder %s78, %s79
      %p93 = scmp.eq.s32.totalorder %s29, 1
      %p94 = por %p92, %p93
      %p96 = scmp.ne.s32.totalorder %s79, %s95
      %p97 = scmp.eq.s32.totalorder %s29, 0
      %p98 = por %p96, %p97
      %s99 = ssub.s32 %s30, %s42
      %p100 = scmp.eq.s32.totalorder %s99, 0
      %s102 = sadd.s32 %s101, 1
      %s103 = scalar_select %p100, %s101, %s102
      %p106 = pneg %p100
      %p107 = scmp.eq.s32.totalorder %s23, 1
      %p108 = por %p106, %p107
      %p109 = scmp.ne.s32.totalorder %s101, %s104
      %p110 = scmp.eq.s32.totalorder %s23, 0
      %p111 = por %p109, %p110
      %p112 = scmp.ne.s32.totalorder %s101, %s104
      %p113 = scmp.eq.s32.totalorder %s28, 1
      %p114 = por %p112, %p113
      %p115 = scmp.ne.s32.totalorder %s104, %s105
      %p116 = scmp.eq.s32.totalorder %s28, 0
      %p117 = por %p115, %p116
      %p118 = scmp.ne.s32.totalorder %s104, %s105
      %p119 = scmp.eq.s32.totalorder %s29, 1
      %p120 = por %p118, %p119
      %p122 = scmp.ne.s32.totalorder %s105, %s121
      %p123 = scmp.eq.s32.totalorder %s29, 0
      %p124 = por %p122, %p123
      %s125 = ssub.s32 %s30, %s42
      %p126 = scmp.eq.s32.totalorder %s125, 0
      %s128 = sadd.s32 %s127, 1
      %s129 = scalar_select %p126, %s127, %s128
      %p132 = pneg %p126
      %p133 = scmp.eq.s32.totalorder %s23, 1
      %p134 = por %p132, %p133
      %p135 = scmp.ne.s32.totalorder %s127, %s130
      %p136 = scmp.eq.s32.totalorder %s23, 0
      %p137 = por %p135, %p136
      %p138 = scmp.ne.s32.totalorder %s127, %s130
      %p139 = scmp.eq.s32.totalorder %s28, 1
      %p140 = por %p138, %p139
      %p141 = scmp.ne.s32.totalorder %s130, %s131
      %p142 = scmp.eq.s32.totalorder %s28, 0
      %p143 = por %p141, %p142
      %p144 = scmp.ne.s32.totalorder %s130, %s131
      %p145 = scmp.eq.s32.totalorder %s29, 1
      %p146 = por %p144, %p145
      %p148 = scmp.ne.s32.totalorder %s131, %s147
      %p149 = scmp.eq.s32.totalorder %s29, 0
      %p150 = por %p148, %p149
      %s152 = sadd.s32 %s151, 1
      %p155 = scmp.eq.s32.totalorder %s23, 1
      %p156 = scmp.ne.s32.totalorder %s151, %s153
      %p157 = scmp.eq.s32.totalorder %s23, 0
      %p158 = por %p156, %p157
      %p159 = scmp.ne.s32.totalorder %s151, %s153
      %p160 = scmp.eq.s32.totalorder %s28, 1
      %p161 = por %p159, %p160
      %p162 = scmp.ne.s32.totalorder %s153, %s154
      %p163 = scmp.eq.s32.totalorder %s28, 0
      %p164 = por %p162, %p163
      %p165 = scmp.ne.s32.totalorder %s153, %s154
      %p166 = scmp.eq.s32.totalorder %s29, 1
      %p167 = por %p165, %p166
      %p169 = scmp.ne.s32.totalorder %s154, %s168
      %p170 = scmp.eq.s32.totalorder %s29, 0
      %p171 = por %p169, %p170
      %s173 = sadd.s32 %s172, 1
      %p176 = scmp.eq.s32.totalorder %s23, 1
      %p177 = scmp.ne.s32.totalorder %s172, %s174
      %p178 = scmp.eq.s32.totalorder %s23, 0
      %p179 = por %p177, %p178
      %p180 = scmp.ne.s32.totalorder %s172, %s174
      %p181 = scmp.eq.s32.totalorder %s28, 1
      %p182 = por %p180, %p181
      %p183 = scmp.ne.s32.totalorder %s174, %s175
      %p184 = scmp.eq.s32.totalorder %s28, 0
      %p185 = por %p183, %p184
      %p186 = scmp.ne.s32.totalorder %s174, %s175
      %p187 = scmp.eq.s32.totalorder %s29, 1
      %p188 = por %p186, %p187
      %p190 = scmp.ne.s32.totalorder %s175, %s189
      %p191 = scmp.eq.s32.totalorder %s29, 0
      %p192 = por %p190, %p191
      %s194 = sadd.s32 %s193, 1
      %p197 = scmp.eq.s32.totalorder %s23, 1
      %p198 = scmp.ne.s32.totalorder %s193, %s195
      %p199 = scmp.eq.s32.totalorder %s23, 0
      %p200 = por %p198, %p199
      %p201 = scmp.ne.s32.totalorder %s193, %s195
      %p202 = scmp.eq.s32.totalorder %s28, 1
      %p203 = por %p201, %p202
      %p204 = scmp.ne.s32.totalorder %s195, %s196
      %p205 = scmp.eq.s32.totalorder %s28, 0
      %p206 = por %p204, %p205
      %p207 = scmp.ne.s32.totalorder %s195, %s196
      %p208 = scmp.eq.s32.totalorder %s29, 1
      %p209 = por %p207, %p208
      %p211 = scmp.ne.s32.totalorder %s196, %s210
      %p212 = scmp.eq.s32.totalorder %s29, 0
      %p213 = por %p211, %p212
      %s215 = sadd.s32 %s214, 1
      %p218 = scmp.eq.s32.totalorder %s23, 1
      %p219 = scmp.ne.s32.totalorder %s214, %s216
      %p220 = scmp.eq.s32.totalorder %s23, 0
      %p221 = por %p219, %p220
      %p222 = scmp.ne.s32.totalorder %s214, %s216
      %p223 = scmp.eq.s32.totalorder %s28, 1
      %p224 = por %p222, %p223
      %p225 = scmp.ne.s32.totalorder %s216, %s217
      %p226 = scmp.eq.s32.totalorder %s28, 0
      %p227 = por %p225, %p226
      %p228 = scmp.ne.s32.totalorder %s216, %s217
      %p229 = scmp.eq.s32.totalorder %s29, 1
      %p230 = por %p228, %p229
      %p232 = scmp.ne.s32.totalorder %s217, %s231
      %p233 = scmp.eq.s32.totalorder %s29, 0
      %p234 = por %p232, %p233
      %s236 = sadd.s32 %s235, 1
      %p239 = scmp.eq.s32.totalorder %s23, 1
      %p240 = scmp.ne.s32.totalorder %s235, %s237
      %p241 = scmp.eq.s32.totalorder %s23, 0
      %p242 = por %p240, %p241
      %p243 = scmp.ne.s32.totalorder %s235, %s237
      %p244 = scmp.eq.s32.totalorder %s28, 1
      %p245 = por %p243, %p244
      %p246 = scmp.ne.s32.totalorder %s237, %s238
      %p247 = scmp.eq.s32.totalorder %s28, 0
      %p248 = por %p246, %p247
      %p249 = scmp.ne.s32.totalorder %s237, %s238
      %p250 = scmp.eq.s32.totalorder %s29, 1
      %p251 = por %p249, %p250
      %p253 = scmp.ne.s32.totalorder %s238, %s252
      %p254 = scmp.eq.s32.totalorder %s29, 0
      %p255 = por %p253, %p254
      %s257 = sadd.s32 %s256, 1
      %p260 = scmp.eq.s32.totalorder %s23, 1
      %p261 = scmp.ne.s32.totalorder %s256, %s258
      %p262 = scmp.eq.s32.totalorder %s23, 0
      %p263 = por %p261, %p262
      %p264 = scmp.ne.s32.totalorder %s256, %s258
      %p265 = scmp.eq.s32.totalorder %s28, 1
      %p266 = por %p264, %p265
      %p267 = scmp.ne.s32.totalorder %s258, %s259
      %p268 = scmp.eq.s32.totalorder %s28, 0
      %p269 = por %p267, %p268
      %p270 = scmp.ne.s32.totalorder %s258, %s259
      %p271 = scmp.eq.s32.totalorder %s29, 1
      %p272 = por %p270, %p271
      %p274 = scmp.ne.s32.totalorder %s259, %s273
      %p275 = scmp.eq.s32.totalorder %s29, 0
      %p276 = por %p274, %p275
      %s278 = sadd.s32 %s277, 1
      %p281 = scmp.eq.s32.totalorder %s23, 1
      %p282 = scmp.ne.s32.totalorder %s277, %s279
      %p283 = scmp.eq.s32.totalorder %s23, 0
      %p284 = por %p282, %p283
      %p285 = scmp.ne.s32.totalorder %s277, %s279
      %p286 = scmp.eq.s32.totalorder %s28, 1
      %p287 = por %p285, %p286
      %p288 = scmp.ne.s32.totalorder %s279, %s280
      %p289 = scmp.eq.s32.totalorder %s28, 0
      %p290 = por %p288, %p289
      %p291 = scmp.ne.s32.totalorder %s279, %s280
      %p292 = scmp.eq.s32.totalorder %s29, 1
      %p293 = por %p291, %p292
      %p295 = scmp.ne.s32.totalorder %s280, %s294
      %p296 = scmp.eq.s32.totalorder %s29, 0
      %p297 = por %p295, %p296
      %s299 = sadd.s32 %s298, 1
      %p302 = scmp.eq.s32.totalorder %s23, 1
      %p303 = scmp.ne.s32.totalorder %s298, %s300
      %p304 = scmp.eq.s32.totalorder %s23, 0
      %p305 = por %p303, %p304
      %p306 = scmp.ne.s32.totalorder %s298, %s300
      %p307 = scmp.eq.s32.totalorder %s28, 1
      %p308 = por %p306, %p307
      %p309 = scmp.ne.s32.totalorder %s300, %s301
      %p310 = scmp.eq.s32.totalorder %s28, 0
      %p311 = por %p309, %p310
      %p312 = scmp.ne.s32.totalorder %s300, %s301
      %p313 = scmp.eq.s32.totalorder %s29, 1
      %p314 = por %p312, %p313
      %p316 = scmp.ne.s32.totalorder %s301, %s315
      %p317 = scmp.eq.s32.totalorder %s29, 0
      %p318 = por %p316, %p317
      %s320 = sadd.s32 %s319, 1
      %p323 = scmp.eq.s32.totalorder %s23, 1
      %p324 = scmp.ne.s32.totalorder %s319, %s321
      %p325 = scmp.eq.s32.totalorder %s23, 0
      %p326 = por %p324, %p325
      %p327 = scmp.ne.s32.totalorder %s319, %s321
      %p328 = scmp.eq.s32.totalorder %s28, 1
      %p329 = por %p327, %p328
      %p330 = scmp.ne.s32.totalorder %s321, %s322
      %p331 = scmp.eq.s32.totalorder %s28, 0
      %p332 = por %p330, %p331
      %p333 = scmp.ne.s32.totalorder %s321, %s322
      %p334 = scmp.eq.s32.totalorder %s29, 1
      %p335 = por %p333, %p334
      %p337 = scmp.ne.s32.totalorder %s322, %s336
      %p338 = scmp.eq.s32.totalorder %s29, 0
      %p339 = por %p337, %p338
      %s341 = sadd.s32 %s340, 1
      %p344 = scmp.eq.s32.totalorder %s23, 1
      %p345 = scmp.ne.s32.totalorder %s340, %s342
      %p346 = scmp.eq.s32.totalorder %s23, 0
      %p347 = por %p345, %p346
      %p348 = scmp.ne.s32.totalorder %s340, %s342
      %p349 = scmp.eq.s32.totalorder %s28, 1
      %p350 = por %p348, %p349
      %p351 = scmp.ne.s32.totalorder %s342, %s343
      %p352 = scmp.eq.s32.totalorder %s28, 0
      %p353 = por %p351, %p352
      %p354 = scmp.ne.s32.totalorder %s342, %s343
      %p355 = scmp.eq.s32.totalorder %s29, 1
      %p356 = por %p354, %p355
      %p358 = scmp.ne.s32.totalorder %s343, %s357
      %p359 = scmp.eq.s32.totalorder %s29, 0
      %p360 = por %p358, %p359
      %s361 = ssub.s32 %s30, %s42
      %s362 = ssub.s32 %s31, %s38
      %s363 = sor.u32 %s361, %s362
      %p364 = scmp.eq.s32.totalorder %s363, 0
      %s366 = sadd.s32 %s365, 1
      %s367 = scalar_select %p364, %s365, %s366
      %p370 = pneg %p364
      %p371 = scmp.eq.s32.totalorder %s23, 1
      %p372 = por %p370, %p371
      %p373 = scmp.ne.s32.totalorder %s365, %s368
      %p374 = scmp.eq.s32.totalorder %s23, 0
      %p375 = por %p373, %p374
      %p376 = scmp.ne.s32.totalorder %s365, %s368
      %p377 = scmp.eq.s32.totalorder %s28, 1
      %p378 = por %p376, %p377
      %p379 = scmp.ne.s32.totalorder %s368, %s369
      %p380 = scmp.eq.s32.totalorder %s28, 0
      %p381 = por %p379, %p380
      %p382 = scmp.ne.s32.totalorder %s368, %s369
      %p383 = scmp.eq.s32.totalorder %s29, 1
      %p384 = por %p382, %p383
      %p386 = scmp.ne.s32.totalorder %s369, %s385
      %p387 = scmp.eq.s32.totalorder %s29, 0
      %p388 = por %p386, %p387
      %p389 = scmp.le.s32.totalorder 1, %s23
      %p390 = scmp.lt.s32.totalorder %s23, 3
      %p391 = pnand %p389, %p390
      %p392 = pneg %p391
      // Predicated region
      $region9: #{two_way_attention_block.7} parent=5 // pred_check
        _
      $region10: #{two_way_attention_block.7} parent=5 // pred_check_branch
        %394 = sbr.rel (%p391) target = $region12
      $region11: #{two_way_attention_block.7} parent=5 // pred_region
        %s395 = ssub.s32 %s23, 1
        // Predicated region
        $region13: #{two_way_attention_block.7} parent=11 // pred_check
          %p396 = pneg %p164
        $region14: #{two_way_attention_block.7} parent=11 // pred_check_branch
          %398 = sbr.rel (%p396) target = $region16
        $region15: #{two_way_attention_block.7} parent=11 // pred_region
          _
        $region16: #{two_way_attention_block.7} parent=11 // pred_fallthru
          _
        // Predicated region
        $region17: #{two_way_attention_block.7} parent=11 // pred_check
          %p399 = pneg %p185
        $region18: #{two_way_attention_block.7} parent=11 // pred_check_branch
          %401 = sbr.rel (%p399) target = $region20
        $region19: #{two_way_attention_block.7} parent=11 // pred_region
          _
        $region20: #{two_way_attention_block.7} parent=11 // pred_fallthru
          _
        // Predicated region
        $region21: #{two_way_attention_block.7} parent=11 // pred_check
          %p402 = pneg %p206
        $region22: #{two_way_attention_block.7} parent=11 // pred_check_branch
          %404 = sbr.rel (%p402) target = $region24
        $region23: #{two_way_attention_block.7} parent=11 // pred_region
          _
        $region24: #{two_way_attention_block.7} parent=11 // pred_fallthru
          _
        // Predicated region
        $region25: #{two_way_attention_block.7} parent=11 // pred_check
          %p405 = pneg %p227
        $region26: #{two_way_attention_block.7} parent=11 // pred_check_branch
          %407 = sbr.rel (%p405) target = $region28
        $region27: #{two_way_attention_block.7} parent=11 // pred_region
          _
        $region28: #{two_way_attention_block.7} parent=11 // pred_fallthru
          _
        // Predicated region
        $region29: #{two_way_attention_block.7} parent=11 // pred_check
          %p408 = pneg %p248
        $region30: #{two_way_attention_block.7} parent=11 // pred_check_branch
          %410 = sbr.rel (%p408) target = $region32
        $region31: #{two_way_attention_block.7} parent=11 // pred_region
          _
        $region32: #{two_way_attention_block.7} parent=11 // pred_fallthru
          _
        // Predicated region
        $region33: #{two_way_attention_block.7} parent=11 // pred_check
          %p411 = pneg %p269
        $region34: #{two_way_attention_block.7} parent=11 // pred_check_branch
          %413 = sbr.rel (%p411) target = $region36
        $region35: #{two_way_attention_block.7} parent=11 // pred_region
          _
        $region36: #{two_way_attention_block.7} parent=11 // pred_fallthru
          _
        // Predicated region
        $region37: #{two_way_attention_block.7} parent=11 // pred_check
          %p414 = pneg %p290
        $region38: #{two_way_attention_block.7} parent=11 // pred_check_branch
          %416 = sbr.rel (%p414) target = $region40
        $region39: #{two_way_attention_block.7} parent=11 // pred_region
          _
        $region40: #{two_way_attention_block.7} parent=11 // pred_fallthru
          _
        // Predicated region
        $region41: #{two_way_attention_block.7} parent=11 // pred_check
          %p417 = pneg %p311
        $region42: #{two_way_attention_block.7} parent=11 // pred_check_branch
          %419 = sbr.rel (%p417) target = $region44
        $region43: #{two_way_attention_block.7} parent=11 // pred_region
          _
        $region44: #{two_way_attention_block.7} parent=11 // pred_fallthru
          _
        // Predicated region
        $region45: #{two_way_attention_block.7} parent=11 // pred_check
          %p420 = pneg %p332
        $region46: #{two_way_attention_block.7} parent=11 // pred_check_branch
          %422 = sbr.rel (%p420) target = $region48
        $region47: #{two_way_attention_block.7} parent=11 // pred_region
          _
        $region48: #{two_way_attention_block.7} parent=11 // pred_fallthru
          _
        // Predicated region
        $region49: #{two_way_attention_block.7} parent=11 // pred_check
          %p423 = pneg %p353
        $region50: #{two_way_attention_block.7} parent=11 // pred_check_branch
          %425 = sbr.rel (%p423) target = $region52
        $region51: #{two_way_attention_block.7} parent=11 // pred_region
          _
        $region52: #{two_way_attention_block.7} parent=11 // pred_fallthru
          _
      $region12: #{two_way_attention_block.7} parent=5 // pred_fallthru
        _
      %p426 = scmp.lt.s32.totalorder %s23, 2
      // Predicated region
      $region53: #{two_way_attention_block.7} parent=5 // pred_check
        %p427 = pneg %p426
      $region54: #{two_way_attention_block.7} parent=5 // pred_check_branch
        %429 = sbr.rel (%p427) target = $region56
      $region55: #{two_way_attention_block.7} parent=5 // pred_region
        // Predicated region
        $region57: #{two_way_attention_block.7} parent=55 // pred_check
          %p430 = pneg %p57
        $region58: #{two_way_attention_block.7} parent=55 // pred_check_branch
          %432 = sbr.rel (%p430) target = $region60
        $region59: #{two_way_attention_block.7} parent=55 // pred_region
          %s433 = smul.u32 2, %s31
          %p434 = scmp.lt.s32.totalorder %s30, 1
          %s435 = scalar_select %p434, %s30, 1
          %p436 = scmp.lt.s32.totalorder %s433, 1
          %s437 = scalar_select %p436, %s433, 1
          %s438 = smul.addr %s435, 2
          %s439 = sadd.s32 %s437, %s438
          %s440 = smul.addr %s439, 8
          %s441 = scalar_lea.vmem %s0, %s440
          %s442 = smul.u32 2, %s31
        $region60: #{two_way_attention_block.7} parent=55 // pred_fallthru
          _
        // Predicated region
        $region61: #{two_way_attention_block.7} parent=55 // pred_check
          %p443 = pneg %p85
        $region62: #{two_way_attention_block.7} parent=55 // pred_check_branch
          %445 = sbr.rel (%p443) target = $region64
        $region63: #{two_way_attention_block.7} parent=55 // pred_region
          %s446 = smul.u32 2, %s31
          %p447 = scmp.lt.s32.totalorder %s30, 1
          %s448 = scalar_select %p447, %s30, 1
          %p449 = scmp.lt.s32.totalorder %s446, 1
          %s450 = scalar_select %p449, %s446, 1
          %s451 = smul.addr %s448, 2
          %s452 = sadd.s32 %s450, %s451
          %s453 = smul.addr %s452, 8
          %s454 = scalar_lea.vmem %s1, %s453
          %s455 = smul.u32 2, %s31
        $region64: #{two_way_attention_block.7} parent=55 // pred_fallthru
          _
        // Predicated region
        $region65: #{two_way_attention_block.7} parent=55 // pred_check
          %p456 = pneg %p111
        $region66: #{two_way_attention_block.7} parent=55 // pred_check_branch
          %458 = sbr.rel (%p456) target = $region68
        $region67: #{two_way_attention_block.7} parent=55 // pred_region
          %p459 = scmp.lt.s32.totalorder %s30, 1
          %s460 = scalar_select %p459, %s30, 1
          %s461 = smul.addr %s460, 8
          %s462 = scalar_lea.vmem %s2, %s461
        $region68: #{two_way_attention_block.7} parent=55 // pred_fallthru
          _
        // Predicated region
        $region69: #{two_way_attention_block.7} parent=55 // pred_check
          %p463 = pneg %p137
        $region70: #{two_way_attention_block.7} parent=55 // pred_check_branch
          %465 = sbr.rel (%p463) target = $region72
        $region71: #{two_way_attention_block.7} parent=55 // pred_region
          %p466 = scmp.lt.s32.totalorder %s30, 1
          %s467 = scalar_select %p466, %s30, 1
          %s468 = smul.addr %s467, 8
          %s469 = scalar_lea.vmem %s3, %s468
        $region72: #{two_way_attention_block.7} parent=55 // pred_fallthru
          _
      $region56: #{two_way_attention_block.7} parent=5 // pred_fallthru
        _
      %p470 = scmp.le.s32.totalorder 1, %s23
      %p471 = scmp.lt.s32.totalorder %s23, 3
      %p472 = pnand %p470, %p471
      %p473 = pneg %p472
      // Predicated region
      $region73: #{two_way_attention_block.7} parent=5 // pred_check
        _
      $region74: #{two_way_attention_block.7} parent=5 // pred_check_branch
        %475 = sbr.rel (%p472) target = $region76
      $region75: #{two_way_attention_block.7} parent=5 // pred_region
        %s476 = ssub.s32 %s23, 1
        %s477 = smul.u32 2, %s33
        %p478 = scmp.lt.s32.totalorder %s32, 1
        %s479 = scalar_select %p478, %s32, 1
        %p480 = scmp.lt.s32.totalorder %s477, 1
        %s481 = scalar_select %p480, %s477, 1
        %s482 = smul.addr %s479, 2
        %s483 = sadd.s32 %s481, %s482
        %s484 = smul.addr %s483, 8
        %s485 = scalar_lea.vmem %s0, %s484
        %p486 = pneg %p63
        %p487 = pneg %p60
        %s488 = smul.u32 2, %s33
        %p489 = scmp.lt.s32.totalorder %s32, 1
        %s490 = scalar_select %p489, %s32, 1
        %p491 = scmp.lt.s32.totalorder %s488, 1
        %s492 = scalar_select %p491, %s488, 1
        %s493 = smul.addr %s490, 2
        %s494 = sadd.s32 %s492, %s493
        %s495 = smul.addr %s494, 8
        %s496 = scalar_lea.vmem %s1, %s495
        %p497 = pneg %p91
        %p498 = pneg %p88
        %p499 = scmp.lt.s32.totalorder %s32, 1
        %s500 = scalar_select %p499, %s32, 1
        %s501 = smul.addr %s500, 8
        %s502 = scalar_lea.vmem %s2, %s501
        %p503 = pneg %p117
        %p504 = pneg %p114
        %p505 = scmp.lt.s32.totalorder %s32, 1
        %s506 = scalar_select %p505, %s32, 1
        %s507 = smul.addr %s506, 8
        %s508 = scalar_lea.vmem %s3, %s507
        %p509 = pneg %p143
        %p510 = pneg %p140
        %p511 = pneg %p164
        %p512 = pneg %p161
        %p513 = pneg %p185
        %p514 = pneg %p182
        %p515 = pneg %p206
        %p516 = pneg %p203
        %p517 = pneg %p227
        %p518 = pneg %p224
        %p519 = pneg %p248
        %p520 = pneg %p245
        %p521 = pneg %p269
        %p522 = pneg %p266
        %p523 = pneg %p290
        %p524 = pneg %p287
        %p525 = pneg %p311
        %p526 = pneg %p308
        %p527 = pneg %p332
        %p528 = pneg %p329
        %p529 = pneg %p353
        %p530 = pneg %p350
        %p531 = pneg %p381
        %p532 = pneg %p378
        %s533 = sand.u32 %s368, 1
        %s534 = scalar_lea.sflag [#allocation3], %s533
        %s535 = sand.u32 %s368, 1
        %s536 = smul.addr %s535, 16
        %s537 = scalar_lea.vmem [#allocation2], %s536
        %s538 = smul.u32 2, %s33
        %p539 = scmp.lt.s32.totalorder %s32, 1
        %s540 = scalar_select %p539, %s32, 1
        %p541 = scmp.lt.s32.totalorder %s538, 1
        %s542 = scalar_select %p541, %s538, 1
        %s543 = smul.addr %s540, 2
        %s544 = sadd.s32 %s542, %s543
        %s545 = smul.addr %s544, 8
        %s546 = scalar_lea.vmem %s0, %s545
        %s547 = smul.u32 2, %s33
        %s548 = smul.u32 2, %s33
        %p549 = scmp.lt.s32.totalorder %s32, 1
        %s550 = scalar_select %p549, %s32, 1
        %p551 = scmp.lt.s32.totalorder %s548, 1
        %s552 = scalar_select %p551, %s548, 1
        %s553 = smul.addr %s550, 2
        %s554 = sadd.s32 %s552, %s553
        %s555 = smul.addr %s554, 8
        %s556 = scalar_lea.vmem %s1, %s555
        %s557 = smul.u32 2, %s33
        %p558 = scmp.lt.s32.totalorder %s32, 1
        %s559 = scalar_select %p558, %s32, 1
        %s560 = smul.addr %s559, 8
        %s561 = scalar_lea.vmem %s2, %s560
        %p562 = scmp.lt.s32.totalorder %s32, 1
        %s563 = scalar_select %p562, %s32, 1
        %s564 = smul.addr %s563, 8
        %s565 = scalar_lea.vmem %s3, %s564
        %s566 = smul.u32 2, %s33
        %v568 = vld [vmem:[%s546] sm:$0xff]
        %v569 = vld [vmem:[%s546 + $0x8] sm:$0xff]
        %v570 = vld [vmem:[%s556] sm:$0xff]
        %v571 = vld [vmem:[%s556 + $0x8] sm:$0xff]
        %v572 = vadd.f32 %v568, %v570
        %v573 = vadd.f32 %v569, %v571
        %v574 = vld [vmem:[%s561] sm:$0xff]
        %v575 = vld [vmem:[%s565] sm:$0xff]
        %v576 = vadd.f32 %v574, %v575
        %v577 = vpack.c.bf16 %v573, %v572
        %v578 = vld [vmem:[%s4] sm:$0xf]
        %v579 = vld [vmem:[%s4 + $0x4] sm:$0xf]
        %v580 = vld [vmem:[%s4 + $0x8] sm:$0xf]
        %v581 = vld [vmem:[%s4 + $0xc] sm:$0xf]
        %v582 = vld [vmem:[%s5] sm:$0x1]
        %v584 = vlaneseq
        %v585 = vshrl.u32 %v584, 7
        %v586 = vsub.s32 0, %v585
        %v587 = vrot.slane %v582, %v586
        %v593 = vunpack.c.l.b16 %v578
        %v594 = vunpack.c.l.b16 %v579
        %v595 = vunpack.c.l.b16 %v580
        %v596 = vunpack.c.l.b16 %v581
        %v597 = vpack.c.b16 %v594, %v593
        %v598 = vpack.c.b16 %v596, %v595
        %vm601 = vcmask 261120
        %v603 = vsel %vm601, %v577, 0
        %605 = vmatprep.subr.bf16.mxu0 0
        %606 = vmatpush1.bf16.msra.mxu0 0
        %607 = vmatprep.subr.bf16.mxu0 0
        %608 = vmatpush1.bf16.msra.mxu0 0
        %609 = vmatprep.subr.bf16.mxu0 0
        %610 = vmatpush1.bf16.msra.mxu0 0
        %611 = vmatprep.subr.bf16.mxu0 0
        %612 = vmatpush1.bf16.msra.mxu0 0
        %613 = vmatprep.subr.bf16.mxu0 0
        %614 = vmatpush1.bf16.msra.mxu0 0
        %615 = vmatprep.subr.bf16.mxu0 0
        %616 = vmatpush1.bf16.msra.mxu0 0
        %617 = vmatprep.subr.bf16.mxu0 0
        %618 = vmatpush1.bf16.msra.mxu0 %v598
        %619 = vmatprep.subr.bf16.mxu0 0
        %620 = vmatpush1.bf16.msra.mxu0 %v597
        %621 = vmatprep.subr.bf16.mxu0 0
        %622 = vmatpush2.bf16.msra.mxu0 0
        %623 = vmatprep.subr.bf16.mxu0 0
        %624 = vmatpush2.bf16.msra.mxu0 0
        %625 = vmatprep.subr.bf16.mxu0 0
        %626 = vmatpush2.bf16.msra.mxu0 0
        %627 = vmatprep.subr.bf16.mxu0 0
        %628 = vmatpush2.bf16.msra.mxu0 0
        %629 = vmatprep.subr.bf16.mxu0 0
        %630 = vmatpush2.bf16.msra.mxu0 0
        %631 = vmatprep.subr.bf16.mxu0 0
        %632 = vmatpush2.bf16.msra.mxu0 0
        %633 = vmatprep.subr.bf16.mxu0 0
        %634 = vmatpush2.bf16.msra.mxu0 0
        %635 = vmatprep.subr.bf16.mxu0 0
        %636 = vmatpush2.bf16.msra.mxu0 0
        %637 = vmatprep.mubr.bf16.mxu0 0
        %638 = vmatmul.mubr.bf16.gmra.mxu0 %v603
        %v639 = vpop.f32.mrf.mxu0
        %v640 = vadd.f32 %v587, %v639
        %v641 = vpop.f32.mrf.mxu0
        %v642 = vpop.f32.mrf.mxu0
        %v643 = vadd.f32 %v587, %v642
        %v644 = vpop.f32.mrf.mxu0
        %645 = vdwg.mxu0
        %v646 = vpack.c.bf16 %v576, %v576
        %v647 = vld [vmem:[%s6] sm:$0xf]
        %v648 = vld [vmem:[%s6 + $0x4] sm:$0xf]
        %v649 = vld [vmem:[%s6 + $0x8] sm:$0xf]
        %v650 = vld [vmem:[%s6 + $0xc] sm:$0xf]
        %v651 = vld [vmem:[%s7] sm:$0x1]
        %v653 = vlaneseq
        %v654 = vshrl.u32 %v653, 7
        %v655 = vsub.s32 0, %v654
        %v656 = vrot.slane %v651, %v655
        %v662 = vunpack.c.l.b16 %v647
        %v663 = vunpack.c.l.b16 %v648
        %v664 = vunpack.c.l.b16 %v649
        %v665 = vunpack.c.l.b16 %v650
        %v666 = vpack.c.b16 %v663, %v662
        %v667 = vpack.c.b16 %v665, %v664
        %v671 = vsel %vm601, %v646, 0
        %673 = vmatprep.subr.bf16.mxu0 0
        %674 = vmatpush1.bf16.msra.mxu0 0
        %675 = vmatprep.subr.bf16.mxu0 0
        %676 = vmatpush1.bf16.msra.mxu0 0
        %677 = vmatprep.subr.bf16.mxu0 0
        %678 = vmatpush1.bf16.msra.mxu0 0
        %679 = vmatprep.subr.bf16.mxu0 0
        %680 = vmatpush1.bf16.msra.mxu0 0
        %681 = vmatprep.subr.bf16.mxu0 0
        %682 = vmatpush1.bf16.msra.mxu0 0
        %683 = vmatprep.subr.bf16.mxu0 0
        %684 = vmatpush1.bf16.msra.mxu0 0
        %685 = vmatprep.subr.bf16.mxu0 0
        %686 = vmatpush1.bf16.msra.mxu0 %v667
        %687 = vmatprep.subr.bf16.mxu0 0
        %688 = vmatpush1.bf16.msra.mxu0 %v666
        %689 = vmatprep.subr.bf16.mxu0 0
        %690 = vmatpush2.bf16.msra.mxu0 0
        %691 = vmatprep.subr.bf16.mxu0 0
        %692 = vmatpush2.bf16.msra.mxu0 0
        %693 = vmatprep.subr.bf16.mxu0 0
        %694 = vmatpush2.bf16.msra.mxu0 0
        %695 = vmatprep.subr.bf16.mxu0 0
        %696 = vmatpush2.bf16.msra.mxu0 0
        %697 = vmatprep.subr.bf16.mxu0 0
        %698 = vmatpush2.bf16.msra.mxu0 0
        %699 = vmatprep.subr.bf16.mxu0 0
        %700 = vmatpush2.bf16.msra.mxu0 0
        %701 = vmatprep.subr.bf16.mxu0 0
        %702 = vmatpush2.bf16.msra.mxu0 0
        %703 = vmatprep.subr.bf16.mxu0 0
        %704 = vmatpush2.bf16.msra.mxu0 0
        %705 = vmatprep.mubr.bf16.mxu0 0
        %706 = vmatmul.mubr.bf16.gmra.mxu0 %v671
        %v707 = vpop.f32.mrf.mxu0
        %v708 = vadd.f32 %v656, %v707
        %v709 = vpop.f32.mrf.mxu0
        %v710 = vpop.f32.mrf.mxu0
        %v711 = vpop.f32.mrf.mxu0
        %712 = vdwg.mxu0
        %v713 = vpack.c.bf16 %v574, %v574
        %v714 = vld [vmem:[%s8] sm:$0xf]
        %v715 = vld [vmem:[%s8 + $0x4] sm:$0xf]
        %v716 = vld [vmem:[%s8 + $0x8] sm:$0xf]
        %v717 = vld [vmem:[%s8 + $0xc] sm:$0xf]
        %v718 = vld [vmem:[%s9] sm:$0x1]
        %v720 = vlaneseq
        %v721 = vshrl.u32 %v720, 7
        %v722 = vsub.s32 0, %v721
        %v723 = vrot.slane %v718, %v722
        %v729 = vunpack.c.l.b16 %v714
        %v730 = vunpack.c.l.b16 %v715
        %v731 = vunpack.c.l.b16 %v716
        %v732 = vunpack.c.l.b16 %v717
        %v733 = vpack.c.b16 %v730, %v729
        %v734 = vpack.c.b16 %v732, %v731
        %v738 = vsel %vm601, %v713, 0
        %740 = vmatprep.subr.bf16.mxu0 0
        %741 = vmatpush1.bf16.msra.mxu0 0
        %742 = vmatprep.subr.bf16.mxu0 0
        %743 = vmatpush1.bf16.msra.mxu0 0
        %744 = vmatprep.subr.bf16.mxu0 0
        %745 = vmatpush1.bf16.msra.mxu0 0
        %746 = vmatprep.subr.bf16.mxu0 0
        %747 = vmatpush1.bf16.msra.mxu0 0
        %748 = vmatprep.subr.bf16.mxu0 0
        %749 = vmatpush1.bf16.msra.mxu0 0
        %750 = vmatprep.subr.bf16.mxu0 0
        %751 = vmatpush1.bf16.msra.mxu0 0
        %752 = vmatprep.subr.bf16.mxu0 0
        %753 = vmatpush1.bf16.msra.mxu0 %v734
        %754 = vmatprep.subr.bf16.mxu0 0
        %755 = vmatpush1.bf16.msra.mxu0 %v733
        %756 = vmatprep.subr.bf16.mxu0 0
        %757 = vmatpush2.bf16.msra.mxu0 0
        %758 = vmatprep.subr.bf16.mxu0 0
        %759 = vmatpush2.bf16.msra.mxu0 0
        %760 = vmatprep.subr.bf16.mxu0 0
        %761 = vmatpush2.bf16.msra.mxu0 0
        %762 = vmatprep.subr.bf16.mxu0 0
        %763 = vmatpush2.bf16.msra.mxu0 0
        %764 = vmatprep.subr.bf16.mxu0 0
        %765 = vmatpush2.bf16.msra.mxu0 0
        %766 = vmatprep.subr.bf16.mxu0 0
        %767 = vmatpush2.bf16.msra.mxu0 0
        %768 = vmatprep.subr.bf16.mxu0 0
        %769 = vmatpush2.bf16.msra.mxu0 0
        %770 = vmatprep.subr.bf16.mxu0 0
        %771 = vmatpush2.bf16.msra.mxu0 0
        %772 = vmatprep.mubr.bf16.mxu0 0
        %773 = vmatmul.mubr.bf16.gmra.mxu0 %v738
        %v774 = vpop.f32.mrf.mxu0
        %v775 = vadd.f32 %v723, %v774
        %v776 = vpop.f32.mrf.mxu0
        %v777 = vpop.f32.mrf.mxu0
        %v778 = vpop.f32.mrf.mxu0
        %779 = vdwg.mxu0
        %v780 = vld [vmem:[%s10] sm:$0xf]
        %v781 = vld [vmem:[%s10 + $0x4] sm:$0xf]
        %v782 = vpack.c.bf16 %v643, %v640
        %v783 = vpack.c.bf16 %v708, %v708
        %v784 = vpack.c.bf16 %v775, %v775
        %vm785 = vcmask 31744
        %v787 = vsel %vm785, %v782, 0
        %v790 = vsel %vm785, %v783, 0
        %792 = vmatprep.subr.bf16.mxu0 0
        %793 = vmatpush1.bf16.xpose.msra.mxu0 0
        %794 = vmatprep.subr.bf16.mxu0 0
        %795 = vmatpush1.bf16.xpose.msra.mxu0 0
        %796 = vmatprep.subr.bf16.mxu0 0
        %797 = vmatpush1.bf16.xpose.msra.mxu0 0
        %798 = vmatprep.subr.bf16.mxu0 0
        %799 = vmatpush1.bf16.xpose.msra.mxu0 0
        %800 = vmatprep.subr.bf16.mxu0 0
        %801 = vmatpush1.bf16.xpose.msra.mxu0 0
        %802 = vmatprep.subr.bf16.mxu0 0
        %803 = vmatpush1.bf16.xpose.msra.mxu0 0
        %804 = vmatprep.subr.bf16.mxu0 0
        %805 = vmatpush1.bf16.xpose.msra.mxu0 0
        %806 = vmatprep.subr.bf16.mxu0 0
        %807 = vmatpush1.bf16.xpose.msra.mxu0 %v790
        %808 = vmatprep.subr.bf16.mxu0 0
        %809 = vmatpush2.bf16.xpose.msra.mxu0 0
        %810 = vmatprep.subr.bf16.mxu0 0
        %811 = vmatpush2.bf16.xpose.msra.mxu0 0
        %812 = vmatprep.subr.bf16.mxu0 0
        %813 = vmatpush2.bf16.xpose.msra.mxu0 0
        %814 = vmatprep.subr.bf16.mxu0 0
        %815 = vmatpush2.bf16.xpose.msra.mxu0 0
        %816 = vmatprep.subr.bf16.mxu0 0
        %817 = vmatpush2.bf16.xpose.msra.mxu0 0
        %818 = vmatprep.subr.bf16.mxu0 0
        %819 = vmatpush2.bf16.xpose.msra.mxu0 0
        %820 = vmatprep.subr.bf16.mxu0 0
        %821 = vmatpush2.bf16.xpose.msra.mxu0 0
        %822 = vmatprep.subr.bf16.mxu0 0
        %823 = vmatpush2.bf16.xpose.msra.mxu0 0
        %824 = vmatprep.mubr.bf16.mxu0 0
        %825 = vmatmul.mubr.bf16.gmra.mxu0 %v787
        %v826 = vpop.f32.mrf.mxu0
        %v827 = vadd.f32 0.0, %v826
        %v828 = vpop.f32.mrf.mxu0
        %v829 = vpop.f32.mrf.mxu0
        %v830 = vadd.f32 0.0, %v829
        %v831 = vpop.f32.mrf.mxu0
        %832 = vdwg.mxu0
        %vm833 = vcmask 64512
        %v834 = vsel %vm833, %v827, -inf
        %835 = vmax.xlane.f32.xlu0 %v834
        %v836 = vpop.xlane.xlu0 %835
        %v837 = vsel %vm833, %v830, -inf
        %838 = vmax.xlane.f32.xlu0 %v837
        %v839 = vpop.xlane.xlu0 %838
        %v840 = vsub.f32 %v827, %v836
        %v841 = vsub.f32 %v830, %v839
        %v842 = vmul.f32 %v840, 1.442695
        %v843 = vpow.pop %v842
        %v844 = vmul.f32 %v841, 1.442695
        %v845 = vpow.pop %v844
        %v846 = vsel %vm833, %v843, 0.0
        %847 = vadd.xlane.f32.xlu0 %v846
        %v848 = vpop.xlane.xlu0 %847
        %v849 = vsel %vm833, %v845, 0.0
        %850 = vadd.xlane.f32.xlu0 %v849
        %v851 = vpop.xlane.xlu0 %850
        %v852 = vrcp.pop %v848
        %v853 = vrcp.pop %v851
        %v854 = vpack.c.bf16 %v845, %v843
        %v856 = vsel %vm833, %v854, 0
        %vm858 = vcmask 1043456
        %v860 = vsel %vm858, %v784, 0
        %862 = vmatprep.subr.bf16.mxu0 0
        %863 = vmatpush1.bf16.msra.mxu0 0
        %864 = vmatprep.subr.bf16.mxu0 0
        %865 = vmatpush1.bf16.msra.mxu0 0
        %866 = vmatprep.subr.bf16.mxu0 0
        %867 = vmatpush1.bf16.msra.mxu0 0
        %868 = vmatprep.subr.bf16.mxu0 0
        %869 = vmatpush1.bf16.msra.mxu0 0
        %870 = vmatprep.subr.bf16.mxu0 0
        %871 = vmatpush1.bf16.msra.mxu0 0
        %872 = vmatprep.subr.bf16.mxu0 0
        %873 = vmatpush1.bf16.msra.mxu0 0
        %874 = vmatprep.subr.bf16.mxu0 0
        %875 = vmatpush1.bf16.msra.mxu0 0
        %876 = vmatprep.subr.bf16.mxu0 0
        %877 = vmatpush1.bf16.msra.mxu0 %v860
        %878 = vmatprep.subr.bf16.mxu0 0
        %879 = vmatpush2.bf16.msra.mxu0 0
        %880 = vmatprep.subr.bf16.mxu0 0
        %881 = vmatpush2.bf16.msra.mxu0 0
        %882 = vmatprep.subr.bf16.mxu0 0
        %883 = vmatpush2.bf16.msra.mxu0 0
        %884 = vmatprep.subr.bf16.mxu0 0
        %885 = vmatpush2.bf16.msra.mxu0 0
        %886 = vmatprep.subr.bf16.mxu0 0
        %887 = vmatpush2.bf16.msra.mxu0 0
        %888 = vmatprep.subr.bf16.mxu0 0
        %889 = vmatpush2.bf16.msra.mxu0 0
        %890 = vmatprep.subr.bf16.mxu0 0
        %891 = vmatpush2.bf16.msra.mxu0 0
        %892 = vmatprep.subr.bf16.mxu0 0
        %893 = vmatpush2.bf16.msra.mxu0 0
        %894 = vmatprep.mubr.bf16.mxu0 0
        %895 = vmatmul.mubr.bf16.gmra.mxu0 %v856
        %v896 = vpop.f32.mrf.mxu0
        %v897 = vadd.f32 0.0, %v896
        %v898 = vpop.f32.mrf.mxu0
        %v899 = vpop.f32.mrf.mxu0
        %v900 = vadd.f32 0.0, %v899
        %v901 = vpop.f32.mrf.mxu0
        %902 = vdwg.mxu0
        %v903 = vmul.f32 %v897, %v852
        %v904 = vmul.f32 %v900, %v853
        %v905 = vpack.c.bf16 %v904, %v903
        %907 = vrot.lane.b32.xlu0 %v782, 124
        %v908 = vpop.permute.xlu0 %907
        %910 = vrot.lane.b32.xlu0 %v783, 124
        %v911 = vpop.permute.xlu0 %910
        %v913 = vsel %vm785, %v908, 0
        %v916 = vsel %vm785, %v911, 0
        %918 = vmatprep.subr.bf16.mxu0 0
        %919 = vmatpush1.bf16.xpose.msra.mxu0 0
        %920 = vmatprep.subr.bf16.mxu0 0
        %921 = vmatpush1.bf16.xpose.msra.mxu0 0
        %922 = vmatprep.subr.bf16.mxu0 0
        %923 = vmatpush1.bf16.xpose.msra.mxu0 0
        %924 = vmatprep.subr.bf16.mxu0 0
        %925 = vmatpush1.bf16.xpose.msra.mxu0 0
        %926 = vmatprep.subr.bf16.mxu0 0
        %927 = vmatpush1.bf16.xpose.msra.mxu0 0
        %928 = vmatprep.subr.bf16.mxu0 0
        %929 = vmatpush1.bf16.xpose.msra.mxu0 0
        %930 = vmatprep.subr.bf16.mxu0 0
        %931 = vmatpush1.bf16.xpose.msra.mxu0 0
        %932 = vmatprep.subr.bf16.mxu0 0
        %933 = vmatpush1.bf16.xpose.msra.mxu0 %v916
        %934 = vmatprep.subr.bf16.mxu0 0
        %935 = vmatpush2.bf16.xpose.msra.mxu0 0
        %936 = vmatprep.subr.bf16.mxu0 0
        %937 = vmatpush2.bf16.xpose.msra.mxu0 0
        %938 = vmatprep.subr.bf16.mxu0 0
        %939 = vmatpush2.bf16.xpose.msra.mxu0 0
        %940 = vmatprep.subr.bf16.mxu0 0
        %941 = vmatpush2.bf16.xpose.msra.mxu0 0
        %942 = vmatprep.subr.bf16.mxu0 0
        %943 = vmatpush2.bf16.xpose.msra.mxu0 0
        %944 = vmatprep.subr.bf16.mxu0 0
        %945 = vmatpush2.bf16.xpose.msra.mxu0 0
        %946 = vmatprep.subr.bf16.mxu0 0
        %947 = vmatpush2.bf16.xpose.msra.mxu0 0
        %948 = vmatprep.subr.bf16.mxu0 0
        %949 = vmatpush2.bf16.xpose.msra.mxu0 0
        %950 = vmatprep.mubr.bf16.mxu0 0
        %951 = vmatmul.mubr.bf16.gmra.mxu0 %v913
        %v952 = vpop.f32.mrf.mxu0
        %v953 = vadd.f32 0.0, %v952
        %v954 = vpop.f32.mrf.mxu0
        %v955 = vpop.f32.mrf.mxu0
        %v956 = vadd.f32 0.0, %v955
        %v957 = vpop.f32.mrf.mxu0
        %958 = vdwg.mxu0
        %v959 = vsel %vm833, %v953, -inf
        %960 = vmax.xlane.f32.xlu0 %v959
        %v961 = vpop.xlane.xlu0 %960
        %v962 = vsel %vm833, %v956, -inf
        %963 = vmax.xlane.f32.xlu0 %v962
        %v964 = vpop.xlane.xlu0 %963
        %v965 = vsub.f32 %v953, %v961
        %v966 = vsub.f32 %v956, %v964
        %v967 = vmul.f32 %v965, 1.442695
        %v968 = vpow.pop %v967
        %v969 = vmul.f32 %v966, 1.442695
        %v970 = vpow.pop %v969
        %v971 = vsel %vm833, %v968, 0.0
        %972 = vadd.xlane.f32.xlu0 %v971
        %v973 = vpop.xlane.xlu0 %972
        %v974 = vsel %vm833, %v970, 0.0
        %975 = vadd.xlane.f32.xlu0 %v974
        %v976 = vpop.xlane.xlu0 %975
        %v977 = vrcp.pop %v973
        %v978 = vrcp.pop %v976
        %v979 = vpack.c.bf16 %v970, %v968
        %981 = vrot.lane.b32.xlu0 %v784, 124
        %v982 = vpop.permute.xlu0 %981
        %v984 = vsel %vm833, %v979, 0
        %v987 = vsel %vm858, %v982, 0
        %989 = vmatprep.subr.bf16.mxu0 0
        %990 = vmatpush1.bf16.msra.mxu0 0
        %991 = vmatprep.subr.bf16.mxu0 0
        %992 = vmatpush1.bf16.msra.mxu0 0
        %993 = vmatprep.subr.bf16.mxu0 0
        %994 = vmatpush1.bf16.msra.mxu0 0
        %995 = vmatprep.subr.bf16.mxu0 0
        %996 = vmatpush1.bf16.msra.mxu0 0
        %997 = vmatprep.subr.bf16.mxu0 0
        %998 = vmatpush1.bf16.msra.mxu0 0
        %999 = vmatprep.subr.bf16.mxu0 0
        %1000 = vmatpush1.bf16.msra.mxu0 0
        %1001 = vmatprep.subr.bf16.mxu0 0
        %1002 = vmatpush1.bf16.msra.mxu0 0
        %1003 = vmatprep.subr.bf16.mxu0 0
        %1004 = vmatpush1.bf16.msra.mxu0 %v987
        %1005 = vmatprep.subr.bf16.mxu0 0
        %1006 = vmatpush2.bf16.msra.mxu0 0
        %1007 = vmatprep.subr.bf16.mxu0 0
        %1008 = vmatpush2.bf16.msra.mxu0 0
        %1009 = vmatprep.subr.bf16.mxu0 0
        %1010 = vmatpush2.bf16.msra.mxu0 0
        %1011 = vmatprep.subr.bf16.mxu0 0
        %1012 = vmatpush2.bf16.msra.mxu0 0
        %1013 = vmatprep.subr.bf16.mxu0 0
        %1014 = vmatpush2.bf16.msra.mxu0 0
        %1015 = vmatprep.subr.bf16.mxu0 0
        %1016 = vmatpush2.bf16.msra.mxu0 0
        %1017 = vmatprep.subr.bf16.mxu0 0
        %1018 = vmatpush2.bf16.msra.mxu0 0
        %1019 = vmatprep.subr.bf16.mxu0 0
        %1020 = vmatpush2.bf16.msra.mxu0 0
        %1021 = vmatprep.mubr.bf16.mxu0 0
        %1022 = vmatmul.mubr.bf16.gmra.mxu0 %v984
        %v1023 = vpop.f32.mrf.mxu0
        %v1024 = vadd.f32 0.0, %v1023
        %v1025 = vpop.f32.mrf.mxu0
        %v1026 = vpop.f32.mrf.mxu0
        %v1027 = vadd.f32 0.0, %v1026
        %v1028 = vpop.f32.mrf.mxu0
        %1029 = vdwg.mxu0
        %v1030 = vmul.f32 %v1024, %v977
        %v1031 = vmul.f32 %v1027, %v978
        %v1032 = vpack.c.bf16 %v1031, %v1030
        %v1034 = vunpack.c.l.b16 %v780
        %v1035 = vpack.c.b16 %v1034, %v1034
        %v1036 = vrot.slane %v1035, 2
        %v1038 = vsel %vm785, %v1032, 0
        %vm1040 = vcmask 1041408
        %v1042 = vsel %vm1040, %v1036, 0
        %1044 = vmatprep.subr.bf16.mxu0 0
        %1045 = vmatpush1.bf16.msra.mxu0 0
        %1046 = vmatprep.subr.bf16.mxu0 0
        %1047 = vmatpush1.bf16.msra.mxu0 0
        %1048 = vmatprep.subr.bf16.mxu0 0
        %1049 = vmatpush1.bf16.msra.mxu0 0
        %1050 = vmatprep.subr.bf16.mxu0 0
        %1051 = vmatpush1.bf16.msra.mxu0 0
        %1052 = vmatprep.subr.bf16.mxu0 0
        %1053 = vmatpush1.bf16.msra.mxu0 0
        %1054 = vmatprep.subr.bf16.mxu0 0
        %1055 = vmatpush1.bf16.msra.mxu0 0
        %1056 = vmatprep.subr.bf16.mxu0 0
        %1057 = vmatpush1.bf16.msra.mxu0 0
        %1058 = vmatprep.subr.bf16.mxu0 0
        %1059 = vmatpush1.bf16.msra.mxu0 %v1042
        %1060 = vmatprep.subr.bf16.mxu0 0
        %1061 = vmatpush2.bf16.msra.mxu0 0
        %1062 = vmatprep.subr.bf16.mxu0 0
        %1063 = vmatpush2.bf16.msra.mxu0 0
        %1064 = vmatprep.subr.bf16.mxu0 0
        %1065 = vmatpush2.bf16.msra.mxu0 0
        %1066 = vmatprep.subr.bf16.mxu0 0
        %1067 = vmatpush2.bf16.msra.mxu0 0
        %1068 = vmatprep.subr.bf16.mxu0 0
        %1069 = vmatpush2.bf16.msra.mxu0 0
        %1070 = vmatprep.subr.bf16.mxu0 0
        %1071 = vmatpush2.bf16.msra.mxu0 0
        %1072 = vmatprep.subr.bf16.mxu0 0
        %1073 = vmatpush2.bf16.msra.mxu0 0
        %1074 = vmatprep.subr.bf16.mxu0 0
        %1075 = vmatpush2.bf16.msra.mxu0 0
        %1076 = vmatprep.mubr.bf16.mxu0 0
        %1077 = vmatmul.mubr.bf16.gmra.mxu0 %v1038
        %v1078 = vpop.f32.mrf.mxu0
        %v1079 = vadd.f32 0.0, %v1078
        %v1080 = vpop.f32.mrf.mxu0
        %v1081 = vpop.f32.mrf.mxu0
        %v1082 = vadd.f32 0.0, %v1081
        %v1083 = vpop.f32.mrf.mxu0
        %1084 = vdwg.mxu0
        %v1086 = vsel %vm785, %v905, 0
        %v1089 = vsel %vm1040, %v780, 0
        %1091 = vmatprep.subr.bf16.mxu0 0
        %1092 = vmatpush1.bf16.msra.mxu0 0
        %1093 = vmatprep.subr.bf16.mxu0 0
        %1094 = vmatpush1.bf16.msra.mxu0 0
        %1095 = vmatprep.subr.bf16.mxu0 0
        %1096 = vmatpush1.bf16.msra.mxu0 0
        %1097 = vmatprep.subr.bf16.mxu0 0
        %1098 = vmatpush1.bf16.msra.mxu0 0
        %1099 = vmatprep.subr.bf16.mxu0 0
        %1100 = vmatpush1.bf16.msra.mxu0 0
        %1101 = vmatprep.subr.bf16.mxu0 0
        %1102 = vmatpush1.bf16.msra.mxu0 0
        %1103 = vmatprep.subr.bf16.mxu0 0
        %1104 = vmatpush1.bf16.msra.mxu0 0
        %1105 = vmatprep.subr.bf16.mxu0 0
        %1106 = vmatpush1.bf16.msra.mxu0 %v1089
        %1107 = vmatprep.subr.bf16.mxu0 0
        %1108 = vmatpush2.bf16.msra.mxu0 0
        %1109 = vmatprep.subr.bf16.mxu0 0
        %1110 = vmatpush2.bf16.msra.mxu0 0
        %1111 = vmatprep.subr.bf16.mxu0 0
        %1112 = vmatpush2.bf16.msra.mxu0 0
        %1113 = vmatprep.subr.bf16.mxu0 0
        %1114 = vmatpush2.bf16.msra.mxu0 0
        %1115 = vmatprep.subr.bf16.mxu0 0
        %1116 = vmatpush2.bf16.msra.mxu0 0
        %1117 = vmatprep.subr.bf16.mxu0 0
        %1118 = vmatpush2.bf16.msra.mxu0 0
        %1119 = vmatprep.subr.bf16.mxu0 0
        %1120 = vmatpush2.bf16.msra.mxu0 0
        %1121 = vmatprep.subr.bf16.mxu0 0
        %1122 = vmatpush2.bf16.msra.mxu0 0
        %1123 = vmatprep.mubr.bf16.mxu0 0
        %1124 = vmatmul.mubr.bf16.gmra.mxu0 %v1086
        %v1125 = vpop.f32.mrf.mxu0
        %v1126 = vadd.f32 %v1079, %v1125
        %v1127 = vpop.f32.mrf.mxu0
        %v1128 = vpop.f32.mrf.mxu0
        %v1129 = vadd.f32 %v1082, %v1128
        %v1130 = vpop.f32.mrf.mxu0
        %1131 = vdwg.mxu0
        %1132 = vrot.lane.b32.xlu0 %v782, 120
        %v1133 = vpop.permute.xlu0 %1132
        %1134 = vrot.lane.b32.xlu0 %v783, 120
        %v1135 = vpop.permute.xlu0 %1134
        %v1137 = vsel %vm785, %v1133, 0
        %v1140 = vsel %vm785, %v1135, 0
        %1142 = vmatprep.subr.bf16.mxu0 0
        %1143 = vmatpush1.bf16.xpose.msra.mxu0 0
        %1144 = vmatprep.subr.bf16.mxu0 0
        %1145 = vmatpush1.bf16.xpose.msra.mxu0 0
        %1146 = vmatprep.subr.bf16.mxu0 0
        %1147 = vmatpush1.bf16.xpose.msra.mxu0 0
        %1148 = vmatprep.subr.bf16.mxu0 0
        %1149 = vmatpush1.bf16.xpose.msra.mxu0 0
        %1150 = vmatprep.subr.bf16.mxu0 0
        %1151 = vmatpush1.bf16.xpose.msra.mxu0 0
        %1152 = vmatprep.subr.bf16.mxu0 0
        %1153 = vmatpush1.bf16.xpose.msra.mxu0 0
        %1154 = vmatprep.subr.bf16.mxu0 0
        %1155 = vmatpush1.bf16.xpose.msra.mxu0 0
        %1156 = vmatprep.subr.bf16.mxu0 0
        %1157 = vmatpush1.bf16.xpose.msra.mxu0 %v1140
        %1158 = vmatprep.subr.bf16.mxu0 0
        %1159 = vmatpush2.bf16.xpose.msra.mxu0 0
        %1160 = vmatprep.subr.bf16.mxu0 0
        %1161 = vmatpush2.bf16.xpose.msra.mxu0 0
        %1162 = vmatprep.subr.bf16.mxu0 0
        %1163 = vmatpush2.bf16.xpose.msra.mxu0 0
        %1164 = vmatprep.subr.bf16.mxu0 0
        %1165 = vmatpush2.bf16.xpose.msra.mxu0 0
        %1166 = vmatprep.subr.bf16.mxu0 0
        %1167 = vmatpush2.bf16.xpose.msra.mxu0 0
        %1168 = vmatprep.subr.bf16.mxu0 0
        %1169 = vmatpush2.bf16.xpose.msra.mxu0 0
        %1170 = vmatprep.subr.bf16.mxu0 0
        %1171 = vmatpush2.bf16.xpose.msra.mxu0 0
        %1172 = vmatprep.subr.bf16.mxu0 0
        %1173 = vmatpush2.bf16.xpose.msra.mxu0 0
        %1174 = vmatprep.mubr.bf16.mxu0 0
        %1175 = vmatmul.mubr.bf16.gmra.mxu0 %v1137
        %v1176 = vpop.f32.mrf.mxu0
        %v1177 = vadd.f32 0.0, %v1176
        %v1178 = vpop.f32.mrf.mxu0
        %v1179 = vpop.f32.mrf.mxu0
        %v1180 = vadd.f32 0.0, %v1179
        %v1181 = vpop.f32.mrf.mxu0
        %1182 = vdwg.mxu0
        %v1183 = vsel %vm833, %v1177, -inf
        %1184 = vmax.xlane.f32.xlu0 %v1183
        %v1185 = vpop.xlane.xlu0 %1184
        %v1186 = vsel %vm833, %v1180, -inf
        %1187 = vmax.xlane.f32.xlu0 %v1186
        %v1188 = vpop.xlane.xlu0 %1187
        %v1189 = vsub.f32 %v1177, %v1185
        %v1190 = vsub.f32 %v1180, %v1188
        %v1191 = vmul.f32 %v1189, 1.442695
        %v1192 = vpow.pop %v1191
        %v1193 = vmul.f32 %v1190, 1.442695
        %v1194 = vpow.pop %v1193
        %v1195 = vsel %vm833, %v1192, 0.0
        %1196 = vadd.xlane.f32.xlu0 %v1195
        %v1197 = vpop.xlane.xlu0 %1196
        %v1198 = vsel %vm833, %v1194, 0.0
        %1199 = vadd.xlane.f32.xlu0 %v1198
        %v1200 = vpop.xlane.xlu0 %1199
        %v1201 = vrcp.pop %v1197
        %v1202 = vrcp.pop %v1200
        %v1203 = vpack.c.bf16 %v1194, %v1192
        %1204 = vrot.lane.b32.xlu0 %v784, 120
        %v1205 = vpop.permute.xlu0 %1204
        %v1207 = vsel %vm833, %v1203, 0
        %v1210 = vsel %vm858, %v1205, 0
        %1212 = vmatprep.subr.bf16.mxu0 0
        %1213 = vmatpush1.bf16.msra.mxu0 0
        %1214 = vmatprep.subr.bf16.mxu0 0
        %1215 = vmatpush1.bf16.msra.mxu0 0
        %1216 = vmatprep.subr.bf16.mxu0 0
        %1217 = vmatpush1.bf16.msra.mxu0 0
        %1218 = vmatprep.subr.bf16.mxu0 0
        %1219 = vmatpush1.bf16.msra.mxu0 0
        %1220 = vmatprep.subr.bf16.mxu0 0
        %1221 = vmatpush1.bf16.msra.mxu0 0
        %1222 = vmatprep.subr.bf16.mxu0 0
        %1223 = vmatpush1.bf16.msra.mxu0 0
        %1224 = vmatprep.subr.bf16.mxu0 0
        %1225 = vmatpush1.bf16.msra.mxu0 0
        %1226 = vmatprep.subr.bf16.mxu0 0
        %1227 = vmatpush1.bf16.msra.mxu0 %v1210
        %1228 = vmatprep.subr.bf16.mxu0 0
        %1229 = vmatpush2.bf16.msra.mxu0 0
        %1230 = vmatprep.subr.bf16.mxu0 0
        %1231 = vmatpush2.bf16.msra.mxu0 0
        %1232 = vmatprep.subr.bf16.mxu0 0
        %1233 = vmatpush2.bf16.msra.mxu0 0
        %1234 = vmatprep.subr.bf16.mxu0 0
        %1235 = vmatpush2.bf16.msra.mxu0 0
        %1236 = vmatprep.subr.bf16.mxu0 0
        %1237 = vmatpush2.bf16.msra.mxu0 0
        %1238 = vmatprep.subr.bf16.mxu0 0
        %1239 = vmatpush2.bf16.msra.mxu0 0
        %1240 = vmatprep.subr.bf16.mxu0 0
        %1241 = vmatpush2.bf16.msra.mxu0 0
        %1242 = vmatprep.subr.bf16.mxu0 0
        %1243 = vmatpush2.bf16.msra.mxu0 0
        %1244 = vmatprep.mubr.bf16.mxu0 0
        %1245 = vmatmul.mubr.bf16.gmra.mxu0 %v1207
        %v1246 = vpop.f32.mrf.mxu0
        %v1247 = vadd.f32 0.0, %v1246
        %v1248 = vpop.f32.mrf.mxu0
        %v1249 = vpop.f32.mrf.mxu0
        %v1250 = vadd.f32 0.0, %v1249
        %v1251 = vpop.f32.mrf.mxu0
        %1252 = vdwg.mxu0
        %v1253 = vmul.f32 %v1247, %v1201
        %v1254 = vmul.f32 %v1250, %v1202
        %v1255 = vpack.c.bf16 %v1254, %v1253
        %v1257 = vsel %vm785, %v1255, 0
        %v1260 = vsel %vm1040, %v781, 0
        %1262 = vmatprep.subr.bf16.mxu0 0
        %1263 = vmatpush1.bf16.msra.mxu0 0
        %1264 = vmatprep.subr.bf16.mxu0 0
        %1265 = vmatpush1.bf16.msra.mxu0 0
        %1266 = vmatprep.subr.bf16.mxu0 0
        %1267 = vmatpush1.bf16.msra.mxu0 0
        %1268 = vmatprep.subr.bf16.mxu0 0
        %1269 = vmatpush1.bf16.msra.mxu0 0
        %1270 = vmatprep.subr.bf16.mxu0 0
        %1271 = vmatpush1.bf16.msra.mxu0 0
        %1272 = vmatprep.subr.bf16.mxu0 0
        %1273 = vmatpush1.bf16.msra.mxu0 0
        %1274 = vmatprep.subr.bf16.mxu0 0
        %1275 = vmatpush1.bf16.msra.mxu0 0
        %1276 = vmatprep.subr.bf16.mxu0 0
        %1277 = vmatpush1.bf16.msra.mxu0 %v1260
        %1278 = vmatprep.subr.bf16.mxu0 0
        %1279 = vmatpush2.bf16.msra.mxu0 0
        %1280 = vmatprep.subr.bf16.mxu0 0
        %1281 = vmatpush2.bf16.msra.mxu0 0
        %1282 = vmatprep.subr.bf16.mxu0 0
        %1283 = vmatpush2.bf16.msra.mxu0 0
        %1284 = vmatprep.subr.bf16.mxu0 0
        %1285 = vmatpush2.bf16.msra.mxu0 0
        %1286 = vmatprep.subr.bf16.mxu0 0
        %1287 = vmatpush2.bf16.msra.mxu0 0
        %1288 = vmatprep.subr.bf16.mxu0 0
        %1289 = vmatpush2.bf16.msra.mxu0 0
        %1290 = vmatprep.subr.bf16.mxu0 0
        %1291 = vmatpush2.bf16.msra.mxu0 0
        %1292 = vmatprep.subr.bf16.mxu0 0
        %1293 = vmatpush2.bf16.msra.mxu0 0
        %1294 = vmatprep.mubr.bf16.mxu0 0
        %1295 = vmatmul.mubr.bf16.gmra.mxu0 %v1257
        %v1296 = vpop.f32.mrf.mxu0
        %v1297 = vadd.f32 0.0, %v1296
        %v1298 = vpop.f32.mrf.mxu0
        %v1299 = vpop.f32.mrf.mxu0
        %v1300 = vadd.f32 0.0, %v1299
        %v1301 = vpop.f32.mrf.mxu0
        %1302 = vdwg.mxu0
        %v1303 = vadd.f32 %v1126, %v1297
        %v1304 = vadd.f32 %v1129, %v1300
        %1305 = vrot.lane.b32.xlu0 %v782, 116
        %v1306 = vpop.permute.xlu0 %1305
        %1307 = vrot.lane.b32.xlu0 %v783, 116
        %v1308 = vpop.permute.xlu0 %1307
        %v1310 = vsel %vm785, %v1306, 0
        %v1313 = vsel %vm785, %v1308, 0
        %1315 = vmatprep.subr.bf16.mxu0 0
        %1316 = vmatpush1.bf16.xpose.msra.mxu0 0
        %1317 = vmatprep.subr.bf16.mxu0 0
        %1318 = vmatpush1.bf16.xpose.msra.mxu0 0
        %1319 = vmatprep.subr.bf16.mxu0 0
        %1320 = vmatpush1.bf16.xpose.msra.mxu0 0
        %1321 = vmatprep.subr.bf16.mxu0 0
        %1322 = vmatpush1.bf16.xpose.msra.mxu0 0
        %1323 = vmatprep.subr.bf16.mxu0 0
        %1324 = vmatpush1.bf16.xpose.msra.mxu0 0
        %1325 = vmatprep.subr.bf16.mxu0 0
        %1326 = vmatpush1.bf16.xpose.msra.mxu0 0
        %1327 = vmatprep.subr.bf16.mxu0 0
        %1328 = vmatpush1.bf16.xpose.msra.mxu0 0
        %1329 = vmatprep.subr.bf16.mxu0 0
        %1330 = vmatpush1.bf16.xpose.msra.mxu0 %v1313
        %1331 = vmatprep.subr.bf16.mxu0 0
        %1332 = vmatpush2.bf16.xpose.msra.mxu0 0
        %1333 = vmatprep.subr.bf16.mxu0 0
        %1334 = vmatpush2.bf16.xpose.msra.mxu0 0
        %1335 = vmatprep.subr.bf16.mxu0 0
        %1336 = vmatpush2.bf16.xpose.msra.mxu0 0
        %1337 = vmatprep.subr.bf16.mxu0 0
        %1338 = vmatpush2.bf16.xpose.msra.mxu0 0
        %1339 = vmatprep.subr.bf16.mxu0 0
        %1340 = vmatpush2.bf16.xpose.msra.mxu0 0
        %1341 = vmatprep.subr.bf16.mxu0 0
        %1342 = vmatpush2.bf16.xpose.msra.mxu0 0
        %1343 = vmatprep.subr.bf16.mxu0 0
        %1344 = vmatpush2.bf16.xpose.msra.mxu0 0
        %1345 = vmatprep.subr.bf16.mxu0 0
        %1346 = vmatpush2.bf16.xpose.msra.mxu0 0
        %1347 = vmatprep.mubr.bf16.mxu0 0
        %1348 = vmatmul.mubr.bf16.gmra.mxu0 %v1310
        %v1349 = vpop.f32.mrf.mxu0
        %v1350 = vadd.f32 0.0, %v1349
        %v1351 = vpop.f32.mrf.mxu0
        %v1352 = vpop.f32.mrf.mxu0
        %v1353 = vadd.f32 0.0, %v1352
        %v1354 = vpop.f32.mrf.mxu0
        %1355 = vdwg.mxu0
        %v1356 = vsel %vm833, %v1350, -inf
        %1357 = vmax.xlane.f32.xlu0 %v1356
        %v1358 = vpop.xlane.xlu0 %1357
        %v1359 = vsel %vm833, %v1353, -inf
        %1360 = vmax.xlane.f32.xlu0 %v1359
        %v1361 = vpop.xlane.xlu0 %1360
        %v1362 = vsub.f32 %v1350, %v1358
        %v1363 = vsub.f32 %v1353, %v1361
        %v1364 = vmul.f32 %v1362, 1.442695
        %v1365 = vpow.pop %v1364
        %v1366 = vmul.f32 %v1363, 1.442695
        %v1367 = vpow.pop %v1366
        %v1368 = vsel %vm833, %v1365, 0.0
        %1369 = vadd.xlane.f32.xlu0 %v1368
        %v1370 = vpop.xlane.xlu0 %1369
        %v1371 = vsel %vm833, %v1367, 0.0
        %1372 = vadd.xlane.f32.xlu0 %v1371
        %v1373 = vpop.xlane.xlu0 %1372
        %v1374 = vrcp.pop %v1370
        %v1375 = vrcp.pop %v1373
        %v1376 = vpack.c.bf16 %v1367, %v1365
        %1377 = vrot.lane.b32.xlu0 %v784, 116
        %v1378 = vpop.permute.xlu0 %1377
        %v1380 = vsel %vm833, %v1376, 0
        %v1383 = vsel %vm858, %v1378, 0
        %1385 = vmatprep.subr.bf16.mxu0 0
        %1386 = vmatpush1.bf16.msra.mxu0 0
        %1387 = vmatprep.subr.bf16.mxu0 0
        %1388 = vmatpush1.bf16.msra.mxu0 0
        %1389 = vmatprep.subr.bf16.mxu0 0
        %1390 = vmatpush1.bf16.msra.mxu0 0
        %1391 = vmatprep.subr.bf16.mxu0 0
        %1392 = vmatpush1.bf16.msra.mxu0 0
        %1393 = vmatprep.subr.bf16.mxu0 0
        %1394 = vmatpush1.bf16.msra.mxu0 0
        %1395 = vmatprep.subr.bf16.mxu0 0
        %1396 = vmatpush1.bf16.msra.mxu0 0
        %1397 = vmatprep.subr.bf16.mxu0 0
        %1398 = vmatpush1.bf16.msra.mxu0 0
        %1399 = vmatprep.subr.bf16.mxu0 0
        %1400 = vmatpush1.bf16.msra.mxu0 %v1383
        %1401 = vmatprep.subr.bf16.mxu0 0
        %1402 = vmatpush2.bf16.msra.mxu0 0
        %1403 = vmatprep.subr.bf16.mxu0 0
        %1404 = vmatpush2.bf16.msra.mxu0 0
        %1405 = vmatprep.subr.bf16.mxu0 0
        %1406 = vmatpush2.bf16.msra.mxu0 0
        %1407 = vmatprep.subr.bf16.mxu0 0
        %1408 = vmatpush2.bf16.msra.mxu0 0
        %1409 = vmatprep.subr.bf16.mxu0 0
        %1410 = vmatpush2.bf16.msra.mxu0 0
        %1411 = vmatprep.subr.bf16.mxu0 0
        %1412 = vmatpush2.bf16.msra.mxu0 0
        %1413 = vmatprep.subr.bf16.mxu0 0
        %1414 = vmatpush2.bf16.msra.mxu0 0
        %1415 = vmatprep.subr.bf16.mxu0 0
        %1416 = vmatpush2.bf16.msra.mxu0 0
        %1417 = vmatprep.mubr.bf16.mxu0 0
        %1418 = vmatmul.mubr.bf16.gmra.mxu0 %v1380
        %v1419 = vpop.f32.mrf.mxu0
        %v1420 = vadd.f32 0.0, %v1419
        %v1421 = vpop.f32.mrf.mxu0
        %v1422 = vpop.f32.mrf.mxu0
        %v1423 = vadd.f32 0.0, %v1422
        %v1424 = vpop.f32.mrf.mxu0
        %1425 = vdwg.mxu0
        %v1426 = vmul.f32 %v1420, %v1374
        %v1427 = vmul.f32 %v1423, %v1375
        %v1428 = vpack.c.bf16 %v1427, %v1426
        %v1430 = vunpack.c.l.b16 %v781
        %v1431 = vpack.c.b16 %v1430, %v1430
        %v1432 = vrot.slane %v1431, 2
        %v1434 = vsel %vm785, %v1428, 0
        %v1437 = vsel %vm1040, %v1432, 0
        %1439 = vmatprep.subr.bf16.mxu0 0
        %1440 = vmatpush1.bf16.msra.mxu0 0
        %1441 = vmatprep.subr.bf16.mxu0 0
        %1442 = vmatpush1.bf16.msra.mxu0 0
        %1443 = vmatprep.subr.bf16.mxu0 0
        %1444 = vmatpush1.bf16.msra.mxu0 0
        %1445 = vmatprep.subr.bf16.mxu0 0
        %1446 = vmatpush1.bf16.msra.mxu0 0
        %1447 = vmatprep.subr.bf16.mxu0 0
        %1448 = vmatpush1.bf16.msra.mxu0 0
        %1449 = vmatprep.subr.bf16.mxu0 0
        %1450 = vmatpush1.bf16.msra.mxu0 0
        %1451 = vmatprep.subr.bf16.mxu0 0
        %1452 = vmatpush1.bf16.msra.mxu0 0
        %1453 = vmatprep.subr.bf16.mxu0 0
        %1454 = vmatpush1.bf16.msra.mxu0 %v1437
        %1455 = vmatprep.subr.bf16.mxu0 0
        %1456 = vmatpush2.bf16.msra.mxu0 0
        %1457 = vmatprep.subr.bf16.mxu0 0
        %1458 = vmatpush2.bf16.msra.mxu0 0
        %1459 = vmatprep.subr.bf16.mxu0 0
        %1460 = vmatpush2.bf16.msra.mxu0 0
        %1461 = vmatprep.subr.bf16.mxu0 0
        %1462 = vmatpush2.bf16.msra.mxu0 0
        %1463 = vmatprep.subr.bf16.mxu0 0
        %1464 = vmatpush2.bf16.msra.mxu0 0
        %1465 = vmatprep.subr.bf16.mxu0 0
        %1466 = vmatpush2.bf16.msra.mxu0 0
        %1467 = vmatprep.subr.bf16.mxu0 0
        %1468 = vmatpush2.bf16.msra.mxu0 0
        %1469 = vmatprep.subr.bf16.mxu0 0
        %1470 = vmatpush2.bf16.msra.mxu0 0
        %1471 = vmatprep.mubr.bf16.mxu0 0
        %1472 = vmatmul.mubr.bf16.gmra.mxu0 %v1434
        %v1473 = vpop.f32.mrf.mxu0
        %v1474 = vadd.f32 0.0, %v1473
        %v1475 = vpop.f32.mrf.mxu0
        %v1476 = vpop.f32.mrf.mxu0
        %v1477 = vadd.f32 0.0, %v1476
        %v1478 = vpop.f32.mrf.mxu0
        %1479 = vdwg.mxu0
        %v1480 = vadd.f32 %v1303, %v1474
        %v1481 = vadd.f32 %v1304, %v1477
        %v1482 = vld [vmem:[%s11] sm:$0x1]
        %v1484 = vlaneseq
        %v1485 = vshrl.u32 %v1484, 7
        %v1486 = vsub.s32 0, %v1485
        %v1487 = vrot.slane %v1482, %v1486
        %v1489 = vadd.f32 %v1480, %v1487
        %v1490 = vadd.f32 %v1481, %v1487
        %v1491 = vadd.f32 %v568, %v1489
        %v1492 = vadd.f32 %v569, %v1490
        %v1493 = vsel %vm601, %v1491, 0.0
        %1494 = vadd.xlane.f32.xlu0 %v1493
        %v1495 = vpop.xlane.xlu0 %1494
        %v1496 = vsel %vm601, %v1492, 0.0
        %1497 = vadd.xlane.f32.xlu0 %v1496
        %v1498 = vpop.xlane.xlu0 %1497
        %v1499 = vrcp.pop 32.0
        %v1500 = vmul.f32 %v1495, %v1499
        %v1501 = vmul.f32 %v1498, %v1499
        %v1502 = vsub.f32 %v1491, %v1500
        %v1503 = vsub.f32 %v1492, %v1501
        %v1504 = vmul.f32 %v1502, %v1502
        %v1505 = vmul.f32 %v1503, %v1503
        %v1506 = vsel %vm601, %v1504, 0.0
        %1507 = vadd.xlane.f32.xlu0 %v1506
        %v1508 = vpop.xlane.xlu0 %1507
        %v1509 = vsel %vm601, %v1505, 0.0
        %1510 = vadd.xlane.f32.xlu0 %v1509
        %v1511 = vpop.xlane.xlu0 %1510
        %v1512 = vmul.f32 %v1508, %v1499
        %v1513 = vmul.f32 %v1511, %v1499
        %v1514 = vadd.f32 %v1512, 1e-05
        %v1515 = vadd.f32 %v1513, 1e-05
        %v1516 = vrsqrt.pop %v1514
        %v1517 = vrsqrt.pop %v1515
        %v1518 = vmul.f32 %v1502, %v1516
        %v1519 = vmul.f32 %v1503, %v1517
        %v1520 = vld [vmem:[%s12] sm:$0x1]
        %v1522 = vlaneseq
        %v1523 = vshrl.u32 %v1522, 7
        %v1524 = vsub.s32 0, %v1523
        %v1525 = vrot.slane %v1520, %v1524
        %v1527 = vmul.f32 %v1518, %v1525
        %v1528 = vmul.f32 %v1519, %v1525
        %v1529 = vld [vmem:[%s13] sm:$0x1]
        %v1531 = vlaneseq
        %v1532 = vshrl.u32 %v1531, 7
        %v1533 = vsub.s32 0, %v1532
        %v1534 = vrot.slane %v1529, %v1533
        %v1536 = vadd.f32 %v1527, %v1534
        %v1537 = vadd.f32 %v1528, %v1534
        %1538 = vst.msk [vmem:[%s537] sm:$0xff] %vm601, %v1536
        %1539 = vst.msk [vmem:[%s537 + $0x8] sm:$0xff] %vm601, %v1537
        %s1540 = sand.u32 %s368, 1
        %s1541 = scalar_lea.sflag [#allocation3], %s1540
        %s1542 = sand.u32 %s368, 1
        %s1543 = smul.addr %s1542, 16
        %s1544 = scalar_lea.vmem [#allocation2], %s1543
        // Predicated region
        $region77: #{two_way_attention_block.7} parent=75 // pred_check
          %p1545 = pneg %p378
        $region78: #{two_way_attention_block.7} parent=75 // pred_check_branch
          %1547 = sbr.rel (%p1545) target = $region80
        $region79: #{two_way_attention_block.7} parent=75 // pred_region
          %s1548 = smul.u32 2, %s33
          %s1550 = ssub.s32 256, 256
          %1551 = vsyncadd %s1541, %s1550
          %s1552 = smul.addr %s32, 2
          %s1553 = sadd.s32 %s1548, %s1552
          %s1554 = smul.addr %s1553, 128
          %s1555 = scalar_lea.hbm %s14, %s1554
          %s1556 = sshll.u32 %s1544, 4
          %s1557 = int_to_ptr.vmem [resolvable:$true] %s1556
          %1562 = dma.vmem_to_hbm [thread:$0]  %s1557, 256, %s1555, %s1541, 128, 128, 8
        $region80: #{two_way_attention_block.7} parent=75 // pred_fallthru
          _
      $region76: #{two_way_attention_block.7} parent=5 // pred_fallthru
        _
      %p1563 = scmp.le.s32.totalorder 2, %s23
      // Predicated region
      $region81: #{two_way_attention_block.7} parent=5 // pred_check
        %p1564 = pneg %p1563
      $region82: #{two_way_attention_block.7} parent=5 // pred_check_branch
        %1566 = sbr.rel (%p1564) target = $region84
      $region83: #{two_way_attention_block.7} parent=5 // pred_region
        %s1567 = ssub.s32 %s23, 2
        // Predicated region
        $region85: #{two_way_attention_block.7} parent=83 // pred_check
          %p1568 = pneg %p384
        $region86: #{two_way_attention_block.7} parent=83 // pred_check_branch
          %1570 = sbr.rel (%p1568) target = $region88
        $region87: #{two_way_attention_block.7} parent=83 // pred_region
          %s1571 = sand.u32 %s369, 1
          %s1572 = scalar_lea.sflag [#allocation3], %s1571
          %s1573 = sand.u32 %s369, 1
          %s1574 = smul.addr %s1573, 16
          %s1575 = scalar_lea.vmem [#allocation2], %s1574
          %1576 = dma.done %s1572, 256
        $region88: #{two_way_attention_block.7} parent=83 // pred_fallthru
          _
      $region84: #{two_way_attention_block.7} parent=5 // pred_fallthru
        _
    $region6: #{two_way_attention_block.7} parent=1 // loop_footer
      %s27 = sadd.s32 1, %s23
    $region7: #{two_way_attention_block.7} parent=1 // loop_footer_branch
      %22 = sbr.rel target = $region3
    $region8: #{two_way_attention_block.7} parent=1 // loop_exit
      _
    %1577 = vsyncpa [#allocation3], 1
    %s1578 = scalar_lea.sflag [#allocation3], 1
    %1579 = vsyncpa %s1578, 1

</llo_original>
